<compile_context>
chip_gen: v6e
topology: v6e:2x2x1
jax: 0.10.0
libtpu: 0.0.40
codegen_flags: <defaults>
</compile_context>

<pallas_src>
import functools

import jax
import jax.numpy as jnp
from jax import lax
from jax.experimental import pallas as pl
from jax.experimental.pallas import tpu as pltpu


def _cbam_kernel(x_ref, w1_ref, w2_ref, wsp_ref, o_ref,
                 pmax_ref, pavg_ref, spf_ref, *, TB, H, W, K):
    """One block of TB images per grid step.

    x_ref   : (TB, C, H*W) VMEM  lane-dense input block
    w1_ref  : (Cr, C)      VMEM  first 1x1-conv (dense) weight
    w2_ref  : (C, Cr)      VMEM  second 1x1-conv (dense) weight
    wsp_ref : (2*K*K,)     SMEM  flattened spatial conv weight (OIHW, O=1)
    o_ref   : (TB, C, H*W) VMEM  output block
    pmax_ref, pavg_ref : (H+2p, W+2p) VMEM scratch (zero-padded conv inputs)
    spf_ref : (1, H*W)     VMEM scratch (flattened spatial-attention map)
    """
    C = x_ref.shape[1]
    HW = H * W
    pad = K // 2
    inv_HW = jnp.float32(1.0 / HW)
    inv_C = jnp.float32(1.0 / C)

    # Zero the padded conv scratch every step (borders stay zero; the centers
    # are fully overwritten per image below).  Done per-step so it is safe
    # regardless of how the parallel grid is split across TensorCores.
    pmax_ref[...] = jnp.zeros_like(pmax_ref)
    pavg_ref[...] = jnp.zeros_like(pavg_ref)

    # ---------------- channel attention (batched MLP over 2*TB columns) ------
    max_cols = []
    avg_cols = []
    for t in range(TB):
        xt = x_ref[t].astype(jnp.float32)                         # (C, HW)
        max_cols.append(jnp.max(xt, axis=1, keepdims=True))       # (C, 1)
        avg_cols.append(jnp.sum(xt, axis=1, keepdims=True) * inv_HW)
    pooled = jnp.concatenate(max_cols + avg_cols, axis=1)          # (C, 2*TB)

    h = jnp.maximum(
        jnp.dot(w1_ref[...], pooled, preferred_element_type=jnp.float32), 0.0
    )                                                              # (Cr, 2*TB)
    mlp_out = jnp.dot(w2_ref[...], h, preferred_element_type=jnp.float32)  # (C, 2*TB)
    ch = jax.nn.sigmoid(mlp_out[:, :TB] + mlp_out[:, TB:])         # (C, TB)

    # ---------------- spatial attention + output, per image ------------------
    for t in range(TB):
        xt = x_ref[t].astype(jnp.float32)       # (C, HW)  (cheap VMEM re-read)
        ch_t = ch[:, t:t + 1]                   # (C, 1)

        # channel-scaled stats reduced immediately (xc is not kept live)
        xs = xt * ch_t                          # transient
        smax = jnp.max(xs, axis=0, keepdims=True)            # (1, HW)
        savg = jnp.sum(xs, axis=0, keepdims=True) * inv_C     # (1, HW)

        # scatter the two pooled maps (H rows of W lanes) into the zero-padded
        # (H+2p, W+2p) conv scratch.
        for r in range(H):
            pmax_ref[pad + r:pad + r + 1, pad:pad + W] = smax[:, r * W:(r + 1) * W]
            pavg_ref[pad + r:pad + r + 1, pad:pad + W] = savg[:, r * W:(r + 1) * W]

        pm = pmax_ref[...]                      # (H+2p, W+2p)
        pa = pavg_ref[...]

        # KxK cross-correlation; kw (lane) shifts hoisted out of the kh loop so
        # only 2*K lane-offset slices are needed (kh is a cheap row slice).
        acc = jnp.zeros((H, W), jnp.float32)
        for kw in range(K):
            pm_w = pm[:, kw:kw + W]             # (H+2p, W)
            pa_w = pa[:, kw:kw + W]
            for kh in range(K):
                acc = acc + wsp_ref[kh * K + kw] * pm_w[kh:kh + H, :]
                acc = acc + wsp_ref[K * K + kh * K + kw] * pa_w[kh:kh + H, :]
        sp_hw = jax.nn.sigmoid(acc)             # (H, W)

        # flatten the tiny spatial map back to the lane-dense (1, H*W) layout
        for r in range(H):
            spf_ref[:, r * W:(r + 1) * W] = sp_hw[r:r + 1, :]
        sp = spf_ref[...]                       # (1, HW)

        # single full-lane-width write: o = x * channel_att * spatial_att
        o_ref[t] = (xt * ch_t * sp).astype(o_ref.dtype)


def _pick_tb(B, max_tb=4):
    """Largest divisor of B (<= max_tb) that keeps the grid length >= 2."""
    best = 1
    for d in range(1, min(B, max_tb) + 1):
        if B % d == 0 and B // d >= 2:
            best = d
    return best


def cbam_pallas(x, w1, w2, wconv):
    """x: (B, C, H, W); w1: (Cr, C); w2: (C, Cr); wconv: (1, 2, K, K)."""
    B, C, H, W = x.shape
    Cr = w1.shape[0]
    K = wconv.shape[-1]
    HW = H * W
    pad = K // 2
    TB = _pick_tb(B)

    x_flat = x.reshape(B, C, HW)                       # lane-dense layout
    wsp_flat = wconv.reshape(-1).astype(jnp.float32)   # flat OIHW: c*K*K + kh*K + kw

    # Per-step VMEM budget: double-buffered in/out blocks + per-image temps.
    itemsize = jnp.dtype(x.dtype).itemsize
    block_bytes = TB * C * HW * itemsize
    vmem_est = 4 * block_bytes + 6 * C * HW * 4 + (2 << 20)
    vmem_limit = int(min(max(vmem_est, 32 * 1024 * 1024), 64 * 1024 * 1024))

    kernel = functools.partial(_cbam_kernel, TB=TB, H=H, W=W, K=K)
    out_flat = pl.pallas_call(
        kernel,
        out_shape=jax.ShapeDtypeStruct((B, C, HW), x.dtype),
        grid=(B // TB,),
        in_specs=[
            pl.BlockSpec((TB, C, HW), lambda b: (b, 0, 0)),
            pl.BlockSpec((Cr, C), lambda b: (0, 0)),
            pl.BlockSpec((C, Cr), lambda b: (0, 0)),
            pl.BlockSpec(memory_space=pltpu.MemorySpace.SMEM),
        ],
        out_specs=pl.BlockSpec((TB, C, HW), lambda b: (b, 0, 0)),
        scratch_shapes=[
            pltpu.VMEM((H + 2 * pad, W + 2 * pad), jnp.float32),
            pltpu.VMEM((H + 2 * pad, W + 2 * pad), jnp.float32),
            pltpu.VMEM((1, HW), jnp.float32),
        ],
        compiler_params=pltpu.CompilerParams(
            dimension_semantics=("parallel",),
            vmem_limit_bytes=vmem_limit,
        ),
    )(x_flat, w1.astype(jnp.float32), w2.astype(jnp.float32), wsp_flat)
    return out_flat.reshape(B, C, H, W)


def cbam_reference(x, w1, w2, wconv):
    """Pure-JAX reference mirroring the PyTorch CBAMLayer.forward."""
    mx = jnp.max(x, axis=(2, 3))    # (B, C)
    av = jnp.mean(x, axis=(2, 3))   # (B, C)

    def mlp(v):
        h = jnp.maximum(v @ w1.T, 0.0)   # (B, Cr)
        return h @ w2.T                   # (B, C)

    ch = jax.nn.sigmoid(mlp(mx) + mlp(av))[:, :, None, None]
    xc = x * ch
    smax = jnp.max(xc, axis=1, keepdims=True)
    savg = jnp.mean(xc, axis=1, keepdims=True)
    inp = jnp.concatenate([smax, savg], axis=1)  # (B, 2, H, W)
    pad = wconv.shape[-1] // 2
    conv = lax.conv_general_dilated(
        inp, wconv, window_strides=(1, 1),
        padding=((pad, pad), (pad, pad)),
        dimension_numbers=("NCHW", "OIHW", "NCHW"),
    )
    sp = jax.nn.sigmoid(conv)
    return xc * sp


if __name__ == "__main__":
    B, C, H, W = 2, 8, 16, 16
    reduction = 4
    Cr = C // reduction
    K = 7

    key = jax.random.PRNGKey(0)
    k1, k2, k3, k4 = jax.random.split(key, 4)
    # Deterministic synthetic parameters (module __init__ shapes, bias=False).
    w1 = jax.random.normal(k1, (Cr, C), dtype=jnp.float32) * 0.5          # Conv2d(C, Cr, 1)
    w2 = jax.random.normal(k2, (C, Cr), dtype=jnp.float32) * 0.5          # Conv2d(Cr, C, 1)
    wconv = jax.random.normal(k3, (1, 2, K, K), dtype=jnp.float32) * 0.1  # Conv2d(2, 1, 7, pad=3)
    x = jax.random.normal(k4, (B, C, H, W), dtype=jnp.float32)

    out = cbam_pallas(x, w1, w2, wconv)
    out = jax.block_until_ready(out)

    ref = cbam_reference(x, w1, w2, wconv)
    assert out.shape == ref.shape
    assert jnp.allclose(out, ref, rtol=1e-4, atol=1e-4), (
        f"max abs err = {jnp.max(jnp.abs(out - ref))}"
    )
    print("KERNEL_OK")
</pallas_src>

<mosaic_0001>
module attributes {stable_mosaic.version = 11 : i64} {
  func.func @_cbam_kernel(%arg0: i32, %arg1: memref<1x8x256xf32, #tpu.memory_space<vmem>>, %arg2: memref<2x8xf32, #tpu.memory_space<vmem>>, %arg3: memref<8x2xf32, #tpu.memory_space<vmem>>, %arg4: memref<98xf32, #tpu.memory_space<smem>>, %arg5: memref<1x8x256xf32, #tpu.memory_space<vmem>>, %arg6: memref<22x22xf32, #tpu.memory_space<vmem>>, %arg7: memref<22x22xf32, #tpu.memory_space<vmem>>, %arg8: memref<1x256xf32, #tpu.memory_space<vmem>>) attributes {dimension_semantics = [#tpu.dimension_semantics<parallel>], iteration_bounds = array<i64: 2>, scalar_prefetch = 0 : i64, scratch_operands = 3 : i64, tpu.core_type = #tpu.core_type<tc>, window_params = [{transform_indices = @transform_0, window_bounds = array<i64: 1, 8, 256>}, {pipeline_mode = #tpu.pipeline_mode<synchronous>, transform_indices = @transform_1, window_bounds = array<i64: 2, 8>}, {pipeline_mode = #tpu.pipeline_mode<synchronous>, transform_indices = @transform_2, window_bounds = array<i64: 8, 2>}, {transform_indices = @transform_3, window_bounds = array<i64: 98>}, {transform_indices = @transform_4, window_bounds = array<i64: 1, 8, 256>}]} {
    %cst = arith.constant 0.000000e+00 : f32
    %0 = vector.broadcast %cst : f32 to vector<22x22xf32>
    %c0 = arith.constant 0 : index
    %c0_0 = arith.constant 0 : index
    %1 = vector.load %arg6[%c0, %c0_0] : memref<22x22xf32, #tpu.memory_space<vmem>>, vector<22x22xf32>
    tpu.vector_store %arg6[%c0, %c0_0], %0 {strides = array<i32>} : memref<22x22xf32, #tpu.memory_space<vmem>>, vector<22x22xf32>,
    %cst_1 = arith.constant 0.000000e+00 : f32
    %2 = vector.broadcast %cst_1 : f32 to vector<22x22xf32>
    %c0_2 = arith.constant 0 : index
    %c0_3 = arith.constant 0 : index
    %3 = vector.load %arg7[%c0_2, %c0_3] : memref<22x22xf32, #tpu.memory_space<vmem>>, vector<22x22xf32>
    tpu.vector_store %arg7[%c0_2, %c0_3], %2 {strides = array<i32>} : memref<22x22xf32, #tpu.memory_space<vmem>>, vector<22x22xf32>,
    %c0_4 = arith.constant 0 : index
    %c0_5 = arith.constant 0 : index
    %c0_6 = arith.constant 0 : index
    %4 = vector.load %arg1[%c0_4, %c0_5, %c0_6] : memref<1x8x256xf32, #tpu.memory_space<vmem>>, vector<1x8x256xf32>
    %5 = vector.shape_cast %4 : vector<1x8x256xf32> to vector<8x256xf32>
    %cst_7 = arith.constant dense<0xFF800000> : vector<8xf32>
    %6 = vector.multi_reduction <maximumf>, %5, %cst_7 [1] : vector<8x256xf32> to vector<8xf32>
    %7 = vector.shape_cast %6 : vector<8xf32> to vector<8x1xf32>
    %cst_8 = arith.constant dense<0.000000e+00> : vector<8xf32>
    %8 = vector.multi_reduction <add>, %5, %cst_8 [1] : vector<8x256xf32> to vector<8xf32>
    %9 = vector.shape_cast %8 : vector<8xf32> to vector<8x1xf32>
    %cst_9 = arith.constant 3.906250e-03 : f32
    %10 = vector.broadcast %cst_9 : f32 to vector<8x1xf32>
    %11 = arith.mulf %9, %10 : vector<8x1xf32>
    %12 = tpu.concatenate %7, %11 in 1 : vector<8x1xf32>, vector<8x1xf32> -> vector<8x2xf32>
    %c0_10 = arith.constant 0 : index
    %c0_11 = arith.constant 0 : index
    %13 = vector.load %arg2[%c0_10, %c0_11] : memref<2x8xf32, #tpu.memory_space<vmem>>, vector<2x8xf32>
    %cst_12 = arith.constant dense<0.000000e+00> : vector<2x2xf32>
    %14 = tpu.matmul %13, %12, %cst_12 {dimension_numbers = #tpu.dot_dimension_numbers<[1], [0], [0], [1], [0, 0, 1, 1], [], []>} : vector<2x8xf32>, vector<8x2xf32>, vector<2x2xf32> -> vector<2x2xf32>
    %cst_13 = arith.constant 0.000000e+00 : f32
    %15 = vector.broadcast %cst_13 : f32 to vector<2x2xf32>
    %16 = arith.maximumf %14, %15 : vector<2x2xf32>
    %c0_14 = arith.constant 0 : index
    %c0_15 = arith.constant 0 : index
    %17 = vector.load %arg3[%c0_14, %c0_15] : memref<8x2xf32, #tpu.memory_space<vmem>>, vector<8x2xf32>
    %cst_16 = arith.constant dense<0.000000e+00> : vector<8x2xf32>
    %18 = tpu.matmul %17, %16, %cst_16 {dimension_numbers = #tpu.dot_dimension_numbers<[1], [0], [0], [1], [0, 0, 1, 1], [], []>} : vector<8x2xf32>, vector<2x2xf32>, vector<8x2xf32> -> vector<8x2xf32>
    %19 = vector.extract_strided_slice %18 {offsets = [0, 0], sizes = [8, 1], strides = [1, 1]} : vector<8x2xf32> to vector<8x1xf32>
    %20 = vector.extract_strided_slice %18 {offsets = [0, 1], sizes = [8, 1], strides = [1, 1]} : vector<8x2xf32> to vector<8x1xf32>
    %21 = arith.addf %19, %20 : vector<8x1xf32>
    %22 = arith.negf %21 : vector<8x1xf32>
    %23 = math.exp %22 : vector<8x1xf32>
    %cst_17 = arith.constant 1.000000e+00 : f32
    %24 = vector.broadcast %cst_17 : f32 to vector<8x1xf32>
    %25 = arith.addf %24, %23 : vector<8x1xf32>
    %26 = arith.divf %24, %25 : vector<8x1xf32>
    %c0_18 = arith.constant 0 : index
    %c0_19 = arith.constant 0 : index
    %c0_20 = arith.constant 0 : index
    %27 = vector.load %arg1[%c0_18, %c0_19, %c0_20] : memref<1x8x256xf32, #tpu.memory_space<vmem>>, vector<1x8x256xf32>
    %28 = vector.shape_cast %27 : vector<1x8x256xf32> to vector<8x256xf32>
    %29 = vector.broadcast %26 : vector<8x1xf32> to vector<8x256xf32>
    %30 = arith.mulf %28, %29 : vector<8x256xf32>
    %cst_21 = arith.constant dense<0xFF800000> : vector<256xf32>
    %31 = vector.multi_reduction <maximumf>, %30, %cst_21 [0] : vector<8x256xf32> to vector<256xf32>
    %32 = vector.shape_cast %31 : vector<256xf32> to vector<1x256xf32>
    %cst_22 = arith.constant dense<0.000000e+00> : vector<256xf32>
    %33 = vector.multi_reduction <add>, %30, %cst_22 [0] : vector<8x256xf32> to vector<256xf32>
    %34 = vector.shape_cast %33 : vector<256xf32> to vector<1x256xf32>
    %cst_23 = arith.constant 1.250000e-01 : f32
    %35 = vector.broadcast %cst_23 : f32 to vector<1x256xf32>
    %36 = arith.mulf %34, %35 : vector<1x256xf32>
    %37 = vector.extract_strided_slice %32 {offsets = [0, 0], sizes = [1, 16], strides = [1, 1]} : vector<1x256xf32> to vector<1x16xf32>
    %c3 = arith.constant 3 : index
    %c3_24 = arith.constant 3 : index
    %38 = vector.load %arg6[%c3, %c3_24] : memref<22x22xf32, #tpu.memory_space<vmem>>, vector<1x16xf32>
    tpu.vector_store %arg6[%c3, %c3_24], %37 {strides = array<i32>} : memref<22x22xf32, #tpu.memory_space<vmem>>, vector<1x16xf32>,
    %39 = vector.extract_strided_slice %36 {offsets = [0, 0], sizes = [1, 16], strides = [1, 1]} : vector<1x256xf32> to vector<1x16xf32>
    %c3_25 = arith.constant 3 : index
    %c3_26 = arith.constant 3 : index
    %40 = vector.load %arg7[%c3_25, %c3_26] : memref<22x22xf32, #tpu.memory_space<vmem>>, vector<1x16xf32>
    tpu.vector_store %arg7[%c3_25, %c3_26], %39 {strides = array<i32>} : memref<22x22xf32, #tpu.memory_space<vmem>>, vector<1x16xf32>,
    %41 = vector.extract_strided_slice %32 {offsets = [0, 16], sizes = [1, 16], strides = [1, 1]} : vector<1x256xf32> to vector<1x16xf32>
    %c4 = arith.constant 4 : index
    %c3_27 = arith.constant 3 : index
    %42 = vector.load %arg6[%c4, %c3_27] : memref<22x22xf32, #tpu.memory_space<vmem>>, vector<1x16xf32>
    tpu.vector_store %arg6[%c4, %c3_27], %41 {strides = array<i32>} : memref<22x22xf32, #tpu.memory_space<vmem>>, vector<1x16xf32>,
    %43 = vector.extract_strided_slice %36 {offsets = [0, 16], sizes = [1, 16], strides = [1, 1]} : vector<1x256xf32> to vector<1x16xf32>
    %c4_28 = arith.constant 4 : index
    %c3_29 = arith.constant 3 : index
    %44 = vector.load %arg7[%c4_28, %c3_29] : memref<22x22xf32, #tpu.memory_space<vmem>>, vector<1x16xf32>
    tpu.vector_store %arg7[%c4_28, %c3_29], %43 {strides = array<i32>} : memref<22x22xf32, #tpu.memory_space<vmem>>, vector<1x16xf32>,
    %45 = vector.extract_strided_slice %32 {offsets = [0, 32], sizes = [1, 16], strides = [1, 1]} : vector<1x256xf32> to vector<1x16xf32>
    %c5 = arith.constant 5 : index
    %c3_30 = arith.constant 3 : index
    %46 = vector.load %arg6[%c5, %c3_30] : memref<22x22xf32, #tpu.memory_space<vmem>>, vector<1x16xf32>
    tpu.vector_store %arg6[%c5, %c3_30], %45 {strides = array<i32>} : memref<22x22xf32, #tpu.memory_space<vmem>>, vector<1x16xf32>,
    %47 = vector.extract_strided_slice %36 {offsets = [0, 32], sizes = [1, 16], strides = [1, 1]} : vector<1x256xf32> to vector<1x16xf32>
    %c5_31 = arith.constant 5 : index
    %c3_32 = arith.constant 3 : index
    %48 = vector.load %arg7[%c5_31, %c3_32] : memref<22x22xf32, #tpu.memory_space<vmem>>, vector<1x16xf32>
    tpu.vector_store %arg7[%c5_31, %c3_32], %47 {strides = array<i32>} : memref<22x22xf32, #tpu.memory_space<vmem>>, vector<1x16xf32>,
    %49 = vector.extract_strided_slice %32 {offsets = [0, 48], sizes = [1, 16], strides = [1, 1]} : vector<1x256xf32> to vector<1x16xf32>
    %c6 = arith.constant 6 : index
    %c3_33 = arith.constant 3 : index
    %50 = vector.load %arg6[%c6, %c3_33] : memref<22x22xf32, #tpu.memory_space<vmem>>, vector<1x16xf32>
    tpu.vector_store %arg6[%c6, %c3_33], %49 {strides = array<i32>} : memref<22x22xf32, #tpu.memory_space<vmem>>, vector<1x16xf32>,
    %51 = vector.extract_strided_slice %36 {offsets = [0, 48], sizes = [1, 16], strides = [1, 1]} : vector<1x256xf32> to vector<1x16xf32>
    %c6_34 = arith.constant 6 : index
    %c3_35 = arith.constant 3 : index
    %52 = vector.load %arg7[%c6_34, %c3_35] : memref<22x22xf32, #tpu.memory_space<vmem>>, vector<1x16xf32>
    tpu.vector_store %arg7[%c6_34, %c3_35], %51 {strides = array<i32>} : memref<22x22xf32, #tpu.memory_space<vmem>>, vector<1x16xf32>,
    %53 = vector.extract_strided_slice %32 {offsets = [0, 64], sizes = [1, 16], strides = [1, 1]} : vector<1x256xf32> to vector<1x16xf32>
    %c7 = arith.constant 7 : index
    %c3_36 = arith.constant 3 : index
    %54 = vector.load %arg6[%c7, %c3_36] : memref<22x22xf32, #tpu.memory_space<vmem>>, vector<1x16xf32>
    tpu.vector_store %arg6[%c7, %c3_36], %53 {strides = array<i32>} : memref<22x22xf32, #tpu.memory_space<vmem>>, vector<1x16xf32>,
    %55 = vector.extract_strided_slice %36 {offsets = [0, 64], sizes = [1, 16], strides = [1, 1]} : vector<1x256xf32> to vector<1x16xf32>
    %c7_37 = arith.constant 7 : index
    %c3_38 = arith.constant 3 : index
    %56 = vector.load %arg7[%c7_37, %c3_38] : memref<22x22xf32, #tpu.memory_space<vmem>>, vector<1x16xf32>
    tpu.vector_store %arg7[%c7_37, %c3_38], %55 {strides = array<i32>} : memref<22x22xf32, #tpu.memory_space<vmem>>, vector<1x16xf32>,
    %57 = vector.extract_strided_slice %32 {offsets = [0, 80], sizes = [1, 16], strides = [1, 1]} : vector<1x256xf32> to vector<1x16xf32>
    %c8 = arith.constant 8 : index
    %c3_39 = arith.constant 3 : index
    %58 = vector.load %arg6[%c8, %c3_39] : memref<22x22xf32, #tpu.memory_space<vmem>>, vector<1x16xf32>
    tpu.vector_store %arg6[%c8, %c3_39], %57 {strides = array<i32>} : memref<22x22xf32, #tpu.memory_space<vmem>>, vector<1x16xf32>,
    %59 = vector.extract_strided_slice %36 {offsets = [0, 80], sizes = [1, 16], strides = [1, 1]} : vector<1x256xf32> to vector<1x16xf32>
    %c8_40 = arith.constant 8 : index
    %c3_41 = arith.constant 3 : index
    %60 = vector.load %arg7[%c8_40, %c3_41] : memref<22x22xf32, #tpu.memory_space<vmem>>, vector<1x16xf32>
    tpu.vector_store %arg7[%c8_40, %c3_41], %59 {strides = array<i32>} : memref<22x22xf32, #tpu.memory_space<vmem>>, vector<1x16xf32>,
    %61 = vector.extract_strided_slice %32 {offsets = [0, 96], sizes = [1, 16], strides = [1, 1]} : vector<1x256xf32> to vector<1x16xf32>
    %c9 = arith.constant 9 : index
    %c3_42 = arith.constant 3 : index
    %62 = vector.load %arg6[%c9, %c3_42] : memref<22x22xf32, #tpu.memory_space<vmem>>, vector<1x16xf32>
    tpu.vector_store %arg6[%c9, %c3_42], %61 {strides = array<i32>} : memref<22x22xf32, #tpu.memory_space<vmem>>, vector<1x16xf32>,
    %63 = vector.extract_strided_slice %36 {offsets = [0, 96], sizes = [1, 16], strides = [1, 1]} : vector<1x256xf32> to vector<1x16xf32>
    %c9_43 = arith.constant 9 : index
    %c3_44 = arith.constant 3 : index
    %64 = vector.load %arg7[%c9_43, %c3_44] : memref<22x22xf32, #tpu.memory_space<vmem>>, vector<1x16xf32>
    tpu.vector_store %arg7[%c9_43, %c3_44], %63 {strides = array<i32>} : memref<22x22xf32, #tpu.memory_space<vmem>>, vector<1x16xf32>,
    %65 = vector.extract_strided_slice %32 {offsets = [0, 112], sizes = [1, 16], strides = [1, 1]} : vector<1x256xf32> to vector<1x16xf32>
    %c10 = arith.constant 10 : index
    %c3_45 = arith.constant 3 : index
    %66 = vector.load %arg6[%c10, %c3_45] : memref<22x22xf32, #tpu.memory_space<vmem>>, vector<1x16xf32>
    tpu.vector_store %arg6[%c10, %c3_45], %65 {strides = array<i32>} : memref<22x22xf32, #tpu.memory_space<vmem>>, vector<1x16xf32>,
    %67 = vector.extract_strided_slice %36 {offsets = [0, 112], sizes = [1, 16], strides = [1, 1]} : vector<1x256xf32> to vector<1x16xf32>
    %c10_46 = arith.constant 10 : index
    %c3_47 = arith.constant 3 : index
    %68 = vector.load %arg7[%c10_46, %c3_47] : memref<22x22xf32, #tpu.memory_space<vmem>>, vector<1x16xf32>
    tpu.vector_store %arg7[%c10_46, %c3_47], %67 {strides = array<i32>} : memref<22x22xf32, #tpu.memory_space<vmem>>, vector<1x16xf32>,
    %69 = vector.extract_strided_slice %32 {offsets = [0, 128], sizes = [1, 16], strides = [1, 1]} : vector<1x256xf32> to vector<1x16xf32>
    %c11 = arith.constant 11 : index
    %c3_48 = arith.constant 3 : index
    %70 = vector.load %arg6[%c11, %c3_48] : memref<22x22xf32, #tpu.memory_space<vmem>>, vector<1x16xf32>
    tpu.vector_store %arg6[%c11, %c3_48], %69 {strides = array<i32>} : memref<22x22xf32, #tpu.memory_space<vmem>>, vector<1x16xf32>,
    %71 = vector.extract_strided_slice %36 {offsets = [0, 128], sizes = [1, 16], strides = [1, 1]} : vector<1x256xf32> to vector<1x16xf32>
    %c11_49 = arith.constant 11 : index
    %c3_50 = arith.constant 3 : index
    %72 = vector.load %arg7[%c11_49, %c3_50] : memref<22x22xf32, #tpu.memory_space<vmem>>, vector<1x16xf32>
    tpu.vector_store %arg7[%c11_49, %c3_50], %71 {strides = array<i32>} : memref<22x22xf32, #tpu.memory_space<vmem>>, vector<1x16xf32>,
    %73 = vector.extract_strided_slice %32 {offsets = [0, 144], sizes = [1, 16], strides = [1, 1]} : vector<1x256xf32> to vector<1x16xf32>
    %c12 = arith.constant 12 : index
    %c3_51 = arith.constant 3 : index
    %74 = vector.load %arg6[%c12, %c3_51] : memref<22x22xf32, #tpu.memory_space<vmem>>, vector<1x16xf32>
    tpu.vector_store %arg6[%c12, %c3_51], %73 {strides = array<i32>} : memref<22x22xf32, #tpu.memory_space<vmem>>, vector<1x16xf32>,
    %75 = vector.extract_strided_slice %36 {offsets = [0, 144], sizes = [1, 16], strides = [1, 1]} : vector<1x256xf32> to vector<1x16xf32>
    %c12_52 = arith.constant 12 : index
    %c3_53 = arith.constant 3 : index
    %76 = vector.load %arg7[%c12_52, %c3_53] : memref<22x22xf32, #tpu.memory_space<vmem>>, vector<1x16xf32>
    tpu.vector_store %arg7[%c12_52, %c3_53], %75 {strides = array<i32>} : memref<22x22xf32, #tpu.memory_space<vmem>>, vector<1x16xf32>,
    %77 = vector.extract_strided_slice %32 {offsets = [0, 160], sizes = [1, 16], strides = [1, 1]} : vector<1x256xf32> to vector<1x16xf32>
    %c13 = arith.constant 13 : index
    %c3_54 = arith.constant 3 : index
    %78 = vector.load %arg6[%c13, %c3_54] : memref<22x22xf32, #tpu.memory_space<vmem>>, vector<1x16xf32>
    tpu.vector_store %arg6[%c13, %c3_54], %77 {strides = array<i32>} : memref<22x22xf32, #tpu.memory_space<vmem>>, vector<1x16xf32>,
    %79 = vector.extract_strided_slice %36 {offsets = [0, 160], sizes = [1, 16], strides = [1, 1]} : vector<1x256xf32> to vector<1x16xf32>
    %c13_55 = arith.constant 13 : index
    %c3_56 = arith.constant 3 : index
    %80 = vector.load %arg7[%c13_55, %c3_56] : memref<22x22xf32, #tpu.memory_space<vmem>>, vector<1x16xf32>
    tpu.vector_store %arg7[%c13_55, %c3_56], %79 {strides = array<i32>} : memref<22x22xf32, #tpu.memory_space<vmem>>, vector<1x16xf32>,
    %81 = vector.extract_strided_slice %32 {offsets = [0, 176], sizes = [1, 16], strides = [1, 1]} : vector<1x256xf32> to vector<1x16xf32>
    %c14 = arith.constant 14 : index
    %c3_57 = arith.constant 3 : index
    %82 = vector.load %arg6[%c14, %c3_57] : memref<22x22xf32, #tpu.memory_space<vmem>>, vector<1x16xf32>
    tpu.vector_store %arg6[%c14, %c3_57], %81 {strides = array<i32>} : memref<22x22xf32, #tpu.memory_space<vmem>>, vector<1x16xf32>,
    %83 = vector.extract_strided_slice %36 {offsets = [0, 176], sizes = [1, 16], strides = [1, 1]} : vector<1x256xf32> to vector<1x16xf32>
    %c14_58 = arith.constant 14 : index
    %c3_59 = arith.constant 3 : index
    %84 = vector.load %arg7[%c14_58, %c3_59] : memref<22x22xf32, #tpu.memory_space<vmem>>, vector<1x16xf32>
    tpu.vector_store %arg7[%c14_58, %c3_59], %83 {strides = array<i32>} : memref<22x22xf32, #tpu.memory_space<vmem>>, vector<1x16xf32>,
    %85 = vector.extract_strided_slice %32 {offsets = [0, 192], sizes = [1, 16], strides = [1, 1]} : vector<1x256xf32> to vector<1x16xf32>
    %c15 = arith.constant 15 : index
    %c3_60 = arith.constant 3 : index
    %86 = vector.load %arg6[%c15, %c3_60] : memref<22x22xf32, #tpu.memory_space<vmem>>, vector<1x16xf32>
    tpu.vector_store %arg6[%c15, %c3_60], %85 {strides = array<i32>} : memref<22x22xf32, #tpu.memory_space<vmem>>, vector<1x16xf32>,
    %87 = vector.extract_strided_slice %36 {offsets = [0, 192], sizes = [1, 16], strides = [1, 1]} : vector<1x256xf32> to vector<1x16xf32>
    %c15_61 = arith.constant 15 : index
    %c3_62 = arith.constant 3 : index
    %88 = vector.load %arg7[%c15_61, %c3_62] : memref<22x22xf32, #tpu.memory_space<vmem>>, vector<1x16xf32>
    tpu.vector_store %arg7[%c15_61, %c3_62], %87 {strides = array<i32>} : memref<22x22xf32, #tpu.memory_space<vmem>>, vector<1x16xf32>,
    %89 = vector.extract_strided_slice %32 {offsets = [0, 208], sizes = [1, 16], strides = [1, 1]} : vector<1x256xf32> to vector<1x16xf32>
    %c16 = arith.constant 16 : index
    %c3_63 = arith.constant 3 : index
    %90 = vector.load %arg6[%c16, %c3_63] : memref<22x22xf32, #tpu.memory_space<vmem>>, vector<1x16xf32>
    tpu.vector_store %arg6[%c16, %c3_63], %89 {strides = array<i32>} : memref<22x22xf32, #tpu.memory_space<vmem>>, vector<1x16xf32>,
    %91 = vector.extract_strided_slice %36 {offsets = [0, 208], sizes = [1, 16], strides = [1, 1]} : vector<1x256xf32> to vector<1x16xf32>
    %c16_64 = arith.constant 16 : index
    %c3_65 = arith.constant 3 : index
    %92 = vector.load %arg7[%c16_64, %c3_65] : memref<22x22xf32, #tpu.memory_space<vmem>>, vector<1x16xf32>
    tpu.vector_store %arg7[%c16_64, %c3_65], %91 {strides = array<i32>} : memref<22x22xf32, #tpu.memory_space<vmem>>, vector<1x16xf32>,
    %93 = vector.extract_strided_slice %32 {offsets = [0, 224], sizes = [1, 16], strides = [1, 1]} : vector<1x256xf32> to vector<1x16xf32>
    %c17 = arith.constant 17 : index
    %c3_66 = arith.constant 3 : index
    %94 = vector.load %arg6[%c17, %c3_66] : memref<22x22xf32, #tpu.memory_space<vmem>>, vector<1x16xf32>
    tpu.vector_store %arg6[%c17, %c3_66], %93 {strides = array<i32>} : memref<22x22xf32, #tpu.memory_space<vmem>>, vector<1x16xf32>,
    %95 = vector.extract_strided_slice %36 {offsets = [0, 224], sizes = [1, 16], strides = [1, 1]} : vector<1x256xf32> to vector<1x16xf32>
    %c17_67 = arith.constant 17 : index
    %c3_68 = arith.constant 3 : index
    %96 = vector.load %arg7[%c17_67, %c3_68] : memref<22x22xf32, #tpu.memory_space<vmem>>, vector<1x16xf32>
    tpu.vector_store %arg7[%c17_67, %c3_68], %95 {strides = array<i32>} : memref<22x22xf32, #tpu.memory_space<vmem>>, vector<1x16xf32>,
    %97 = vector.extract_strided_slice %32 {offsets = [0, 240], sizes = [1, 16], strides = [1, 1]} : vector<1x256xf32> to vector<1x16xf32>
    %c18 = arith.constant 18 : index
    %c3_69 = arith.constant 3 : index
    %98 = vector.load %arg6[%c18, %c3_69] : memref<22x22xf32, #tpu.memory_space<vmem>>, vector<1x16xf32>
    tpu.vector_store %arg6[%c18, %c3_69], %97 {strides = array<i32>} : memref<22x22xf32, #tpu.memory_space<vmem>>, vector<1x16xf32>,
    %99 = vector.extract_strided_slice %36 {offsets = [0, 240], sizes = [1, 16], strides = [1, 1]} : vector<1x256xf32> to vector<1x16xf32>
    %c18_70 = arith.constant 18 : index
    %c3_71 = arith.constant 3 : index
    %100 = vector.load %arg7[%c18_70, %c3_71] : memref<22x22xf32, #tpu.memory_space<vmem>>, vector<1x16xf32>
    tpu.vector_store %arg7[%c18_70, %c3_71], %99 {strides = array<i32>} : memref<22x22xf32, #tpu.memory_space<vmem>>, vector<1x16xf32>,
    %c0_72 = arith.constant 0 : index
    %c0_73 = arith.constant 0 : index
    %101 = vector.load %arg6[%c0_72, %c0_73] : memref<22x22xf32, #tpu.memory_space<vmem>>, vector<22x22xf32>
    %c0_74 = arith.constant 0 : index
    %c0_75 = arith.constant 0 : index
    %102 = vector.load %arg7[%c0_74, %c0_75] : memref<22x22xf32, #tpu.memory_space<vmem>>, vector<22x22xf32>
    %cst_76 = arith.constant 0.000000e+00 : f32
    %103 = vector.broadcast %cst_76 : f32 to vector<16x16xf32>
    %104 = vector.extract_strided_slice %101 {offsets = [0, 0], sizes = [22, 16], strides = [1, 1]} : vector<22x22xf32> to vector<22x16xf32>
    %105 = vector.extract_strided_slice %102 {offsets = [0, 0], sizes = [22, 16], strides = [1, 1]} : vector<22x22xf32> to vector<22x16xf32>
    %c0_77 = arith.constant 0 : index
    %106 = memref.load %arg4[%c0_77] : memref<98xf32, #tpu.memory_space<smem>>
    %107 = vector.extract_strided_slice %104 {offsets = [0, 0], sizes = [16, 16], strides = [1, 1]} : vector<22x16xf32> to vector<16x16xf32>
    %108 = vector.broadcast %106 : f32 to vector<16x16xf32>
    %109 = arith.mulf %108, %107 : vector<16x16xf32>
    %110 = arith.addf %103, %109 : vector<16x16xf32>
    %c49 = arith.constant 49 : index
    %111 = memref.load %arg4[%c49] : memref<98xf32, #tpu.memory_space<smem>>
    %112 = vector.extract_strided_slice %105 {offsets = [0, 0], sizes = [16, 16], strides = [1, 1]} : vector<22x16xf32> to vector<16x16xf32>
    %113 = vector.broadcast %111 : f32 to vector<16x16xf32>
    %114 = arith.mulf %113, %112 : vector<16x16xf32>
    %115 = arith.addf %110, %114 : vector<16x16xf32>
    %c7_78 = arith.constant 7 : index
    %116 = memref.load %arg4[%c7_78] : memref<98xf32, #tpu.memory_space<smem>>
    %117 = vector.extract_strided_slice %104 {offsets = [1, 0], sizes = [16, 16], strides = [1, 1]} : vector<22x16xf32> to vector<16x16xf32>
    %118 = vector.broadcast %116 : f32 to vector<16x16xf32>
    %119 = arith.mulf %118, %117 : vector<16x16xf32>
    %120 = arith.addf %115, %119 : vector<16x16xf32>
    %c56 = arith.constant 56 : index
    %121 = memref.load %arg4[%c56] : memref<98xf32, #tpu.memory_space<smem>>
    %122 = vector.extract_strided_slice %105 {offsets = [1, 0], sizes = [16, 16], strides = [1, 1]} : vector<22x16xf32> to vector<16x16xf32>
    %123 = vector.broadcast %121 : f32 to vector<16x16xf32>
    %124 = arith.mulf %123, %122 : vector<16x16xf32>
    %125 = arith.addf %120, %124 : vector<16x16xf32>
    %c14_79 = arith.constant 14 : index
    %126 = memref.load %arg4[%c14_79] : memref<98xf32, #tpu.memory_space<smem>>
    %127 = vector.extract_strided_slice %104 {offsets = [2, 0], sizes = [16, 16], strides = [1, 1]} : vector<22x16xf32> to vector<16x16xf32>
    %128 = vector.broadcast %126 : f32 to vector<16x16xf32>
    %129 = arith.mulf %128, %127 : vector<16x16xf32>
    %130 = arith.addf %125, %129 : vector<16x16xf32>
    %c63 = arith.constant 63 : index
    %131 = memref.load %arg4[%c63] : memref<98xf32, #tpu.memory_space<smem>>
    %132 = vector.extract_strided_slice %105 {offsets = [2, 0], sizes = [16, 16], strides = [1, 1]} : vector<22x16xf32> to vector<16x16xf32>
    %133 = vector.broadcast %131 : f32 to vector<16x16xf32>
    %134 = arith.mulf %133, %132 : vector<16x16xf32>
    %135 = arith.addf %130, %134 : vector<16x16xf32>
    %c21 = arith.constant 21 : index
    %136 = memref.load %arg4[%c21] : memref<98xf32, #tpu.memory_space<smem>>
    %137 = vector.extract_strided_slice %104 {offsets = [3, 0], sizes = [16, 16], strides = [1, 1]} : vector<22x16xf32> to vector<16x16xf32>
    %138 = vector.broadcast %136 : f32 to vector<16x16xf32>
    %139 = arith.mulf %138, %137 : vector<16x16xf32>
    %140 = arith.addf %135, %139 : vector<16x16xf32>
    %c70 = arith.constant 70 : index
    %141 = memref.load %arg4[%c70] : memref<98xf32, #tpu.memory_space<smem>>
    %142 = vector.extract_strided_slice %105 {offsets = [3, 0], sizes = [16, 16], strides = [1, 1]} : vector<22x16xf32> to vector<16x16xf32>
    %143 = vector.broadcast %141 : f32 to vector<16x16xf32>
    %144 = arith.mulf %143, %142 : vector<16x16xf32>
    %145 = arith.addf %140, %144 : vector<16x16xf32>
    %c28 = arith.constant 28 : index
    %146 = memref.load %arg4[%c28] : memref<98xf32, #tpu.memory_space<smem>>
    %147 = vector.extract_strided_slice %104 {offsets = [4, 0], sizes = [16, 16], strides = [1, 1]} : vector<22x16xf32> to vector<16x16xf32>
    %148 = vector.broadcast %146 : f32 to vector<16x16xf32>
    %149 = arith.mulf %148, %147 : vector<16x16xf32>
    %150 = arith.addf %145, %149 : vector<16x16xf32>
    %c77 = arith.constant 77 : index
    %151 = memref.load %arg4[%c77] : memref<98xf32, #tpu.memory_space<smem>>
    %152 = vector.extract_strided_slice %105 {offsets = [4, 0], sizes = [16, 16], strides = [1, 1]} : vector<22x16xf32> to vector<16x16xf32>
    %153 = vector.broadcast %151 : f32 to vector<16x16xf32>
    %154 = arith.mulf %153, %152 : vector<16x16xf32>
    %155 = arith.addf %150, %154 : vector<16x16xf32>
    %c35 = arith.constant 35 : index
    %156 = memref.load %arg4[%c35] : memref<98xf32, #tpu.memory_space<smem>>
    %157 = vector.extract_strided_slice %104 {offsets = [5, 0], sizes = [16, 16], strides = [1, 1]} : vector<22x16xf32> to vector<16x16xf32>
    %158 = vector.broadcast %156 : f32 to vector<16x16xf32>
    %159 = arith.mulf %158, %157 : vector<16x16xf32>
    %160 = arith.addf %155, %159 : vector<16x16xf32>
    %c84 = arith.constant 84 : index
    %161 = memref.load %arg4[%c84] : memref<98xf32, #tpu.memory_space<smem>>
    %162 = vector.extract_strided_slice %105 {offsets = [5, 0], sizes = [16, 16], strides = [1, 1]} : vector<22x16xf32> to vector<16x16xf32>
    %163 = vector.broadcast %161 : f32 to vector<16x16xf32>
    %164 = arith.mulf %163, %162 : vector<16x16xf32>
    %165 = arith.addf %160, %164 : vector<16x16xf32>
    %c42 = arith.constant 42 : index
    %166 = memref.load %arg4[%c42] : memref<98xf32, #tpu.memory_space<smem>>
    %167 = vector.extract_strided_slice %104 {offsets = [6, 0], sizes = [16, 16], strides = [1, 1]} : vector<22x16xf32> to vector<16x16xf32>
    %168 = vector.broadcast %166 : f32 to vector<16x16xf32>
    %169 = arith.mulf %168, %167 : vector<16x16xf32>
    %170 = arith.addf %165, %169 : vector<16x16xf32>
    %c91 = arith.constant 91 : index
    %171 = memref.load %arg4[%c91] : memref<98xf32, #tpu.memory_space<smem>>
    %172 = vector.extract_strided_slice %105 {offsets = [6, 0], sizes = [16, 16], strides = [1, 1]} : vector<22x16xf32> to vector<16x16xf32>
    %173 = vector.broadcast %171 : f32 to vector<16x16xf32>
    %174 = arith.mulf %173, %172 : vector<16x16xf32>
    %175 = arith.addf %170, %174 : vector<16x16xf32>
    %176 = vector.extract_strided_slice %101 {offsets = [0, 1], sizes = [22, 16], strides = [1, 1]} : vector<22x22xf32> to vector<22x16xf32>
    %177 = vector.extract_strided_slice %102 {offsets = [0, 1], sizes = [22, 16], strides = [1, 1]} : vector<22x22xf32> to vector<22x16xf32>
    %c1 = arith.constant 1 : index
    %178 = memref.load %arg4[%c1] : memref<98xf32, #tpu.memory_space<smem>>
    %179 = vector.extract_strided_slice %176 {offsets = [0, 0], sizes = [16, 16], strides = [1, 1]} : vector<22x16xf32> to vector<16x16xf32>
    %180 = vector.broadcast %178 : f32 to vector<16x16xf32>
    %181 = arith.mulf %180, %179 : vector<16x16xf32>
    %182 = arith.addf %175, %181 : vector<16x16xf32>
    %c50 = arith.constant 50 : index
    %183 = memref.load %arg4[%c50] : memref<98xf32, #tpu.memory_space<smem>>
    %184 = vector.extract_strided_slice %177 {offsets = [0, 0], sizes = [16, 16], strides = [1, 1]} : vector<22x16xf32> to vector<16x16xf32>
    %185 = vector.broadcast %183 : f32 to vector<16x16xf32>
    %186 = arith.mulf %185, %184 : vector<16x16xf32>
    %187 = arith.addf %182, %186 : vector<16x16xf32>
    %c8_80 = arith.constant 8 : index
    %188 = memref.load %arg4[%c8_80] : memref<98xf32, #tpu.memory_space<smem>>
    %189 = vector.extract_strided_slice %176 {offsets = [1, 0], sizes = [16, 16], strides = [1, 1]} : vector<22x16xf32> to vector<16x16xf32>
    %190 = vector.broadcast %188 : f32 to vector<16x16xf32>
    %191 = arith.mulf %190, %189 : vector<16x16xf32>
    %192 = arith.addf %187, %191 : vector<16x16xf32>
    %c57 = arith.constant 57 : index
    %193 = memref.load %arg4[%c57] : memref<98xf32, #tpu.memory_space<smem>>
    %194 = vector.extract_strided_slice %177 {offsets = [1, 0], sizes = [16, 16], strides = [1, 1]} : vector<22x16xf32> to vector<16x16xf32>
    %195 = vector.broadcast %193 : f32 to vector<16x16xf32>
    %196 = arith.mulf %195, %194 : vector<16x16xf32>
    %197 = arith.addf %192, %196 : vector<16x16xf32>
    %c15_81 = arith.constant 15 : index
    %198 = memref.load %arg4[%c15_81] : memref<98xf32, #tpu.memory_space<smem>>
    %199 = vector.extract_strided_slice %176 {offsets = [2, 0], sizes = [16, 16], strides = [1, 1]} : vector<22x16xf32> to vector<16x16xf32>
    %200 = vector.broadcast %198 : f32 to vector<16x16xf32>
    %201 = arith.mulf %200, %199 : vector<16x16xf32>
    %202 = arith.addf %197, %201 : vector<16x16xf32>
    %c64 = arith.constant 64 : index
    %203 = memref.load %arg4[%c64] : memref<98xf32, #tpu.memory_space<smem>>
    %204 = vector.extract_strided_slice %177 {offsets = [2, 0], sizes = [16, 16], strides = [1, 1]} : vector<22x16xf32> to vector<16x16xf32>
    %205 = vector.broadcast %203 : f32 to vector<16x16xf32>
    %206 = arith.mulf %205, %204 : vector<16x16xf32>
    %207 = arith.addf %202, %206 : vector<16x16xf32>
    %c22 = arith.constant 22 : index
    %208 = memref.load %arg4[%c22] : memref<98xf32, #tpu.memory_space<smem>>
    %209 = vector.extract_strided_slice %176 {offsets = [3, 0], sizes = [16, 16], strides = [1, 1]} : vector<22x16xf32> to vector<16x16xf32>
    %210 = vector.broadcast %208 : f32 to vector<16x16xf32>
    %211 = arith.mulf %210, %209 : vector<16x16xf32>
    %212 = arith.addf %207, %211 : vector<16x16xf32>
    %c71 = arith.constant 71 : index
    %213 = memref.load %arg4[%c71] : memref<98xf32, #tpu.memory_space<smem>>
    %214 = vector.extract_strided_slice %177 {offsets = [3, 0], sizes = [16, 16], strides = [1, 1]} : vector<22x16xf32> to vector<16x16xf32>
    %215 = vector.broadcast %213 : f32 to vector<16x16xf32>
    %216 = arith.mulf %215, %214 : vector<16x16xf32>
    %217 = arith.addf %212, %216 : vector<16x16xf32>
    %c29 = arith.constant 29 : index
    %218 = memref.load %arg4[%c29] : memref<98xf32, #tpu.memory_space<smem>>
    %219 = vector.extract_strided_slice %176 {offsets = [4, 0], sizes = [16, 16], strides = [1, 1]} : vector<22x16xf32> to vector<16x16xf32>
    %220 = vector.broadcast %218 : f32 to vector<16x16xf32>
    %221 = arith.mulf %220, %219 : vector<16x16xf32>
    %222 = arith.addf %217, %221 : vector<16x16xf32>
    %c78 = arith.constant 78 : index
    %223 = memref.load %arg4[%c78] : memref<98xf32, #tpu.memory_space<smem>>
    %224 = vector.extract_strided_slice %177 {offsets = [4, 0], sizes = [16, 16], strides = [1, 1]} : vector<22x16xf32> to vector<16x16xf32>
    %225 = vector.broadcast %223 : f32 to vector<16x16xf32>
    %226 = arith.mulf %225, %224 : vector<16x16xf32>
    %227 = arith.addf %222, %226 : vector<16x16xf32>
    %c36 = arith.constant 36 : index
    %228 = memref.load %arg4[%c36] : memref<98xf32, #tpu.memory_space<smem>>
    %229 = vector.extract_strided_slice %176 {offsets = [5, 0], sizes = [16, 16], strides = [1, 1]} : vector<22x16xf32> to vector<16x16xf32>
    %230 = vector.broadcast %228 : f32 to vector<16x16xf32>
    %231 = arith.mulf %230, %229 : vector<16x16xf32>
    %232 = arith.addf %227, %231 : vector<16x16xf32>
    %c85 = arith.constant 85 : index
    %233 = memref.load %arg4[%c85] : memref<98xf32, #tpu.memory_space<smem>>
    %234 = vector.extract_strided_slice %177 {offsets = [5, 0], sizes = [16, 16], strides = [1, 1]} : vector<22x16xf32> to vector<16x16xf32>
    %235 = vector.broadcast %233 : f32 to vector<16x16xf32>
    %236 = arith.mulf %235, %234 : vector<16x16xf32>
    %237 = arith.addf %232, %236 : vector<16x16xf32>
    %c43 = arith.constant 43 : index
    %238 = memref.load %arg4[%c43] : memref<98xf32, #tpu.memory_space<smem>>
    %239 = vector.extract_strided_slice %176 {offsets = [6, 0], sizes = [16, 16], strides = [1, 1]} : vector<22x16xf32> to vector<16x16xf32>
    %240 = vector.broadcast %238 : f32 to vector<16x16xf32>
    %241 = arith.mulf %240, %239 : vector<16x16xf32>
    %242 = arith.addf %237, %241 : vector<16x16xf32>
    %c92 = arith.constant 92 : index
    %243 = memref.load %arg4[%c92] : memref<98xf32, #tpu.memory_space<smem>>
    %244 = vector.extract_strided_slice %177 {offsets = [6, 0], sizes = [16, 16], strides = [1, 1]} : vector<22x16xf32> to vector<16x16xf32>
    %245 = vector.broadcast %243 : f32 to vector<16x16xf32>
    %246 = arith.mulf %245, %244 : vector<16x16xf32>
    %247 = arith.addf %242, %246 : vector<16x16xf32>
    %248 = vector.extract_strided_slice %101 {offsets = [0, 2], sizes = [22, 16], strides = [1, 1]} : vector<22x22xf32> to vector<22x16xf32>
    %249 = vector.extract_strided_slice %102 {offsets = [0, 2], sizes = [22, 16], strides = [1, 1]} : vector<22x22xf32> to vector<22x16xf32>
    %c2 = arith.constant 2 : index
    %250 = memref.load %arg4[%c2] : memref<98xf32, #tpu.memory_space<smem>>
    %251 = vector.extract_strided_slice %248 {offsets = [0, 0], sizes = [16, 16], strides = [1, 1]} : vector<22x16xf32> to vector<16x16xf32>
    %252 = vector.broadcast %250 : f32 to vector<16x16xf32>
    %253 = arith.mulf %252, %251 : vector<16x16xf32>
    %254 = arith.addf %247, %253 : vector<16x16xf32>
    %c51 = arith.constant 51 : index
    %255 = memref.load %arg4[%c51] : memref<98xf32, #tpu.memory_space<smem>>
    %256 = vector.extract_strided_slice %249 {offsets = [0, 0], sizes = [16, 16], strides = [1, 1]} : vector<22x16xf32> to vector<16x16xf32>
    %257 = vector.broadcast %255 : f32 to vector<16x16xf32>
    %258 = arith.mulf %257, %256 : vector<16x16xf32>
    %259 = arith.addf %254, %258 : vector<16x16xf32>
    %c9_82 = arith.constant 9 : index
    %260 = memref.load %arg4[%c9_82] : memref<98xf32, #tpu.memory_space<smem>>
    %261 = vector.extract_strided_slice %248 {offsets = [1, 0], sizes = [16, 16], strides = [1, 1]} : vector<22x16xf32> to vector<16x16xf32>
    %262 = vector.broadcast %260 : f32 to vector<16x16xf32>
    %263 = arith.mulf %262, %261 : vector<16x16xf32>
    %264 = arith.addf %259, %263 : vector<16x16xf32>
    %c58 = arith.constant 58 : index
    %265 = memref.load %arg4[%c58] : memref<98xf32, #tpu.memory_space<smem>>
    %266 = vector.extract_strided_slice %249 {offsets = [1, 0], sizes = [16, 16], strides = [1, 1]} : vector<22x16xf32> to vector<16x16xf32>
    %267 = vector.broadcast %265 : f32 to vector<16x16xf32>
    %268 = arith.mulf %267, %266 : vector<16x16xf32>
    %269 = arith.addf %264, %268 : vector<16x16xf32>
    %c16_83 = arith.constant 16 : index
    %270 = memref.load %arg4[%c16_83] : memref<98xf32, #tpu.memory_space<smem>>
    %271 = vector.extract_strided_slice %248 {offsets = [2, 0], sizes = [16, 16], strides = [1, 1]} : vector<22x16xf32> to vector<16x16xf32>
    %272 = vector.broadcast %270 : f32 to vector<16x16xf32>
    %273 = arith.mulf %272, %271 : vector<16x16xf32>
    %274 = arith.addf %269, %273 : vector<16x16xf32>
    %c65 = arith.constant 65 : index
    %275 = memref.load %arg4[%c65] : memref<98xf32, #tpu.memory_space<smem>>
    %276 = vector.extract_strided_slice %249 {offsets = [2, 0], sizes = [16, 16], strides = [1, 1]} : vector<22x16xf32> to vector<16x16xf32>
    %277 = vector.broadcast %275 : f32 to vector<16x16xf32>
    %278 = arith.mulf %277, %276 : vector<16x16xf32>
    %279 = arith.addf %274, %278 : vector<16x16xf32>
    %c23 = arith.constant 23 : index
    %280 = memref.load %arg4[%c23] : memref<98xf32, #tpu.memory_space<smem>>
    %281 = vector.extract_strided_slice %248 {offsets = [3, 0], sizes = [16, 16], strides = [1, 1]} : vector<22x16xf32> to vector<16x16xf32>
    %282 = vector.broadcast %280 : f32 to vector<16x16xf32>
    %283 = arith.mulf %282, %281 : vector<16x16xf32>
    %284 = arith.addf %279, %283 : vector<16x16xf32>
    %c72 = arith.constant 72 : index
    %285 = memref.load %arg4[%c72] : memref<98xf32, #tpu.memory_space<smem>>
    %286 = vector.extract_strided_slice %249 {offsets = [3, 0], sizes = [16, 16], strides = [1, 1]} : vector<22x16xf32> to vector<16x16xf32>
    %287 = vector.broadcast %285 : f32 to vector<16x16xf32>
    %288 = arith.mulf %287, %286 : vector<16x16xf32>
    %289 = arith.addf %284, %288 : vector<16x16xf32>
    %c30 = arith.constant 30 : index
    %290 = memref.load %arg4[%c30] : memref<98xf32, #tpu.memory_space<smem>>
    %291 = vector.extract_strided_slice %248 {offsets = [4, 0], sizes = [16, 16], strides = [1, 1]} : vector<22x16xf32> to vector<16x16xf32>
    %292 = vector.broadcast %290 : f32 to vector<16x16xf32>
    %293 = arith.mulf %292, %291 : vector<16x16xf32>
    %294 = arith.addf %289, %293 : vector<16x16xf32>
    %c79 = arith.constant 79 : index
    %295 = memref.load %arg4[%c79] : memref<98xf32, #tpu.memory_space<smem>>
    %296 = vector.extract_strided_slice %249 {offsets = [4, 0], sizes = [16, 16], strides = [1, 1]} : vector<22x16xf32> to vector<16x16xf32>
    %297 = vector.broadcast %295 : f32 to vector<16x16xf32>
    %298 = arith.mulf %297, %296 : vector<16x16xf32>
    %299 = arith.addf %294, %298 : vector<16x16xf32>
    %c37 = arith.constant 37 : index
    %300 = memref.load %arg4[%c37] : memref<98xf32, #tpu.memory_space<smem>>
    %301 = vector.extract_strided_slice %248 {offsets = [5, 0], sizes = [16, 16], strides = [1, 1]} : vector<22x16xf32> to vector<16x16xf32>
    %302 = vector.broadcast %300 : f32 to vector<16x16xf32>
    %303 = arith.mulf %302, %301 : vector<16x16xf32>
    %304 = arith.addf %299, %303 : vector<16x16xf32>
    %c86 = arith.constant 86 : index
    %305 = memref.load %arg4[%c86] : memref<98xf32, #tpu.memory_space<smem>>
    %306 = vector.extract_strided_slice %249 {offsets = [5, 0], sizes = [16, 16], strides = [1, 1]} : vector<22x16xf32> to vector<16x16xf32>
    %307 = vector.broadcast %305 : f32 to vector<16x16xf32>
    %308 = arith.mulf %307, %306 : vector<16x16xf32>
    %309 = arith.addf %304, %308 : vector<16x16xf32>
    %c44 = arith.constant 44 : index
    %310 = memref.load %arg4[%c44] : memref<98xf32, #tpu.memory_space<smem>>
    %311 = vector.extract_strided_slice %248 {offsets = [6, 0], sizes = [16, 16], strides = [1, 1]} : vector<22x16xf32> to vector<16x16xf32>
    %312 = vector.broadcast %310 : f32 to vector<16x16xf32>
    %313 = arith.mulf %312, %311 : vector<16x16xf32>
    %314 = arith.addf %309, %313 : vector<16x16xf32>
    %c93 = arith.constant 93 : index
    %315 = memref.load %arg4[%c93] : memref<98xf32, #tpu.memory_space<smem>>
    %316 = vector.extract_strided_slice %249 {offsets = [6, 0], sizes = [16, 16], strides = [1, 1]} : vector<22x16xf32> to vector<16x16xf32>
    %317 = vector.broadcast %315 : f32 to vector<16x16xf32>
    %318 = arith.mulf %317, %316 : vector<16x16xf32>
    %319 = arith.addf %314, %318 : vector<16x16xf32>
    %320 = vector.extract_strided_slice %101 {offsets = [0, 3], sizes = [22, 16], strides = [1, 1]} : vector<22x22xf32> to vector<22x16xf32>
    %321 = vector.extract_strided_slice %102 {offsets = [0, 3], sizes = [22, 16], strides = [1, 1]} : vector<22x22xf32> to vector<22x16xf32>
    %c3_84 = arith.constant 3 : index
    %322 = memref.load %arg4[%c3_84] : memref<98xf32, #tpu.memory_space<smem>>
    %323 = vector.extract_strided_slice %320 {offsets = [0, 0], sizes = [16, 16], strides = [1, 1]} : vector<22x16xf32> to vector<16x16xf32>
    %324 = vector.broadcast %322 : f32 to vector<16x16xf32>
    %325 = arith.mulf %324, %323 : vector<16x16xf32>
    %326 = arith.addf %319, %325 : vector<16x16xf32>
    %c52 = arith.constant 52 : index
    %327 = memref.load %arg4[%c52] : memref<98xf32, #tpu.memory_space<smem>>
    %328 = vector.extract_strided_slice %321 {offsets = [0, 0], sizes = [16, 16], strides = [1, 1]} : vector<22x16xf32> to vector<16x16xf32>
    %329 = vector.broadcast %327 : f32 to vector<16x16xf32>
    %330 = arith.mulf %329, %328 : vector<16x16xf32>
    %331 = arith.addf %326, %330 : vector<16x16xf32>
    %c10_85 = arith.constant 10 : index
    %332 = memref.load %arg4[%c10_85] : memref<98xf32, #tpu.memory_space<smem>>
    %333 = vector.extract_strided_slice %320 {offsets = [1, 0], sizes = [16, 16], strides = [1, 1]} : vector<22x16xf32> to vector<16x16xf32>
    %334 = vector.broadcast %332 : f32 to vector<16x16xf32>
    %335 = arith.mulf %334, %333 : vector<16x16xf32>
    %336 = arith.addf %331, %335 : vector<16x16xf32>
    %c59 = arith.constant 59 : index
    %337 = memref.load %arg4[%c59] : memref<98xf32, #tpu.memory_space<smem>>
    %338 = vector.extract_strided_slice %321 {offsets = [1, 0], sizes = [16, 16], strides = [1, 1]} : vector<22x16xf32> to vector<16x16xf32>
    %339 = vector.broadcast %337 : f32 to vector<16x16xf32>
    %340 = arith.mulf %339, %338 : vector<16x16xf32>
    %341 = arith.addf %336, %340 : vector<16x16xf32>
    %c17_86 = arith.constant 17 : index
    %342 = memref.load %arg4[%c17_86] : memref<98xf32, #tpu.memory_space<smem>>
    %343 = vector.extract_strided_slice %320 {offsets = [2, 0], sizes = [16, 16], strides = [1, 1]} : vector<22x16xf32> to vector<16x16xf32>
    %344 = vector.broadcast %342 : f32 to vector<16x16xf32>
    %345 = arith.mulf %344, %343 : vector<16x16xf32>
    %346 = arith.addf %341, %345 : vector<16x16xf32>
    %c66 = arith.constant 66 : index
    %347 = memref.load %arg4[%c66] : memref<98xf32, #tpu.memory_space<smem>>
    %348 = vector.extract_strided_slice %321 {offsets = [2, 0], sizes = [16, 16], strides = [1, 1]} : vector<22x16xf32> to vector<16x16xf32>
    %349 = vector.broadcast %347 : f32 to vector<16x16xf32>
    %350 = arith.mulf %349, %348 : vector<16x16xf32>
    %351 = arith.addf %346, %350 : vector<16x16xf32>
    %c24 = arith.constant 24 : index
    %352 = memref.load %arg4[%c24] : memref<98xf32, #tpu.memory_space<smem>>
    %353 = vector.extract_strided_slice %320 {offsets = [3, 0], sizes = [16, 16], strides = [1, 1]} : vector<22x16xf32> to vector<16x16xf32>
    %354 = vector.broadcast %352 : f32 to vector<16x16xf32>
    %355 = arith.mulf %354, %353 : vector<16x16xf32>
    %356 = arith.addf %351, %355 : vector<16x16xf32>
    %c73 = arith.constant 73 : index
    %357 = memref.load %arg4[%c73] : memref<98xf32, #tpu.memory_space<smem>>
    %358 = vector.extract_strided_slice %321 {offsets = [3, 0], sizes = [16, 16], strides = [1, 1]} : vector<22x16xf32> to vector<16x16xf32>
    %359 = vector.broadcast %357 : f32 to vector<16x16xf32>
    %360 = arith.mulf %359, %358 : vector<16x16xf32>
    %361 = arith.addf %356, %360 : vector<16x16xf32>
    %c31 = arith.constant 31 : index
    %362 = memref.load %arg4[%c31] : memref<98xf32, #tpu.memory_space<smem>>
    %363 = vector.extract_strided_slice %320 {offsets = [4, 0], sizes = [16, 16], strides = [1, 1]} : vector<22x16xf32> to vector<16x16xf32>
    %364 = vector.broadcast %362 : f32 to vector<16x16xf32>
    %365 = arith.mulf %364, %363 : vector<16x16xf32>
    %366 = arith.addf %361, %365 : vector<16x16xf32>
    %c80 = arith.constant 80 : index
    %367 = memref.load %arg4[%c80] : memref<98xf32, #tpu.memory_space<smem>>
    %368 = vector.extract_strided_slice %321 {offsets = [4, 0], sizes = [16, 16], strides = [1, 1]} : vector<22x16xf32> to vector<16x16xf32>
    %369 = vector.broadcast %367 : f32 to vector<16x16xf32>
    %370 = arith.mulf %369, %368 : vector<16x16xf32>
    %371 = arith.addf %366, %370 : vector<16x16xf32>
    %c38 = arith.constant 38 : index
    %372 = memref.load %arg4[%c38] : memref<98xf32, #tpu.memory_space<smem>>
    %373 = vector.extract_strided_slice %320 {offsets = [5, 0], sizes = [16, 16], strides = [1, 1]} : vector<22x16xf32> to vector<16x16xf32>
    %374 = vector.broadcast %372 : f32 to vector<16x16xf32>
    %375 = arith.mulf %374, %373 : vector<16x16xf32>
    %376 = arith.addf %371, %375 : vector<16x16xf32>
    %c87 = arith.constant 87 : index
    %377 = memref.load %arg4[%c87] : memref<98xf32, #tpu.memory_space<smem>>
    %378 = vector.extract_strided_slice %321 {offsets = [5, 0], sizes = [16, 16], strides = [1, 1]} : vector<22x16xf32> to vector<16x16xf32>
    %379 = vector.broadcast %377 : f32 to vector<16x16xf32>
    %380 = arith.mulf %379, %378 : vector<16x16xf32>
    %381 = arith.addf %376, %380 : vector<16x16xf32>
    %c45 = arith.constant 45 : index
    %382 = memref.load %arg4[%c45] : memref<98xf32, #tpu.memory_space<smem>>
    %383 = vector.extract_strided_slice %320 {offsets = [6, 0], sizes = [16, 16], strides = [1, 1]} : vector<22x16xf32> to vector<16x16xf32>
    %384 = vector.broadcast %382 : f32 to vector<16x16xf32>
    %385 = arith.mulf %384, %383 : vector<16x16xf32>
    %386 = arith.addf %381, %385 : vector<16x16xf32>
    %c94 = arith.constant 94 : index
    %387 = memref.load %arg4[%c94] : memref<98xf32, #tpu.memory_space<smem>>
    %388 = vector.extract_strided_slice %321 {offsets = [6, 0], sizes = [16, 16], strides = [1, 1]} : vector<22x16xf32> to vector<16x16xf32>
    %389 = vector.broadcast %387 : f32 to vector<16x16xf32>
    %390 = arith.mulf %389, %388 : vector<16x16xf32>
    %391 = arith.addf %386, %390 : vector<16x16xf32>
    %392 = vector.extract_strided_slice %101 {offsets = [0, 4], sizes = [22, 16], strides = [1, 1]} : vector<22x22xf32> to vector<22x16xf32>
    %393 = vector.extract_strided_slice %102 {offsets = [0, 4], sizes = [22, 16], strides = [1, 1]} : vector<22x22xf32> to vector<22x16xf32>
    %c4_87 = arith.constant 4 : index
    %394 = memref.load %arg4[%c4_87] : memref<98xf32, #tpu.memory_space<smem>>
    %395 = vector.extract_strided_slice %392 {offsets = [0, 0], sizes = [16, 16], strides = [1, 1]} : vector<22x16xf32> to vector<16x16xf32>
    %396 = vector.broadcast %394 : f32 to vector<16x16xf32>
    %397 = arith.mulf %396, %395 : vector<16x16xf32>
    %398 = arith.addf %391, %397 : vector<16x16xf32>
    %c53 = arith.constant 53 : index
    %399 = memref.load %arg4[%c53] : memref<98xf32, #tpu.memory_space<smem>>
    %400 = vector.extract_strided_slice %393 {offsets = [0, 0], sizes = [16, 16], strides = [1, 1]} : vector<22x16xf32> to vector<16x16xf32>
    %401 = vector.broadcast %399 : f32 to vector<16x16xf32>
    %402 = arith.mulf %401, %400 : vector<16x16xf32>
    %403 = arith.addf %398, %402 : vector<16x16xf32>
    %c11_88 = arith.constant 11 : index
    %404 = memref.load %arg4[%c11_88] : memref<98xf32, #tpu.memory_space<smem>>
    %405 = vector.extract_strided_slice %392 {offsets = [1, 0], sizes = [16, 16], strides = [1, 1]} : vector<22x16xf32> to vector<16x16xf32>
    %406 = vector.broadcast %404 : f32 to vector<16x16xf32>
    %407 = arith.mulf %406, %405 : vector<16x16xf32>
    %408 = arith.addf %403, %407 : vector<16x16xf32>
    %c60 = arith.constant 60 : index
    %409 = memref.load %arg4[%c60] : memref<98xf32, #tpu.memory_space<smem>>
    %410 = vector.extract_strided_slice %393 {offsets = [1, 0], sizes = [16, 16], strides = [1, 1]} : vector<22x16xf32> to vector<16x16xf32>
    %411 = vector.broadcast %409 : f32 to vector<16x16xf32>
    %412 = arith.mulf %411, %410 : vector<16x16xf32>
    %413 = arith.addf %408, %412 : vector<16x16xf32>
    %c18_89 = arith.constant 18 : index
    %414 = memref.load %arg4[%c18_89] : memref<98xf32, #tpu.memory_space<smem>>
    %415 = vector.extract_strided_slice %392 {offsets = [2, 0], sizes = [16, 16], strides = [1, 1]} : vector<22x16xf32> to vector<16x16xf32>
    %416 = vector.broadcast %414 : f32 to vector<16x16xf32>
    %417 = arith.mulf %416, %415 : vector<16x16xf32>
    %418 = arith.addf %413, %417 : vector<16x16xf32>
    %c67 = arith.constant 67 : index
    %419 = memref.load %arg4[%c67] : memref<98xf32, #tpu.memory_space<smem>>
    %420 = vector.extract_strided_slice %393 {offsets = [2, 0], sizes = [16, 16], strides = [1, 1]} : vector<22x16xf32> to vector<16x16xf32>
    %421 = vector.broadcast %419 : f32 to vector<16x16xf32>
    %422 = arith.mulf %421, %420 : vector<16x16xf32>
    %423 = arith.addf %418, %422 : vector<16x16xf32>
    %c25 = arith.constant 25 : index
    %424 = memref.load %arg4[%c25] : memref<98xf32, #tpu.memory_space<smem>>
    %425 = vector.extract_strided_slice %392 {offsets = [3, 0], sizes = [16, 16], strides = [1, 1]} : vector<22x16xf32> to vector<16x16xf32>
    %426 = vector.broadcast %424 : f32 to vector<16x16xf32>
    %427 = arith.mulf %426, %425 : vector<16x16xf32>
    %428 = arith.addf %423, %427 : vector<16x16xf32>
    %c74 = arith.constant 74 : index
    %429 = memref.load %arg4[%c74] : memref<98xf32, #tpu.memory_space<smem>>
    %430 = vector.extract_strided_slice %393 {offsets = [3, 0], sizes = [16, 16], strides = [1, 1]} : vector<22x16xf32> to vector<16x16xf32>
    %431 = vector.broadcast %429 : f32 to vector<16x16xf32>
    %432 = arith.mulf %431, %430 : vector<16x16xf32>
    %433 = arith.addf %428, %432 : vector<16x16xf32>
    %c32 = arith.constant 32 : index
    %434 = memref.load %arg4[%c32] : memref<98xf32, #tpu.memory_space<smem>>
    %435 = vector.extract_strided_slice %392 {offsets = [4, 0], sizes = [16, 16], strides = [1, 1]} : vector<22x16xf32> to vector<16x16xf32>
    %436 = vector.broadcast %434 : f32 to vector<16x16xf32>
    %437 = arith.mulf %436, %435 : vector<16x16xf32>
    %438 = arith.addf %433, %437 : vector<16x16xf32>
    %c81 = arith.constant 81 : index
    %439 = memref.load %arg4[%c81] : memref<98xf32, #tpu.memory_space<smem>>
    %440 = vector.extract_strided_slice %393 {offsets = [4, 0], sizes = [16, 16], strides = [1, 1]} : vector<22x16xf32> to vector<16x16xf32>
    %441 = vector.broadcast %439 : f32 to vector<16x16xf32>
    %442 = arith.mulf %441, %440 : vector<16x16xf32>
    %443 = arith.addf %438, %442 : vector<16x16xf32>
    %c39 = arith.constant 39 : index
    %444 = memref.load %arg4[%c39] : memref<98xf32, #tpu.memory_space<smem>>
    %445 = vector.extract_strided_slice %392 {offsets = [5, 0], sizes = [16, 16], strides = [1, 1]} : vector<22x16xf32> to vector<16x16xf32>
    %446 = vector.broadcast %444 : f32 to vector<16x16xf32>
    %447 = arith.mulf %446, %445 : vector<16x16xf32>
    %448 = arith.addf %443, %447 : vector<16x16xf32>
    %c88 = arith.constant 88 : index
    %449 = memref.load %arg4[%c88] : memref<98xf32, #tpu.memory_space<smem>>
    %450 = vector.extract_strided_slice %393 {offsets = [5, 0], sizes = [16, 16], strides = [1, 1]} : vector<22x16xf32> to vector<16x16xf32>
    %451 = vector.broadcast %449 : f32 to vector<16x16xf32>
    %452 = arith.mulf %451, %450 : vector<16x16xf32>
    %453 = arith.addf %448, %452 : vector<16x16xf32>
    %c46 = arith.constant 46 : index
    %454 = memref.load %arg4[%c46] : memref<98xf32, #tpu.memory_space<smem>>
    %455 = vector.extract_strided_slice %392 {offsets = [6, 0], sizes = [16, 16], strides = [1, 1]} : vector<22x16xf32> to vector<16x16xf32>
    %456 = vector.broadcast %454 : f32 to vector<16x16xf32>
    %457 = arith.mulf %456, %455 : vector<16x16xf32>
    %458 = arith.addf %453, %457 : vector<16x16xf32>
    %c95 = arith.constant 95 : index
    %459 = memref.load %arg4[%c95] : memref<98xf32, #tpu.memory_space<smem>>
    %460 = vector.extract_strided_slice %393 {offsets = [6, 0], sizes = [16, 16], strides = [1, 1]} : vector<22x16xf32> to vector<16x16xf32>
    %461 = vector.broadcast %459 : f32 to vector<16x16xf32>
    %462 = arith.mulf %461, %460 : vector<16x16xf32>
    %463 = arith.addf %458, %462 : vector<16x16xf32>
    %464 = vector.extract_strided_slice %101 {offsets = [0, 5], sizes = [22, 16], strides = [1, 1]} : vector<22x22xf32> to vector<22x16xf32>
    %465 = vector.extract_strided_slice %102 {offsets = [0, 5], sizes = [22, 16], strides = [1, 1]} : vector<22x22xf32> to vector<22x16xf32>
    %c5_90 = arith.constant 5 : index
    %466 = memref.load %arg4[%c5_90] : memref<98xf32, #tpu.memory_space<smem>>
    %467 = vector.extract_strided_slice %464 {offsets = [0, 0], sizes = [16, 16], strides = [1, 1]} : vector<22x16xf32> to vector<16x16xf32>
    %468 = vector.broadcast %466 : f32 to vector<16x16xf32>
    %469 = arith.mulf %468, %467 : vector<16x16xf32>
    %470 = arith.addf %463, %469 : vector<16x16xf32>
    %c54 = arith.constant 54 : index
    %471 = memref.load %arg4[%c54] : memref<98xf32, #tpu.memory_space<smem>>
    %472 = vector.extract_strided_slice %465 {offsets = [0, 0], sizes = [16, 16], strides = [1, 1]} : vector<22x16xf32> to vector<16x16xf32>
    %473 = vector.broadcast %471 : f32 to vector<16x16xf32>
    %474 = arith.mulf %473, %472 : vector<16x16xf32>
    %475 = arith.addf %470, %474 : vector<16x16xf32>
    %c12_91 = arith.constant 12 : index
    %476 = memref.load %arg4[%c12_91] : memref<98xf32, #tpu.memory_space<smem>>
    %477 = vector.extract_strided_slice %464 {offsets = [1, 0], sizes = [16, 16], strides = [1, 1]} : vector<22x16xf32> to vector<16x16xf32>
    %478 = vector.broadcast %476 : f32 to vector<16x16xf32>
    %479 = arith.mulf %478, %477 : vector<16x16xf32>
    %480 = arith.addf %475, %479 : vector<16x16xf32>
    %c61 = arith.constant 61 : index
    %481 = memref.load %arg4[%c61] : memref<98xf32, #tpu.memory_space<smem>>
    %482 = vector.extract_strided_slice %465 {offsets = [1, 0], sizes = [16, 16], strides = [1, 1]} : vector<22x16xf32> to vector<16x16xf32>
    %483 = vector.broadcast %481 : f32 to vector<16x16xf32>
    %484 = arith.mulf %483, %482 : vector<16x16xf32>
    %485 = arith.addf %480, %484 : vector<16x16xf32>
    %c19 = arith.constant 19 : index
    %486 = memref.load %arg4[%c19] : memref<98xf32, #tpu.memory_space<smem>>
    %487 = vector.extract_strided_slice %464 {offsets = [2, 0], sizes = [16, 16], strides = [1, 1]} : vector<22x16xf32> to vector<16x16xf32>
    %488 = vector.broadcast %486 : f32 to vector<16x16xf32>
    %489 = arith.mulf %488, %487 : vector<16x16xf32>
    %490 = arith.addf %485, %489 : vector<16x16xf32>
    %c68 = arith.constant 68 : index
    %491 = memref.load %arg4[%c68] : memref<98xf32, #tpu.memory_space<smem>>
    %492 = vector.extract_strided_slice %465 {offsets = [2, 0], sizes = [16, 16], strides = [1, 1]} : vector<22x16xf32> to vector<16x16xf32>
    %493 = vector.broadcast %491 : f32 to vector<16x16xf32>
    %494 = arith.mulf %493, %492 : vector<16x16xf32>
    %495 = arith.addf %490, %494 : vector<16x16xf32>
    %c26 = arith.constant 26 : index
    %496 = memref.load %arg4[%c26] : memref<98xf32, #tpu.memory_space<smem>>
    %497 = vector.extract_strided_slice %464 {offsets = [3, 0], sizes = [16, 16], strides = [1, 1]} : vector<22x16xf32> to vector<16x16xf32>
    %498 = vector.broadcast %496 : f32 to vector<16x16xf32>
    %499 = arith.mulf %498, %497 : vector<16x16xf32>
    %500 = arith.addf %495, %499 : vector<16x16xf32>
    %c75 = arith.constant 75 : index
    %501 = memref.load %arg4[%c75] : memref<98xf32, #tpu.memory_space<smem>>
    %502 = vector.extract_strided_slice %465 {offsets = [3, 0], sizes = [16, 16], strides = [1, 1]} : vector<22x16xf32> to vector<16x16xf32>
    %503 = vector.broadcast %501 : f32 to vector<16x16xf32>
    %504 = arith.mulf %503, %502 : vector<16x16xf32>
    %505 = arith.addf %500, %504 : vector<16x16xf32>
    %c33 = arith.constant 33 : index
    %506 = memref.load %arg4[%c33] : memref<98xf32, #tpu.memory_space<smem>>
    %507 = vector.extract_strided_slice %464 {offsets = [4, 0], sizes = [16, 16], strides = [1, 1]} : vector<22x16xf32> to vector<16x16xf32>
    %508 = vector.broadcast %506 : f32 to vector<16x16xf32>
    %509 = arith.mulf %508, %507 : vector<16x16xf32>
    %510 = arith.addf %505, %509 : vector<16x16xf32>
    %c82 = arith.constant 82 : index
    %511 = memref.load %arg4[%c82] : memref<98xf32, #tpu.memory_space<smem>>
    %512 = vector.extract_strided_slice %465 {offsets = [4, 0], sizes = [16, 16], strides = [1, 1]} : vector<22x16xf32> to vector<16x16xf32>
    %513 = vector.broadcast %511 : f32 to vector<16x16xf32>
    %514 = arith.mulf %513, %512 : vector<16x16xf32>
    %515 = arith.addf %510, %514 : vector<16x16xf32>
    %c40 = arith.constant 40 : index
    %516 = memref.load %arg4[%c40] : memref<98xf32, #tpu.memory_space<smem>>
    %517 = vector.extract_strided_slice %464 {offsets = [5, 0], sizes = [16, 16], strides = [1, 1]} : vector<22x16xf32> to vector<16x16xf32>
    %518 = vector.broadcast %516 : f32 to vector<16x16xf32>
    %519 = arith.mulf %518, %517 : vector<16x16xf32>
    %520 = arith.addf %515, %519 : vector<16x16xf32>
    %c89 = arith.constant 89 : index
    %521 = memref.load %arg4[%c89] : memref<98xf32, #tpu.memory_space<smem>>
    %522 = vector.extract_strided_slice %465 {offsets = [5, 0], sizes = [16, 16], strides = [1, 1]} : vector<22x16xf32> to vector<16x16xf32>
    %523 = vector.broadcast %521 : f32 to vector<16x16xf32>
    %524 = arith.mulf %523, %522 : vector<16x16xf32>
    %525 = arith.addf %520, %524 : vector<16x16xf32>
    %c47 = arith.constant 47 : index
    %526 = memref.load %arg4[%c47] : memref<98xf32, #tpu.memory_space<smem>>
    %527 = vector.extract_strided_slice %464 {offsets = [6, 0], sizes = [16, 16], strides = [1, 1]} : vector<22x16xf32> to vector<16x16xf32>
    %528 = vector.broadcast %526 : f32 to vector<16x16xf32>
    %529 = arith.mulf %528, %527 : vector<16x16xf32>
    %530 = arith.addf %525, %529 : vector<16x16xf32>
    %c96 = arith.constant 96 : index
    %531 = memref.load %arg4[%c96] : memref<98xf32, #tpu.memory_space<smem>>
    %532 = vector.extract_strided_slice %465 {offsets = [6, 0], sizes = [16, 16], strides = [1, 1]} : vector<22x16xf32> to vector<16x16xf32>
    %533 = vector.broadcast %531 : f32 to vector<16x16xf32>
    %534 = arith.mulf %533, %532 : vector<16x16xf32>
    %535 = arith.addf %530, %534 : vector<16x16xf32>
    %536 = vector.extract_strided_slice %101 {offsets = [0, 6], sizes = [22, 16], strides = [1, 1]} : vector<22x22xf32> to vector<22x16xf32>
    %537 = vector.extract_strided_slice %102 {offsets = [0, 6], sizes = [22, 16], strides = [1, 1]} : vector<22x22xf32> to vector<22x16xf32>
    %c6_92 = arith.constant 6 : index
    %538 = memref.load %arg4[%c6_92] : memref<98xf32, #tpu.memory_space<smem>>
    %539 = vector.extract_strided_slice %536 {offsets = [0, 0], sizes = [16, 16], strides = [1, 1]} : vector<22x16xf32> to vector<16x16xf32>
    %540 = vector.broadcast %538 : f32 to vector<16x16xf32>
    %541 = arith.mulf %540, %539 : vector<16x16xf32>
    %542 = arith.addf %535, %541 : vector<16x16xf32>
    %c55 = arith.constant 55 : index
    %543 = memref.load %arg4[%c55] : memref<98xf32, #tpu.memory_space<smem>>
    %544 = vector.extract_strided_slice %537 {offsets = [0, 0], sizes = [16, 16], strides = [1, 1]} : vector<22x16xf32> to vector<16x16xf32>
    %545 = vector.broadcast %543 : f32 to vector<16x16xf32>
    %546 = arith.mulf %545, %544 : vector<16x16xf32>
    %547 = arith.addf %542, %546 : vector<16x16xf32>
    %c13_93 = arith.constant 13 : index
    %548 = memref.load %arg4[%c13_93] : memref<98xf32, #tpu.memory_space<smem>>
    %549 = vector.extract_strided_slice %536 {offsets = [1, 0], sizes = [16, 16], strides = [1, 1]} : vector<22x16xf32> to vector<16x16xf32>
    %550 = vector.broadcast %548 : f32 to vector<16x16xf32>
    %551 = arith.mulf %550, %549 : vector<16x16xf32>
    %552 = arith.addf %547, %551 : vector<16x16xf32>
    %c62 = arith.constant 62 : index
    %553 = memref.load %arg4[%c62] : memref<98xf32, #tpu.memory_space<smem>>
    %554 = vector.extract_strided_slice %537 {offsets = [1, 0], sizes = [16, 16], strides = [1, 1]} : vector<22x16xf32> to vector<16x16xf32>
    %555 = vector.broadcast %553 : f32 to vector<16x16xf32>
    %556 = arith.mulf %555, %554 : vector<16x16xf32>
    %557 = arith.addf %552, %556 : vector<16x16xf32>
    %c20 = arith.constant 20 : index
    %558 = memref.load %arg4[%c20] : memref<98xf32, #tpu.memory_space<smem>>
    %559 = vector.extract_strided_slice %536 {offsets = [2, 0], sizes = [16, 16], strides = [1, 1]} : vector<22x16xf32> to vector<16x16xf32>
    %560 = vector.broadcast %558 : f32 to vector<16x16xf32>
    %561 = arith.mulf %560, %559 : vector<16x16xf32>
    %562 = arith.addf %557, %561 : vector<16x16xf32>
    %c69 = arith.constant 69 : index
    %563 = memref.load %arg4[%c69] : memref<98xf32, #tpu.memory_space<smem>>
    %564 = vector.extract_strided_slice %537 {offsets = [2, 0], sizes = [16, 16], strides = [1, 1]} : vector<22x16xf32> to vector<16x16xf32>
    %565 = vector.broadcast %563 : f32 to vector<16x16xf32>
    %566 = arith.mulf %565, %564 : vector<16x16xf32>
    %567 = arith.addf %562, %566 : vector<16x16xf32>
    %c27 = arith.constant 27 : index
    %568 = memref.load %arg4[%c27] : memref<98xf32, #tpu.memory_space<smem>>
    %569 = vector.extract_strided_slice %536 {offsets = [3, 0], sizes = [16, 16], strides = [1, 1]} : vector<22x16xf32> to vector<16x16xf32>
    %570 = vector.broadcast %568 : f32 to vector<16x16xf32>
    %571 = arith.mulf %570, %569 : vector<16x16xf32>
    %572 = arith.addf %567, %571 : vector<16x16xf32>
    %c76 = arith.constant 76 : index
    %573 = memref.load %arg4[%c76] : memref<98xf32, #tpu.memory_space<smem>>
    %574 = vector.extract_strided_slice %537 {offsets = [3, 0], sizes = [16, 16], strides = [1, 1]} : vector<22x16xf32> to vector<16x16xf32>
    %575 = vector.broadcast %573 : f32 to vector<16x16xf32>
    %576 = arith.mulf %575, %574 : vector<16x16xf32>
    %577 = arith.addf %572, %576 : vector<16x16xf32>
    %c34 = arith.constant 34 : index
    %578 = memref.load %arg4[%c34] : memref<98xf32, #tpu.memory_space<smem>>
    %579 = vector.extract_strided_slice %536 {offsets = [4, 0], sizes = [16, 16], strides = [1, 1]} : vector<22x16xf32> to vector<16x16xf32>
    %580 = vector.broadcast %578 : f32 to vector<16x16xf32>
    %581 = arith.mulf %580, %579 : vector<16x16xf32>
    %582 = arith.addf %577, %581 : vector<16x16xf32>
    %c83 = arith.constant 83 : index
    %583 = memref.load %arg4[%c83] : memref<98xf32, #tpu.memory_space<smem>>
    %584 = vector.extract_strided_slice %537 {offsets = [4, 0], sizes = [16, 16], strides = [1, 1]} : vector<22x16xf32> to vector<16x16xf32>
    %585 = vector.broadcast %583 : f32 to vector<16x16xf32>
    %586 = arith.mulf %585, %584 : vector<16x16xf32>
    %587 = arith.addf %582, %586 : vector<16x16xf32>
    %c41 = arith.constant 41 : index
    %588 = memref.load %arg4[%c41] : memref<98xf32, #tpu.memory_space<smem>>
    %589 = vector.extract_strided_slice %536 {offsets = [5, 0], sizes = [16, 16], strides = [1, 1]} : vector<22x16xf32> to vector<16x16xf32>
    %590 = vector.broadcast %588 : f32 to vector<16x16xf32>
    %591 = arith.mulf %590, %589 : vector<16x16xf32>
    %592 = arith.addf %587, %591 : vector<16x16xf32>
    %c90 = arith.constant 90 : index
    %593 = memref.load %arg4[%c90] : memref<98xf32, #tpu.memory_space<smem>>
    %594 = vector.extract_strided_slice %537 {offsets = [5, 0], sizes = [16, 16], strides = [1, 1]} : vector<22x16xf32> to vector<16x16xf32>
    %595 = vector.broadcast %593 : f32 to vector<16x16xf32>
    %596 = arith.mulf %595, %594 : vector<16x16xf32>
    %597 = arith.addf %592, %596 : vector<16x16xf32>
    %c48 = arith.constant 48 : index
    %598 = memref.load %arg4[%c48] : memref<98xf32, #tpu.memory_space<smem>>
    %599 = vector.extract_strided_slice %536 {offsets = [6, 0], sizes = [16, 16], strides = [1, 1]} : vector<22x16xf32> to vector<16x16xf32>
    %600 = vector.broadcast %598 : f32 to vector<16x16xf32>
    %601 = arith.mulf %600, %599 : vector<16x16xf32>
    %602 = arith.addf %597, %601 : vector<16x16xf32>
    %c97 = arith.constant 97 : index
    %603 = memref.load %arg4[%c97] : memref<98xf32, #tpu.memory_space<smem>>
    %604 = vector.extract_strided_slice %537 {offsets = [6, 0], sizes = [16, 16], strides = [1, 1]} : vector<22x16xf32> to vector<16x16xf32>
    %605 = vector.broadcast %603 : f32 to vector<16x16xf32>
    %606 = arith.mulf %605, %604 : vector<16x16xf32>
    %607 = arith.addf %602, %606 : vector<16x16xf32>
    %608 = arith.negf %607 : vector<16x16xf32>
    %609 = math.exp %608 : vector<16x16xf32>
    %cst_94 = arith.constant 1.000000e+00 : f32
    %610 = vector.broadcast %cst_94 : f32 to vector<16x16xf32>
    %611 = arith.addf %610, %609 : vector<16x16xf32>
    %612 = arith.divf %610, %611 : vector<16x16xf32>
    %613 = vector.extract_strided_slice %612 {offsets = [0, 0], sizes = [1, 16], strides = [1, 1]} : vector<16x16xf32> to vector<1x16xf32>
    %c0_95 = arith.constant 0 : index
    %c0_96 = arith.constant 0 : index
    %614 = vector.load %arg8[%c0_95, %c0_96] : memref<1x256xf32, #tpu.memory_space<vmem>>, vector<1x16xf32>
    tpu.vector_store %arg8[%c0_95, %c0_96], %613 {strides = array<i32>} : memref<1x256xf32, #tpu.memory_space<vmem>>, vector<1x16xf32>,
    %615 = vector.extract_strided_slice %612 {offsets = [1, 0], sizes = [1, 16], strides = [1, 1]} : vector<16x16xf32> to vector<1x16xf32>
    %c0_97 = arith.constant 0 : index
    %c16_98 = arith.constant 16 : index
    %616 = vector.load %arg8[%c0_97, %c16_98] : memref<1x256xf32, #tpu.memory_space<vmem>>, vector<1x16xf32>
    tpu.vector_store %arg8[%c0_97, %c16_98], %615 {strides = array<i32>} : memref<1x256xf32, #tpu.memory_space<vmem>>, vector<1x16xf32>,
    %617 = vector.extract_strided_slice %612 {offsets = [2, 0], sizes = [1, 16], strides = [1, 1]} : vector<16x16xf32> to vector<1x16xf32>
    %c0_99 = arith.constant 0 : index
    %c32_100 = arith.constant 32 : index
    %618 = vector.load %arg8[%c0_99, %c32_100] : memref<1x256xf32, #tpu.memory_space<vmem>>, vector<1x16xf32>
    tpu.vector_store %arg8[%c0_99, %c32_100], %617 {strides = array<i32>} : memref<1x256xf32, #tpu.memory_space<vmem>>, vector<1x16xf32>,
    %619 = vector.extract_strided_slice %612 {offsets = [3, 0], sizes = [1, 16], strides = [1, 1]} : vector<16x16xf32> to vector<1x16xf32>
    %c0_101 = arith.constant 0 : index
    %c48_102 = arith.constant 48 : index
    %620 = vector.load %arg8[%c0_101, %c48_102] : memref<1x256xf32, #tpu.memory_space<vmem>>, vector<1x16xf32>
    tpu.vector_store %arg8[%c0_101, %c48_102], %619 {strides = array<i32>} : memref<1x256xf32, #tpu.memory_space<vmem>>, vector<1x16xf32>,
    %621 = vector.extract_strided_slice %612 {offsets = [4, 0], sizes = [1, 16], strides = [1, 1]} : vector<16x16xf32> to vector<1x16xf32>
    %c0_103 = arith.constant 0 : index
    %c64_104 = arith.constant 64 : index
    %622 = vector.load %arg8[%c0_103, %c64_104] : memref<1x256xf32, #tpu.memory_space<vmem>>, vector<1x16xf32>
    tpu.vector_store %arg8[%c0_103, %c64_104], %621 {strides = array<i32>} : memref<1x256xf32, #tpu.memory_space<vmem>>, vector<1x16xf32>,
    %623 = vector.extract_strided_slice %612 {offsets = [5, 0], sizes = [1, 16], strides = [1, 1]} : vector<16x16xf32> to vector<1x16xf32>
    %c0_105 = arith.constant 0 : index
    %c80_106 = arith.constant 80 : index
    %624 = vector.load %arg8[%c0_105, %c80_106] : memref<1x256xf32, #tpu.memory_space<vmem>>, vector<1x16xf32>
    tpu.vector_store %arg8[%c0_105, %c80_106], %623 {strides = array<i32>} : memref<1x256xf32, #tpu.memory_space<vmem>>, vector<1x16xf32>,
    %625 = vector.extract_strided_slice %612 {offsets = [6, 0], sizes = [1, 16], strides = [1, 1]} : vector<16x16xf32> to vector<1x16xf32>
    %c0_107 = arith.constant 0 : index
    %c96_108 = arith.constant 96 : index
    %626 = vector.load %arg8[%c0_107, %c96_108] : memref<1x256xf32, #tpu.memory_space<vmem>>, vector<1x16xf32>
    tpu.vector_store %arg8[%c0_107, %c96_108], %625 {strides = array<i32>} : memref<1x256xf32, #tpu.memory_space<vmem>>, vector<1x16xf32>,
    %627 = vector.extract_strided_slice %612 {offsets = [7, 0], sizes = [1, 16], strides = [1, 1]} : vector<16x16xf32> to vector<1x16xf32>
    %c0_109 = arith.constant 0 : index
    %c112 = arith.constant 112 : index
    %628 = vector.load %arg8[%c0_109, %c112] : memref<1x256xf32, #tpu.memory_space<vmem>>, vector<1x16xf32>
    tpu.vector_store %arg8[%c0_109, %c112], %627 {strides = array<i32>} : memref<1x256xf32, #tpu.memory_space<vmem>>, vector<1x16xf32>,
    %629 = vector.extract_strided_slice %612 {offsets = [8, 0], sizes = [1, 16], strides = [1, 1]} : vector<16x16xf32> to vector<1x16xf32>
    %c0_110 = arith.constant 0 : index
    %c128 = arith.constant 128 : index
    %630 = vector.load %arg8[%c0_110, %c128] : memref<1x256xf32, #tpu.memory_space<vmem>>, vector<1x16xf32>
    tpu.vector_store %arg8[%c0_110, %c128], %629 {strides = array<i32>} : memref<1x256xf32, #tpu.memory_space<vmem>>, vector<1x16xf32>,
    %631 = vector.extract_strided_slice %612 {offsets = [9, 0], sizes = [1, 16], strides = [1, 1]} : vector<16x16xf32> to vector<1x16xf32>
    %c0_111 = arith.constant 0 : index
    %c144 = arith.constant 144 : index
    %632 = vector.load %arg8[%c0_111, %c144] : memref<1x256xf32, #tpu.memory_space<vmem>>, vector<1x16xf32>
    tpu.vector_store %arg8[%c0_111, %c144], %631 {strides = array<i32>} : memref<1x256xf32, #tpu.memory_space<vmem>>, vector<1x16xf32>,
    %633 = vector.extract_strided_slice %612 {offsets = [10, 0], sizes = [1, 16], strides = [1, 1]} : vector<16x16xf32> to vector<1x16xf32>
    %c0_112 = arith.constant 0 : index
    %c160 = arith.constant 160 : index
    %634 = vector.load %arg8[%c0_112, %c160] : memref<1x256xf32, #tpu.memory_space<vmem>>, vector<1x16xf32>
    tpu.vector_store %arg8[%c0_112, %c160], %633 {strides = array<i32>} : memref<1x256xf32, #tpu.memory_space<vmem>>, vector<1x16xf32>,
    %635 = vector.extract_strided_slice %612 {offsets = [11, 0], sizes = [1, 16], strides = [1, 1]} : vector<16x16xf32> to vector<1x16xf32>
    %c0_113 = arith.constant 0 : index
    %c176 = arith.constant 176 : index
    %636 = vector.load %arg8[%c0_113, %c176] : memref<1x256xf32, #tpu.memory_space<vmem>>, vector<1x16xf32>
    tpu.vector_store %arg8[%c0_113, %c176], %635 {strides = array<i32>} : memref<1x256xf32, #tpu.memory_space<vmem>>, vector<1x16xf32>,
    %637 = vector.extract_strided_slice %612 {offsets = [12, 0], sizes = [1, 16], strides = [1, 1]} : vector<16x16xf32> to vector<1x16xf32>
    %c0_114 = arith.constant 0 : index
    %c192 = arith.constant 192 : index
    %638 = vector.load %arg8[%c0_114, %c192] : memref<1x256xf32, #tpu.memory_space<vmem>>, vector<1x16xf32>
    tpu.vector_store %arg8[%c0_114, %c192], %637 {strides = array<i32>} : memref<1x256xf32, #tpu.memory_space<vmem>>, vector<1x16xf32>,
    %639 = vector.extract_strided_slice %612 {offsets = [13, 0], sizes = [1, 16], strides = [1, 1]} : vector<16x16xf32> to vector<1x16xf32>
    %c0_115 = arith.constant 0 : index
    %c208 = arith.constant 208 : index
    %640 = vector.load %arg8[%c0_115, %c208] : memref<1x256xf32, #tpu.memory_space<vmem>>, vector<1x16xf32>
    tpu.vector_store %arg8[%c0_115, %c208], %639 {strides = array<i32>} : memref<1x256xf32, #tpu.memory_space<vmem>>, vector<1x16xf32>,
    %641 = vector.extract_strided_slice %612 {offsets = [14, 0], sizes = [1, 16], strides = [1, 1]} : vector<16x16xf32> to vector<1x16xf32>
    %c0_116 = arith.constant 0 : index
    %c224 = arith.constant 224 : index
    %642 = vector.load %arg8[%c0_116, %c224] : memref<1x256xf32, #tpu.memory_space<vmem>>, vector<1x16xf32>
    tpu.vector_store %arg8[%c0_116, %c224], %641 {strides = array<i32>} : memref<1x256xf32, #tpu.memory_space<vmem>>, vector<1x16xf32>,
    %643 = vector.extract_strided_slice %612 {offsets = [15, 0], sizes = [1, 16], strides = [1, 1]} : vector<16x16xf32> to vector<1x16xf32>
    %c0_117 = arith.constant 0 : index
    %c240 = arith.constant 240 : index
    %644 = vector.load %arg8[%c0_117, %c240] : memref<1x256xf32, #tpu.memory_space<vmem>>, vector<1x16xf32>
    tpu.vector_store %arg8[%c0_117, %c240], %643 {strides = array<i32>} : memref<1x256xf32, #tpu.memory_space<vmem>>, vector<1x16xf32>,
    %c0_118 = arith.constant 0 : index
    %c0_119 = arith.constant 0 : index
    %645 = vector.load %arg8[%c0_118, %c0_119] : memref<1x256xf32, #tpu.memory_space<vmem>>, vector<1x256xf32>
    %646 = vector.broadcast %26 : vector<8x1xf32> to vector<8x256xf32>
    %647 = arith.mulf %28, %646 : vector<8x256xf32>
    %648 = vector.broadcast %645 : vector<1x256xf32> to vector<8x256xf32>
    %649 = arith.mulf %647, %648 : vector<8x256xf32>
    %c0_120 = arith.constant 0 : index
    %c0_121 = arith.constant 0 : index
    %c0_122 = arith.constant 0 : index
    %650 = vector.load %arg5[%c0_120, %c0_121, %c0_122] : memref<1x8x256xf32, #tpu.memory_space<vmem>>, vector<1x8x256xf32>
    %651 = vector.shape_cast %650 : vector<1x8x256xf32> to vector<8x256xf32>
    %652 = vector.shape_cast %649 : vector<8x256xf32> to vector<1x8x256xf32>
    tpu.vector_store %arg5[%c0_120, %c0_121, %c0_122], %652 {strides = array<i32>} : memref<1x8x256xf32, #tpu.memory_space<vmem>>, vector<1x8x256xf32>,
    return
  }
  func.func @transform_0(%arg0: i32) -> (i32, i32, i32) {
    %c0_i32 = arith.constant 0 : i32
    %c0_i32_0 = arith.constant 0 : i32
    %c0_i32_1 = arith.constant 0 : i32
    return %arg0, %c0_i32, %c0_i32_0 : i32, i32, i32
  }
  func.func @transform_1(%arg0: i32) -> (i32, i32) {
    %c0_i32 = arith.constant 0 : i32
    %c0_i32_0 = arith.constant 0 : i32
    %c0_i32_1 = arith.constant 0 : i32
    return %c0_i32, %c0_i32_0 : i32, i32
  }
  func.func @transform_2(%arg0: i32) -> (i32, i32) {
    %c0_i32 = arith.constant 0 : i32
    %c0_i32_0 = arith.constant 0 : i32
    %c0_i32_1 = arith.constant 0 : i32
    return %c0_i32, %c0_i32_0 : i32, i32
  }
  func.func @transform_3(%arg0: i32) -> i32 {
    %c0_i32 = arith.constant 0 : i32
    %c0_i32_0 = arith.constant 0 : i32
    return %c0_i32 : i32
  }
  func.func @transform_4(%arg0: i32) -> (i32, i32, i32) {
    %c0_i32 = arith.constant 0 : i32
    %c0_i32_0 = arith.constant 0 : i32
    %c0_i32_1 = arith.constant 0 : i32
    return %arg0, %c0_i32, %c0_i32_0 : i32, i32, i32
  }
}

</mosaic_0001>

<llo_original>
// kernel: tpu_custom_call.1
$region0: #{tpu_custom_call.1}
  #allocation0 [shape = 'u32[]', space=smem, size = 0x4, offset = 0x4, fixed_abs, tag = 'smem constant byte address 0x4 - core index']
  #allocation1 [shape = 'u32[144,128]{1,0:T(1,128)}', space=vmem, size = 0x12000, scoped, tag = 'internal scratch']
  #allocation2 [shape = 'f32[22,22]{1,0:T(8,128)}', space=vmem, size = 0x3000, scoped, tag = 'scratch operand']
  #allocation3 [shape = 'f32[22,22]{1,0:T(8,128)}', space=vmem, size = 0x3000, scoped, tag = 'scratch operand']
  #allocation4 [shape = 'f32[1,256]{1,0:T(1,128)}', space=vmem, size = 0x400, scoped, tag = 'scratch operand']
  %s0 = inlined_call_operand.hbm [shape: f32[2,8,256], index: 0, kind: input, shape index: {}]
  %s1 = inlined_call_operand.vmem [shape: f32[2,8], index: 1, kind: input, shape index: {}]
  %s2 = inlined_call_operand.vmem [shape: f32[8,2], index: 2, kind: input, shape index: {}]
  %s3 = inlined_call_operand.vmem [shape: f32[98], index: 3, kind: input, shape index: {}]
  %s4 = inlined_call_operand.hbm [shape: f32[2,8,256], index: 4, kind: output, shape index: {}]
  %s5 = sld [smem:[#allocation0]]
  $region57: #{tpu_custom_call.1} parent=0
    _
  %s7 = ssub.s32 1, %s5
  %s8 = scalar_select 0, %s7, %s5
  $region1: #{tpu_custom_call.1} parent=0
    #allocation5 [shape = 'u8[16384]{0}', space=vmem, size = 0x4000, scoped, tag = 'input window, operand 0']
    #allocation6 [shape = 's32[2]{0}', space=sflag, size = 0x8, scoped, tag = 'scoped memory for tpu_custom_call.1']
    #allocation7 [shape = 's32[2]{0}', space=sflag, size = 0x8, scoped, tag = 'scoped memory for tpu_custom_call.1']
    #allocation8 [shape = 's32[2]{0}', space=sflag, size = 0x8, scoped, tag = 'scoped memory for tpu_custom_call.1']
    #allocation9 [shape = 'u8[512]{0}', space=smem, size = 0x200, scoped, tag = 'input window, operand 3, single buffered']
    #allocation10 [shape = 'u8[16384]{0}', space=vmem, size = 0x4000, scoped, tag = 'output window, operand 0']
    %9 = vsyncpa [#allocation6], 0
    %s10 = scalar_lea.sflag [#allocation6], 1
    %11 = vsyncpa %s10, 0
    %12 = vsyncpa [#allocation8], 0
    %13 = vsyncpa [#allocation7], 0
    %s14 = scalar_lea.sflag [#allocation7], 1
    %15 = vsyncpa %s14, 0
    loop: start=0, step=1, limit=4
    $region2: #{tpu_custom_call.1} parent=1 // loop_pre_header
      _
    $region3: #{tpu_custom_call.1} parent=1 // loop_header
      %s17 = sphi 0, %s21
      %p18 = scmp.ge.s32.totalorder %s17, 4
      %s27 = sphi 0, %s29
      %s30 = sphi 0, %s27
      %s31 = sphi 0, %s30
      %s47 = sphi 0, %s31
      %s51 = sphi 0, %s51
      %s53 = sphi 0, %s51
      %s54 = sphi 0, %s53
      %s68 = sphi 0, %s54
      %s72 = sphi 0, %s72
      %s74 = sphi 0, %s72
      %s75 = sphi 0, %s74
      %s89 = sphi 0, %s75
      %s93 = sphi 0, %s93
      %s95 = sphi 0, %s93
      %s96 = sphi 0, %s95
      %s110 = sphi 0, %s96
      %s116 = sphi 0, %s118
      %s119 = sphi 0, %s116
      %s120 = sphi 0, %s119
      %s136 = sphi 0, %s120
    $region4: #{tpu_custom_call.1} parent=1 // loop_header_branch
      %20 = sbr.rel (%p18) target = $region8
    $region5: #{tpu_custom_call.1} parent=1 // loop_body
      %s22 = ssub.s32 %s17, 1
      %s23 = ssub.s32 %s17, 2
      %s24 = sadd.s32 %s17, 1
      %s25 = ssub.s32 %s17, %s24
      %p26 = scmp.eq.s32.totalorder %s25, 0
      %s28 = sadd.s32 %s27, 1
      %s29 = scalar_select %p26, %s27, %s28
      %p32 = pneg %p26
      %p33 = scmp.eq.s32.totalorder %s17, 1
      %p34 = por %p32, %p33
      %p35 = scmp.ne.s32.totalorder %s27, %s30
      %p36 = scmp.eq.s32.totalorder %s17, 0
      %p37 = por %p35, %p36
      %p38 = scmp.ne.s32.totalorder %s27, %s30
      %p39 = scmp.eq.s32.totalorder %s22, 1
      %p40 = por %p38, %p39
      %p41 = scmp.ne.s32.totalorder %s30, %s31
      %p42 = scmp.eq.s32.totalorder %s22, 0
      %p43 = por %p41, %p42
      %p44 = scmp.ne.s32.totalorder %s30, %s31
      %p45 = scmp.eq.s32.totalorder %s23, 1
      %p46 = por %p44, %p45
      %p48 = scmp.ne.s32.totalorder %s31, %s47
      %p49 = scmp.eq.s32.totalorder %s23, 0
      %p50 = por %p48, %p49
      %s52 = sadd.s32 %s51, 1
      %p55 = scmp.eq.s32.totalorder %s17, 1
      %p56 = scmp.ne.s32.totalorder %s51, %s53
      %p57 = scmp.eq.s32.totalorder %s17, 0
      %p58 = por %p56, %p57
      %p59 = scmp.ne.s32.totalorder %s51, %s53
      %p60 = scmp.eq.s32.totalorder %s22, 1
      %p61 = por %p59, %p60
      %p62 = scmp.ne.s32.totalorder %s53, %s54
      %p63 = scmp.eq.s32.totalorder %s22, 0
      %p64 = por %p62, %p63
      %p65 = scmp.ne.s32.totalorder %s53, %s54
      %p66 = scmp.eq.s32.totalorder %s23, 1
      %p67 = por %p65, %p66
      %p69 = scmp.ne.s32.totalorder %s54, %s68
      %p70 = scmp.eq.s32.totalorder %s23, 0
      %p71 = por %p69, %p70
      %s73 = sadd.s32 %s72, 1
      %p76 = scmp.eq.s32.totalorder %s17, 1
      %p77 = scmp.ne.s32.totalorder %s72, %s74
      %p78 = scmp.eq.s32.totalorder %s17, 0
      %p79 = por %p77, %p78
      %p80 = scmp.ne.s32.totalorder %s72, %s74
      %p81 = scmp.eq.s32.totalorder %s22, 1
      %p82 = por %p80, %p81
      %p83 = scmp.ne.s32.totalorder %s74, %s75
      %p84 = scmp.eq.s32.totalorder %s22, 0
      %p85 = por %p83, %p84
      %p86 = scmp.ne.s32.totalorder %s74, %s75
      %p87 = scmp.eq.s32.totalorder %s23, 1
      %p88 = por %p86, %p87
      %p90 = scmp.ne.s32.totalorder %s75, %s89
      %p91 = scmp.eq.s32.totalorder %s23, 0
      %p92 = por %p90, %p91
      %s94 = sadd.s32 %s93, 1
      %p97 = scmp.eq.s32.totalorder %s17, 1
      %p98 = scmp.ne.s32.totalorder %s93, %s95
      %p99 = scmp.eq.s32.totalorder %s17, 0
      %p100 = por %p98, %p99
      %p101 = scmp.ne.s32.totalorder %s93, %s95
      %p102 = scmp.eq.s32.totalorder %s22, 1
      %p103 = por %p101, %p102
      %p104 = scmp.ne.s32.totalorder %s95, %s96
      %p105 = scmp.eq.s32.totalorder %s22, 0
      %p106 = por %p104, %p105
      %p107 = scmp.ne.s32.totalorder %s95, %s96
      %p108 = scmp.eq.s32.totalorder %s23, 1
      %p109 = por %p107, %p108
      %p111 = scmp.ne.s32.totalorder %s96, %s110
      %p112 = scmp.eq.s32.totalorder %s23, 0
      %p113 = por %p111, %p112
      %s114 = ssub.s32 %s17, %s24
      %p115 = scmp.eq.s32.totalorder %s114, 0
      %s117 = sadd.s32 %s116, 1
      %s118 = scalar_select %p115, %s116, %s117
      %p121 = pneg %p115
      %p122 = scmp.eq.s32.totalorder %s17, 1
      %p123 = por %p121, %p122
      %p124 = scmp.ne.s32.totalorder %s116, %s119
      %p125 = scmp.eq.s32.totalorder %s17, 0
      %p126 = por %p124, %p125
      %p127 = scmp.ne.s32.totalorder %s116, %s119
      %p128 = scmp.eq.s32.totalorder %s22, 1
      %p129 = por %p127, %p128
      %p130 = scmp.ne.s32.totalorder %s119, %s120
      %p131 = scmp.eq.s32.totalorder %s22, 0
      %p132 = por %p130, %p131
      %p133 = scmp.ne.s32.totalorder %s119, %s120
      %p134 = scmp.eq.s32.totalorder %s23, 1
      %p135 = por %p133, %p134
      %p137 = scmp.ne.s32.totalorder %s120, %s136
      %p138 = scmp.eq.s32.totalorder %s23, 0
      %p139 = por %p137, %p138
      %p140 = scmp.le.s32.totalorder 1, %s17
      %p141 = scmp.lt.s32.totalorder %s17, 3
      %p142 = pnand %p140, %p141
      %p143 = pneg %p142
      // Predicated region
      $region9: #{tpu_custom_call.1} parent=5 // pred_check
        _
      $region10: #{tpu_custom_call.1} parent=5 // pred_check_branch
        %145 = sbr.rel (%p142) target = $region12
      $region11: #{tpu_custom_call.1} parent=5 // pred_region
        %s146 = ssub.s32 %s17, 1
        // Predicated region
        $region13: #{tpu_custom_call.1} parent=11 // pred_check
          %p147 = pneg %p64
        $region14: #{tpu_custom_call.1} parent=11 // pred_check_branch
          %149 = sbr.rel (%p147) target = $region16
        $region15: #{tpu_custom_call.1} parent=11 // pred_region
          _
        $region16: #{tpu_custom_call.1} parent=11 // pred_fallthru
          _
        // Predicated region
        $region17: #{tpu_custom_call.1} parent=11 // pred_check
          %p150 = pneg %p85
        $region18: #{tpu_custom_call.1} parent=11 // pred_check_branch
          %152 = sbr.rel (%p150) target = $region20
        $region19: #{tpu_custom_call.1} parent=11 // pred_region
          _
        $region20: #{tpu_custom_call.1} parent=11 // pred_fallthru
          _
        // Predicated region
        $region21: #{tpu_custom_call.1} parent=11 // pred_check
          %p153 = pneg %p106
        $region22: #{tpu_custom_call.1} parent=11 // pred_check_branch
          %155 = sbr.rel (%p153) target = $region24
        $region23: #{tpu_custom_call.1} parent=11 // pred_region
          %s157 = ssub.s32 16, 16
          %158 = vsyncadd [#allocation8], %s157
          %s160 = sshll.u32 %s3, 4
          %s161 = int_to_ptr.vmem [resolvable:$true] %s160
          %163 = dma.vmem_to_smem %s161, 16, [#allocation9], [#allocation8]
        $region24: #{tpu_custom_call.1} parent=11 // pred_fallthru
          _
      $region12: #{tpu_custom_call.1} parent=5 // pred_fallthru
        _
      %p164 = scmp.lt.s32.totalorder %s17, 2
      // Predicated region
      $region25: #{tpu_custom_call.1} parent=5 // pred_check
        %p165 = pneg %p164
      $region26: #{tpu_custom_call.1} parent=5 // pred_check_branch
        %167 = sbr.rel (%p165) target = $region28
      $region27: #{tpu_custom_call.1} parent=5 // pred_region
        // Predicated region
        $region29: #{tpu_custom_call.1} parent=27 // pred_check
          %p168 = pneg %p37
        $region30: #{tpu_custom_call.1} parent=27 // pred_check_branch
          %170 = sbr.rel (%p168) target = $region32
        $region31: #{tpu_custom_call.1} parent=27 // pred_region
          %s171 = sand.u32 %s27, 1
          %s172 = scalar_lea.sflag [#allocation6], %s171
          %s173 = sand.u32 %s27, 1
          %s174 = smul.addr %s173, 16
          %s175 = scalar_lea.vmem [#allocation5], %s174
          %s177 = ssub.s32 256, 256
          %178 = vsyncadd %s172, %s177
          %s179 = smul.addr %s17, 2
          %s180 = smul.addr %s179, 128
          %s181 = scalar_lea.hbm %s0, %s180
          %s183 = sshll.u32 %s175, 4
          %s184 = int_to_ptr.vmem [resolvable:$true] %s183
          %186 = dma.hbm_to_vmem [thread:$0]  %s181, 256, %s184, %s172
        $region32: #{tpu_custom_call.1} parent=27 // pred_fallthru
          _
      $region28: #{tpu_custom_call.1} parent=5 // pred_fallthru
        _
      %p187 = scmp.le.s32.totalorder 1, %s17
      %p188 = scmp.lt.s32.totalorder %s17, 3
      %p189 = pnand %p187, %p188
      %p190 = pneg %p189
      // Predicated region
      $region33: #{tpu_custom_call.1} parent=5 // pred_check
        _
      $region34: #{tpu_custom_call.1} parent=5 // pred_check_branch
        %192 = sbr.rel (%p189) target = $region36
      $region35: #{tpu_custom_call.1} parent=5 // pred_region
        %s193 = ssub.s32 %s17, 1
        %s194 = sand.u32 %s30, 1
        %s195 = scalar_lea.sflag [#allocation6], %s194
        %s196 = sand.u32 %s30, 1
        %s197 = smul.addr %s196, 16
        %s198 = scalar_lea.vmem [#allocation5], %s197
        // Predicated region
        $region37: #{tpu_custom_call.1} parent=35 // pred_check
          %p199 = pneg %p43
        $region38: #{tpu_custom_call.1} parent=35 // pred_check_branch
          %201 = sbr.rel (%p199) target = $region40
        $region39: #{tpu_custom_call.1} parent=35 // pred_region
          %202 = dma.done %s195, 256
        $region40: #{tpu_custom_call.1} parent=35 // pred_fallthru
          _
        // Predicated region
        $region41: #{tpu_custom_call.1} parent=35 // pred_check
          %p203 = pneg %p106
        $region42: #{tpu_custom_call.1} parent=35 // pred_check_branch
          %205 = sbr.rel (%p203) target = $region44
        $region43: #{tpu_custom_call.1} parent=35 // pred_region
          %206 = dma.done [#allocation8], 16
        $region44: #{tpu_custom_call.1} parent=35 // pred_fallthru
          _
        %207 = sfence
        %s208 = sand.u32 %s30, 1
        %s209 = scalar_lea.sflag [#allocation6], %s208
        %s210 = sand.u32 %s30, 1
        %s211 = smul.addr %s210, 16
        %s212 = scalar_lea.vmem [#allocation5], %s211
        %p213 = pneg %p43
        %p214 = pneg %p40
        %p215 = pneg %p64
        %p216 = pneg %p61
        %p217 = pneg %p85
        %p218 = pneg %p82
        %p219 = pneg %p106
        %p220 = pneg %p103
        %p221 = pneg %p132
        %p222 = pneg %p129
        %s223 = sand.u32 %s119, 1
        %s224 = scalar_lea.sflag [#allocation7], %s223
        %s225 = sand.u32 %s119, 1
        %s226 = smul.addr %s225, 16
        %s227 = scalar_lea.vmem [#allocation10], %s226
        %vm228 = vcmask 179200
        %229 = vst.msk [vmem:[#allocation2] sm:$0xff] %vm228, 0.0
        %230 = vst.msk [vmem:[#allocation2 + $0x8] sm:$0xff] %vm228, 0.0
        %vm231 = vcmask 177152
        %232 = vst.msk [vmem:[#allocation2 + $0x10] sm:$0x3f] %vm231, 0.0
        %233 = vst.msk [vmem:[#allocation3] sm:$0xff] %vm228, 0.0
        %234 = vst.msk [vmem:[#allocation3 + $0x8] sm:$0xff] %vm228, 0.0
        %235 = vst.msk [vmem:[#allocation3 + $0x10] sm:$0x3f] %vm231, 0.0
        %v236 = vld [vmem:[%s198] sm:$0xff]
        %v237 = vld [vmem:[%s198 + $0x8] sm:$0xff]
        %v238 = vmax.f32 %v236, %v237
        %239 = vmax.xlane.f32.xlu0 %v238
        %v240 = vpop.xlane.xlu0 %239
        %v241 = vadd.f32 %v236, %v237
        %242 = vadd.xlane.f32.xlu0 %v241
        %v243 = vpop.xlane.xlu0 %242
        %v244 = vmul.f32 %v243, 0.00390625
        %vm245 = vcmask 7168
        %v246 = vsel %vm245, %v240, %v244
        %v247 = vld [vmem:[%s1] sm:$0x3]
        %vm248 = vcmask 64512
        %v250 = vsel %vm248, %v247, 0
        %252 = vmatprep.subr.mxu0 0.0
        %253 = vmatpush1.msra.mxu0 0.0
        %254 = vmatprep.subr.mxu0 0.0
        %255 = vmatpush1.msra.mxu0 0.0
        %256 = vmatprep.subr.mxu0 0.0
        %257 = vmatpush1.msra.mxu0 0.0
        %258 = vmatprep.subr.mxu0 0.0
        %259 = vmatpush1.msra.mxu0 0.0
        %260 = vmatprep.subr.mxu0 0.0
        %261 = vmatpush1.msra.mxu0 0.0
        %262 = vmatprep.subr.mxu0 0.0
        %263 = vmatpush1.msra.mxu0 0.0
        %264 = vmatprep.subr.mxu0 0.0
        %265 = vmatpush1.msra.mxu0 0.0
        %266 = vmatprep.subr.mxu0 0.0
        %267 = vmatpush1.msra.mxu0 0.0
        %268 = vmatprep.subr.mxu0 0.0
        %269 = vmatpush1.msra.mxu0 0.0
        %270 = vmatprep.subr.mxu0 0.0
        %271 = vmatpush1.msra.mxu0 0.0
        %272 = vmatprep.subr.mxu0 0.0
        %273 = vmatpush1.msra.mxu0 0.0
        %274 = vmatprep.subr.mxu0 0.0
        %275 = vmatpush1.msra.mxu0 0.0
        %276 = vmatprep.subr.mxu0 0.0
        %277 = vmatpush1.msra.mxu0 0.0
        %278 = vmatprep.subr.mxu0 0.0
        %279 = vmatpush1.msra.mxu0 0.0
        %280 = vmatprep.subr.mxu0 0.0
        %281 = vmatpush1.msra.mxu0 0.0
        %282 = vmatprep.subr.mxu0 0.0
        %283 = vmatpush1.msra.mxu0 %v246
        %284 = vmatprep.subr.mxu0 0.0
        %285 = vmatpush2.msra.mxu0 0.0
        %286 = vmatprep.subr.mxu0 0.0
        %287 = vmatpush2.msra.mxu0 0.0
        %288 = vmatprep.subr.mxu0 0.0
        %289 = vmatpush2.msra.mxu0 0.0
        %290 = vmatprep.subr.mxu0 0.0
        %291 = vmatpush2.msra.mxu0 0.0
        %292 = vmatprep.subr.mxu0 0.0
        %293 = vmatpush2.msra.mxu0 0.0
        %294 = vmatprep.subr.mxu0 0.0
        %295 = vmatpush2.msra.mxu0 0.0
        %296 = vmatprep.subr.mxu0 0.0
        %297 = vmatpush2.msra.mxu0 0.0
        %298 = vmatprep.subr.mxu0 0.0
        %299 = vmatpush2.msra.mxu0 0.0
        %300 = vmatprep.subr.mxu0 0.0
        %301 = vmatpush2.msra.mxu0 0.0
        %302 = vmatprep.subr.mxu0 0.0
        %303 = vmatpush2.msra.mxu0 0.0
        %304 = vmatprep.subr.mxu0 0.0
        %305 = vmatpush2.msra.mxu0 0.0
        %306 = vmatprep.subr.mxu0 0.0
        %307 = vmatpush2.msra.mxu0 0.0
        %308 = vmatprep.subr.mxu0 0.0
        %309 = vmatpush2.msra.mxu0 0.0
        %310 = vmatprep.subr.mxu0 0.0
        %311 = vmatpush2.msra.mxu0 0.0
        %312 = vmatprep.subr.mxu0 0.0
        %313 = vmatpush2.msra.mxu0 0.0
        %314 = vmatprep.subr.mxu0 0.0
        %315 = vmatpush2.msra.mxu0 0.0
        %316 = vmatprep.mubr.f32.mxu0 0.0
        %317 = vmatmul.mubr.f32.gmra.mxu0 %v250
        %v318 = vpop.f32.mrf.mxu0
        %v319 = vadd.f32 0.0, %v318
        %v320 = vpop.f32.mrf.mxu0
        %321 = vdwg.mxu0
        %v322 = vmax.f32 %v319, 0.0
        %v323 = vld [vmem:[%s2] sm:$0xff]
        %vm324 = vcmask 15360
        %v326 = vsel %vm324, %v323, 0
        %vm328 = vcmask 1041408
        %v330 = vsel %vm328, %v322, 0
        %332 = vmatprep.subr.mxu0 0.0
        %333 = vmatpush1.msra.mxu0 0.0
        %334 = vmatprep.subr.mxu0 0.0
        %335 = vmatpush1.msra.mxu0 0.0
        %336 = vmatprep.subr.mxu0 0.0
        %337 = vmatpush1.msra.mxu0 0.0
        %338 = vmatprep.subr.mxu0 0.0
        %339 = vmatpush1.msra.mxu0 0.0
        %340 = vmatprep.subr.mxu0 0.0
        %341 = vmatpush1.msra.mxu0 0.0
        %342 = vmatprep.subr.mxu0 0.0
        %343 = vmatpush1.msra.mxu0 0.0
        %344 = vmatprep.subr.mxu0 0.0
        %345 = vmatpush1.msra.mxu0 0.0
        %346 = vmatprep.subr.mxu0 0.0
        %347 = vmatpush1.msra.mxu0 0.0
        %348 = vmatprep.subr.mxu0 0.0
        %349 = vmatpush1.msra.mxu0 0.0
        %350 = vmatprep.subr.mxu0 0.0
        %351 = vmatpush1.msra.mxu0 0.0
        %352 = vmatprep.subr.mxu0 0.0
        %353 = vmatpush1.msra.mxu0 0.0
        %354 = vmatprep.subr.mxu0 0.0
        %355 = vmatpush1.msra.mxu0 0.0
        %356 = vmatprep.subr.mxu0 0.0
        %357 = vmatpush1.msra.mxu0 0.0
        %358 = vmatprep.subr.mxu0 0.0
        %359 = vmatpush1.msra.mxu0 0.0
        %360 = vmatprep.subr.mxu0 0.0
        %361 = vmatpush1.msra.mxu0 0.0
        %362 = vmatprep.subr.mxu0 0.0
        %363 = vmatpush1.msra.mxu0 %v330
        %364 = vmatprep.subr.mxu0 0.0
        %365 = vmatpush2.msra.mxu0 0.0
        %366 = vmatprep.subr.mxu0 0.0
        %367 = vmatpush2.msra.mxu0 0.0
        %368 = vmatprep.subr.mxu0 0.0
        %369 = vmatpush2.msra.mxu0 0.0
        %370 = vmatprep.subr.mxu0 0.0
        %371 = vmatpush2.msra.mxu0 0.0
        %372 = vmatprep.subr.mxu0 0.0
        %373 = vmatpush2.msra.mxu0 0.0
        %374 = vmatprep.subr.mxu0 0.0
        %375 = vmatpush2.msra.mxu0 0.0
        %376 = vmatprep.subr.mxu0 0.0
        %377 = vmatpush2.msra.mxu0 0.0
        %378 = vmatprep.subr.mxu0 0.0
        %379 = vmatpush2.msra.mxu0 0.0
        %380 = vmatprep.subr.mxu0 0.0
        %381 = vmatpush2.msra.mxu0 0.0
        %382 = vmatprep.subr.mxu0 0.0
        %383 = vmatpush2.msra.mxu0 0.0
        %384 = vmatprep.subr.mxu0 0.0
        %385 = vmatpush2.msra.mxu0 0.0
        %386 = vmatprep.subr.mxu0 0.0
        %387 = vmatpush2.msra.mxu0 0.0
        %388 = vmatprep.subr.mxu0 0.0
        %389 = vmatpush2.msra.mxu0 0.0
        %390 = vmatprep.subr.mxu0 0.0
        %391 = vmatpush2.msra.mxu0 0.0
        %392 = vmatprep.subr.mxu0 0.0
        %393 = vmatpush2.msra.mxu0 0.0
        %394 = vmatprep.subr.mxu0 0.0
        %395 = vmatpush2.msra.mxu0 0.0
        %396 = vmatprep.mubr.f32.mxu0 0.0
        %397 = vmatmul.mubr.f32.gmra.mxu0 %v326
        %v398 = vpop.f32.mrf.mxu0
        %v399 = vadd.f32 0.0, %v398
        %v400 = vpop.f32.mrf.mxu0
        %401 = vdwg.mxu0
        %403 = vrot.lane.b32.xlu0 %v399, 127
        %v404 = vpop.permute.xlu0 %403
        %v406 = vadd.f32 %v399, %v404
        %v407 = vxor.u32 %v406, 2147483648
        %v408 = vmul.f32 %v407, 1.442695
        %v409 = vpow.pop %v408
        %v410 = vadd.f32 %v409, 1.0
        %v411 = vrcp.pop %v410
        %v412 = vmul.f32 1.0, %v411
        %414 = vset.pattern.permute.xlu0 0
        %415 = vperm.xlu0 %414, %v412
        %v416 = vpop.permute.xlu0 %415
        %v418 = vmul.f32 %v236, %v416
        %v419 = vmul.f32 %v237, %v416
        %v420 = vrot.slane %v418, 4
        %v421 = vmax.f32 %v418, %v420
        %v422 = vrot.slane %v421, 2
        %v423 = vmax.f32 %v421, %v422
        %v424 = vrot.slane %v423, 1
        %v425 = vmax.f32 %v423, %v424
        %v426 = vrot.slane %v419, 4
        %v427 = vmax.f32 %v419, %v426
        %v428 = vrot.slane %v427, 2
        %v429 = vmax.f32 %v427, %v428
        %v430 = vrot.slane %v429, 1
        %v431 = vmax.f32 %v429, %v430
        %v432 = vrot.slane %v418, 4
        %v433 = vadd.f32 %v418, %v432
        %v434 = vrot.slane %v433, 2
        %v435 = vadd.f32 %v433, %v434
        %v436 = vrot.slane %v435, 1
        %v437 = vadd.f32 %v435, %v436
        %v438 = vrot.slane %v419, 4
        %v439 = vadd.f32 %v419, %v438
        %v440 = vrot.slane %v439, 2
        %v441 = vadd.f32 %v439, %v440
        %v442 = vrot.slane %v441, 1
        %v443 = vadd.f32 %v441, %v442
        %v444 = vmul.f32 %v437, 0.125
        %v445 = vmul.f32 %v443, 0.125
        %447 = vrot.lane.b32.xlu0 %v425, 3
        %v448 = vpop.permute.xlu0 %447
        %vm450 = vcmask 147480
        %451 = vst.msk [vmem:[#allocation2 + $0x3] sm:$0x1] %vm450, %v448
        %453 = vrot.lane.b32.xlu0 %v444, 3
        %v454 = vpop.permute.xlu0 %453
        %456 = vst.msk [vmem:[#allocation3 + $0x3] sm:$0x1] %vm450, %v454
        %457 = vrot.lane.b32.xlu0 %v425, 115
        %v458 = vpop.permute.xlu0 %457
        %460 = vst.msk [vmem:[#allocation2 + $0x4] sm:$0x1] %vm450, %v458
        %461 = vrot.lane.b32.xlu0 %v444, 115
        %v462 = vpop.permute.xlu0 %461
        %464 = vst.msk [vmem:[#allocation3 + $0x4] sm:$0x1] %vm450, %v462
        %465 = vrot.lane.b32.xlu0 %v425, 99
        %v466 = vpop.permute.xlu0 %465
        %468 = vst.msk [vmem:[#allocation2 + $0x5] sm:$0x1] %vm450, %v466
        %469 = vrot.lane.b32.xlu0 %v444, 99
        %v470 = vpop.permute.xlu0 %469
        %472 = vst.msk [vmem:[#allocation3 + $0x5] sm:$0x1] %vm450, %v470
        %473 = vrot.lane.b32.xlu0 %v425, 83
        %v474 = vpop.permute.xlu0 %473
        %476 = vst.msk [vmem:[#allocation2 + $0x6] sm:$0x1] %vm450, %v474
        %477 = vrot.lane.b32.xlu0 %v444, 83
        %v478 = vpop.permute.xlu0 %477
        %480 = vst.msk [vmem:[#allocation3 + $0x6] sm:$0x1] %vm450, %v478
        %481 = vrot.lane.b32.xlu0 %v425, 67
        %v482 = vpop.permute.xlu0 %481
        %484 = vst.msk [vmem:[#allocation2 + $0x7] sm:$0x1] %vm450, %v482
        %485 = vrot.lane.b32.xlu0 %v444, 67
        %v486 = vpop.permute.xlu0 %485
        %488 = vst.msk [vmem:[#allocation3 + $0x7] sm:$0x1] %vm450, %v486
        %489 = vrot.lane.b32.xlu0 %v425, 51
        %v490 = vpop.permute.xlu0 %489
        %492 = vst.msk [vmem:[#allocation2 + $0x8] sm:$0x1] %vm450, %v490
        %493 = vrot.lane.b32.xlu0 %v444, 51
        %v494 = vpop.permute.xlu0 %493
        %496 = vst.msk [vmem:[#allocation3 + $0x8] sm:$0x1] %vm450, %v494
        %497 = vrot.lane.b32.xlu0 %v425, 35
        %v498 = vpop.permute.xlu0 %497
        %500 = vst.msk [vmem:[#allocation2 + $0x9] sm:$0x1] %vm450, %v498
        %501 = vrot.lane.b32.xlu0 %v444, 35
        %v502 = vpop.permute.xlu0 %501
        %504 = vst.msk [vmem:[#allocation3 + $0x9] sm:$0x1] %vm450, %v502
        %505 = vrot.lane.b32.xlu0 %v425, 19
        %v506 = vpop.permute.xlu0 %505
        %508 = vst.msk [vmem:[#allocation2 + $0xa] sm:$0x1] %vm450, %v506
        %509 = vrot.lane.b32.xlu0 %v444, 19
        %v510 = vpop.permute.xlu0 %509
        %512 = vst.msk [vmem:[#allocation3 + $0xa] sm:$0x1] %vm450, %v510
        %514 = vrot.lane.b32.xlu0 %v431, 3
        %v515 = vpop.permute.xlu0 %514
        %517 = vst.msk [vmem:[#allocation2 + $0xb] sm:$0x1] %vm450, %v515
        %519 = vrot.lane.b32.xlu0 %v445, 3
        %v520 = vpop.permute.xlu0 %519
        %522 = vst.msk [vmem:[#allocation3 + $0xb] sm:$0x1] %vm450, %v520
        %523 = vrot.lane.b32.xlu0 %v431, 115
        %v524 = vpop.permute.xlu0 %523
        %526 = vst.msk [vmem:[#allocation2 + $0xc] sm:$0x1] %vm450, %v524
        %527 = vrot.lane.b32.xlu0 %v445, 115
        %v528 = vpop.permute.xlu0 %527
        %530 = vst.msk [vmem:[#allocation3 + $0xc] sm:$0x1] %vm450, %v528
        %531 = vrot.lane.b32.xlu0 %v431, 99
        %v532 = vpop.permute.xlu0 %531
        %534 = vst.msk [vmem:[#allocation2 + $0xd] sm:$0x1] %vm450, %v532
        %535 = vrot.lane.b32.xlu0 %v445, 99
        %v536 = vpop.permute.xlu0 %535
        %538 = vst.msk [vmem:[#allocation3 + $0xd] sm:$0x1] %vm450, %v536
        %539 = vrot.lane.b32.xlu0 %v431, 83
        %v540 = vpop.permute.xlu0 %539
        %542 = vst.msk [vmem:[#allocation2 + $0xe] sm:$0x1] %vm450, %v540
        %543 = vrot.lane.b32.xlu0 %v445, 83
        %v544 = vpop.permute.xlu0 %543
        %546 = vst.msk [vmem:[#allocation3 + $0xe] sm:$0x1] %vm450, %v544
        %547 = vrot.lane.b32.xlu0 %v431, 67
        %v548 = vpop.permute.xlu0 %547
        %550 = vst.msk [vmem:[#allocation2 + $0xf] sm:$0x1] %vm450, %v548
        %551 = vrot.lane.b32.xlu0 %v445, 67
        %v552 = vpop.permute.xlu0 %551
        %554 = vst.msk [vmem:[#allocation3 + $0xf] sm:$0x1] %vm450, %v552
        %555 = vrot.lane.b32.xlu0 %v431, 51
        %v556 = vpop.permute.xlu0 %555
        %558 = vst.msk [vmem:[#allocation2 + $0x10] sm:$0x1] %vm450, %v556
        %559 = vrot.lane.b32.xlu0 %v445, 51
        %v560 = vpop.permute.xlu0 %559
        %562 = vst.msk [vmem:[#allocation3 + $0x10] sm:$0x1] %vm450, %v560
        %563 = vrot.lane.b32.xlu0 %v431, 35
        %v564 = vpop.permute.xlu0 %563
        %566 = vst.msk [vmem:[#allocation2 + $0x11] sm:$0x1] %vm450, %v564
        %567 = vrot.lane.b32.xlu0 %v445, 35
        %v568 = vpop.permute.xlu0 %567
        %570 = vst.msk [vmem:[#allocation3 + $0x11] sm:$0x1] %vm450, %v568
        %571 = vrot.lane.b32.xlu0 %v431, 19
        %v572 = vpop.permute.xlu0 %571
        %574 = vst.msk [vmem:[#allocation2 + $0x12] sm:$0x1] %vm450, %v572
        %575 = vrot.lane.b32.xlu0 %v445, 19
        %v576 = vpop.permute.xlu0 %575
        %578 = vst.msk [vmem:[#allocation3 + $0x12] sm:$0x1] %vm450, %v576
        %v579 = vld [vmem:[#allocation2] sm:$0xff]
        %v580 = vld [vmem:[#allocation2 + $0x8] sm:$0xff]
        %v581 = vld [vmem:[#allocation2 + $0x10] sm:$0x3f]
        %v582 = vld [vmem:[#allocation3] sm:$0xff]
        %v583 = vld [vmem:[#allocation3 + $0x8] sm:$0xff]
        %v584 = vld [vmem:[#allocation3 + $0x10] sm:$0x3f]
        %s585 = sld [smem:[#allocation9]]
        %v586 = vstv %s585
        %v587 = vmul.f32 %v586, %v579
        %v588 = vmul.f32 %v586, %v580
        %v589 = vadd.f32 %v587, 0.0
        %v590 = vadd.f32 %v588, 0.0
        %s591 = sld [smem:[#allocation9 + $0x31]]
        %v592 = vstv %s591
        %v593 = vmul.f32 %v592, %v582
        %v594 = vmul.f32 %v592, %v583
        %v595 = vadd.f32 %v589, %v593
        %v596 = vadd.f32 %v590, %v594
        %s597 = sld [smem:[#allocation9 + $0x7]]
        %v598 = vstv %s597
        %v599 = vmul.f32 %v598, %v579
        %v600 = vmul.f32 %v598, %v580
        %v601 = vmul.f32 %v598, %v581
        %vm605 = vcmask 1046528
        %v606 = vrot.slane %v599, 1
        %v607 = vrot.slane %v600, 1
        %v608 = vsel %vm605, %v606, %v607
        %v609 = vrot.slane %v601, 1
        %v610 = vsel %vm605, %v607, %v609
        %v613 = vadd.f32 %v595, %v608
        %v614 = vadd.f32 %v596, %v610
        %s615 = sld [smem:[#allocation9 + $0x38]]
        %v616 = vstv %s615
        %v617 = vmul.f32 %v616, %v582
        %v618 = vmul.f32 %v616, %v583
        %v619 = vmul.f32 %v616, %v584
        %v623 = vrot.slane %v617, 1
        %v624 = vrot.slane %v618, 1
        %v625 = vsel %vm605, %v623, %v624
        %v626 = vrot.slane %v619, 1
        %v627 = vsel %vm605, %v624, %v626
        %v630 = vadd.f32 %v613, %v625
        %v631 = vadd.f32 %v614, %v627
        %s632 = sld [smem:[#allocation9 + $0xe]]
        %v633 = vstv %s632
        %v634 = vmul.f32 %v633, %v579
        %v635 = vmul.f32 %v633, %v580
        %v636 = vmul.f32 %v633, %v581
        %vm640 = vcmask 1045504
        %v641 = vrot.slane %v634, 2
        %v642 = vrot.slane %v635, 2
        %v643 = vsel %vm640, %v641, %v642
        %v644 = vrot.slane %v636, 2
        %v645 = vsel %vm640, %v642, %v644
        %v648 = vadd.f32 %v630, %v643
        %v649 = vadd.f32 %v631, %v645
        %s650 = sld [smem:[#allocation9 + $0x3f]]
        %v651 = vstv %s650
        %v652 = vmul.f32 %v651, %v582
        %v653 = vmul.f32 %v651, %v583
        %v654 = vmul.f32 %v651, %v584
        %v658 = vrot.slane %v652, 2
        %v659 = vrot.slane %v653, 2
        %v660 = vsel %vm640, %v658, %v659
        %v661 = vrot.slane %v654, 2
        %v662 = vsel %vm640, %v659, %v661
        %v665 = vadd.f32 %v648, %v660
        %v666 = vadd.f32 %v649, %v662
        %s667 = sld [smem:[#allocation9 + $0x15]]
        %v668 = vstv %s667
        %v669 = vmul.f32 %v668, %v579
        %v670 = vmul.f32 %v668, %v580
        %v671 = vmul.f32 %v668, %v581
        %vm675 = vcmask 1044480
        %v676 = vrot.slane %v669, 3
        %v677 = vrot.slane %v670, 3
        %v678 = vsel %vm675, %v676, %v677
        %v679 = vrot.slane %v671, 3
        %v680 = vsel %vm675, %v677, %v679
        %v683 = vadd.f32 %v665, %v678
        %v684 = vadd.f32 %v666, %v680
        %s685 = sld [smem:[#allocation9 + $0x46]]
        %v686 = vstv %s685
        %v687 = vmul.f32 %v686, %v582
        %v688 = vmul.f32 %v686, %v583
        %v689 = vmul.f32 %v686, %v584
        %v693 = vrot.slane %v687, 3
        %v694 = vrot.slane %v688, 3
        %v695 = vsel %vm675, %v693, %v694
        %v696 = vrot.slane %v689, 3
        %v697 = vsel %vm675, %v694, %v696
        %v700 = vadd.f32 %v683, %v695
        %v701 = vadd.f32 %v684, %v697
        %s702 = sld [smem:[#allocation9 + $0x1c]]
        %v703 = vstv %s702
        %v704 = vmul.f32 %v703, %v579
        %v705 = vmul.f32 %v703, %v580
        %v706 = vmul.f32 %v703, %v581
        %vm710 = vcmask 1043456
        %v711 = vrot.slane %v704, 4
        %v712 = vrot.slane %v705, 4
        %v713 = vsel %vm710, %v711, %v712
        %v714 = vrot.slane %v706, 4
        %v715 = vsel %vm710, %v712, %v714
        %v718 = vadd.f32 %v700, %v713
        %v719 = vadd.f32 %v701, %v715
        %s720 = sld [smem:[#allocation9 + $0x4d]]
        %v721 = vstv %s720
        %v722 = vmul.f32 %v721, %v582
        %v723 = vmul.f32 %v721, %v583
        %v724 = vmul.f32 %v721, %v584
        %v728 = vrot.slane %v722, 4
        %v729 = vrot.slane %v723, 4
        %v730 = vsel %vm710, %v728, %v729
        %v731 = vrot.slane %v724, 4
        %v732 = vsel %vm710, %v729, %v731
        %v735 = vadd.f32 %v718, %v730
        %v736 = vadd.f32 %v719, %v732
        %s737 = sld [smem:[#allocation9 + $0x23]]
        %v738 = vstv %s737
        %v739 = vmul.f32 %v738, %v579
        %v740 = vmul.f32 %v738, %v580
        %v741 = vmul.f32 %v738, %v581
        %vm745 = vcmask 1042432
        %v746 = vrot.slane %v739, 5
        %v747 = vrot.slane %v740, 5
        %v748 = vsel %vm745, %v746, %v747
        %v749 = vrot.slane %v741, 5
        %v750 = vsel %vm745, %v747, %v749
        %v753 = vadd.f32 %v735, %v748
        %v754 = vadd.f32 %v736, %v750
        %s755 = sld [smem:[#allocation9 + $0x54]]
        %v756 = vstv %s755
        %v757 = vmul.f32 %v756, %v582
        %v758 = vmul.f32 %v756, %v583
        %v759 = vmul.f32 %v756, %v584
        %v763 = vrot.slane %v757, 5
        %v764 = vrot.slane %v758, 5
        %v765 = vsel %vm745, %v763, %v764
        %v766 = vrot.slane %v759, 5
        %v767 = vsel %vm745, %v764, %v766
        %v770 = vadd.f32 %v753, %v765
        %v771 = vadd.f32 %v754, %v767
        %s772 = sld [smem:[#allocation9 + $0x2a]]
        %v773 = vstv %s772
        %v774 = vmul.f32 %v773, %v579
        %v775 = vmul.f32 %v773, %v580
        %v776 = vmul.f32 %v773, %v581
        %v780 = vrot.slane %v774, 6
        %v781 = vrot.slane %v775, 6
        %v782 = vsel %vm328, %v780, %v781
        %v783 = vrot.slane %v776, 6
        %v784 = vsel %vm328, %v781, %v783
        %v787 = vadd.f32 %v770, %v782
        %v788 = vadd.f32 %v771, %v784
        %s789 = sld [smem:[#allocation9 + $0x5b]]
        %v790 = vstv %s789
        %v791 = vmul.f32 %v790, %v582
        %v792 = vmul.f32 %v790, %v583
        %v793 = vmul.f32 %v790, %v584
        %v797 = vrot.slane %v791, 6
        %v798 = vrot.slane %v792, 6
        %v799 = vsel %vm328, %v797, %v798
        %v800 = vrot.slane %v793, 6
        %v801 = vsel %vm328, %v798, %v800
        %v804 = vadd.f32 %v787, %v799
        %v805 = vadd.f32 %v788, %v801
        %s806 = sld [smem:[#allocation9 + $0x1]]
        %v807 = vstv %s806
        %v808 = vmul.f32 %v807, %v579
        %v809 = vmul.f32 %v807, %v580
        %812 = vrot.lane.b32.xlu0 %v808, 127
        %v813 = vpop.permute.xlu0 %812
        %814 = vrot.lane.b32.xlu0 %v809, 127
        %v815 = vpop.permute.xlu0 %814
        %v818 = vadd.f32 %v804, %v813
        %v819 = vadd.f32 %v805, %v815
        %s820 = sld [smem:[#allocation9 + $0x32]]
        %v821 = vstv %s820
        %v822 = vmul.f32 %v821, %v582
        %v823 = vmul.f32 %v821, %v583
        %826 = vrot.lane.b32.xlu0 %v822, 127
        %v827 = vpop.permute.xlu0 %826
        %828 = vrot.lane.b32.xlu0 %v823, 127
        %v829 = vpop.permute.xlu0 %828
        %v832 = vadd.f32 %v818, %v827
        %v833 = vadd.f32 %v819, %v829
        %s834 = sld [smem:[#allocation9 + $0x8]]
        %v835 = vstv %s834
        %v836 = vmul.f32 %v835, %v579
        %v837 = vmul.f32 %v835, %v580
        %v838 = vmul.f32 %v835, %v581
        %v842 = vrot.slane %v836, 1
        %v843 = vrot.slane %v837, 1
        %v844 = vsel %vm605, %v842, %v843
        %v845 = vrot.slane %v838, 1
        %v846 = vsel %vm605, %v843, %v845
        %847 = vrot.lane.b32.xlu0 %v844, 127
        %v848 = vpop.permute.xlu0 %847
        %849 = vrot.lane.b32.xlu0 %v846, 127
        %v850 = vpop.permute.xlu0 %849
        %v853 = vadd.f32 %v832, %v848
        %v854 = vadd.f32 %v833, %v850
        %s855 = sld [smem:[#allocation9 + $0x39]]
        %v856 = vstv %s855
        %v857 = vmul.f32 %v856, %v582
        %v858 = vmul.f32 %v856, %v583
        %v859 = vmul.f32 %v856, %v584
        %v863 = vrot.slane %v857, 1
        %v864 = vrot.slane %v858, 1
        %v865 = vsel %vm605, %v863, %v864
        %v866 = vrot.slane %v859, 1
        %v867 = vsel %vm605, %v864, %v866
        %868 = vrot.lane.b32.xlu0 %v865, 127
        %v869 = vpop.permute.xlu0 %868
        %870 = vrot.lane.b32.xlu0 %v867, 127
        %v871 = vpop.permute.xlu0 %870
        %v874 = vadd.f32 %v853, %v869
        %v875 = vadd.f32 %v854, %v871
        %s876 = sld [smem:[#allocation9 + $0xf]]
        %v877 = vstv %s876
        %v878 = vmul.f32 %v877, %v579
        %v879 = vmul.f32 %v877, %v580
        %v880 = vmul.f32 %v877, %v581
        %v884 = vrot.slane %v878, 2
        %v885 = vrot.slane %v879, 2
        %v886 = vsel %vm640, %v884, %v885
        %v887 = vrot.slane %v880, 2
        %v888 = vsel %vm640, %v885, %v887
        %889 = vrot.lane.b32.xlu0 %v886, 127
        %v890 = vpop.permute.xlu0 %889
        %891 = vrot.lane.b32.xlu0 %v888, 127
        %v892 = vpop.permute.xlu0 %891
        %v895 = vadd.f32 %v874, %v890
        %v896 = vadd.f32 %v875, %v892
        %s897 = sld [smem:[#allocation9 + $0x40]]
        %v898 = vstv %s897
        %v899 = vmul.f32 %v898, %v582
        %v900 = vmul.f32 %v898, %v583
        %v901 = vmul.f32 %v898, %v584
        %v905 = vrot.slane %v899, 2
        %v906 = vrot.slane %v900, 2
        %v907 = vsel %vm640, %v905, %v906
        %v908 = vrot.slane %v901, 2
        %v909 = vsel %vm640, %v906, %v908
        %910 = vrot.lane.b32.xlu0 %v907, 127
        %v911 = vpop.permute.xlu0 %910
        %912 = vrot.lane.b32.xlu0 %v909, 127
        %v913 = vpop.permute.xlu0 %912
        %v916 = vadd.f32 %v895, %v911
        %v917 = vadd.f32 %v896, %v913
        %s918 = sld [smem:[#allocation9 + $0x16]]
        %v919 = vstv %s918
        %v920 = vmul.f32 %v919, %v579
        %v921 = vmul.f32 %v919, %v580
        %v922 = vmul.f32 %v919, %v581
        %v926 = vrot.slane %v920, 3
        %v927 = vrot.slane %v921, 3
        %v928 = vsel %vm675, %v926, %v927
        %v929 = vrot.slane %v922, 3
        %v930 = vsel %vm675, %v927, %v929
        %931 = vrot.lane.b32.xlu0 %v928, 127
        %v932 = vpop.permute.xlu0 %931
        %933 = vrot.lane.b32.xlu0 %v930, 127
        %v934 = vpop.permute.xlu0 %933
        %v937 = vadd.f32 %v916, %v932
        %v938 = vadd.f32 %v917, %v934
        %s939 = sld [smem:[#allocation9 + $0x47]]
        %v940 = vstv %s939
        %v941 = vmul.f32 %v940, %v582
        %v942 = vmul.f32 %v940, %v583
        %v943 = vmul.f32 %v940, %v584
        %v947 = vrot.slane %v941, 3
        %v948 = vrot.slane %v942, 3
        %v949 = vsel %vm675, %v947, %v948
        %v950 = vrot.slane %v943, 3
        %v951 = vsel %vm675, %v948, %v950
        %952 = vrot.lane.b32.xlu0 %v949, 127
        %v953 = vpop.permute.xlu0 %952
        %954 = vrot.lane.b32.xlu0 %v951, 127
        %v955 = vpop.permute.xlu0 %954
        %v958 = vadd.f32 %v937, %v953
        %v959 = vadd.f32 %v938, %v955
        %s960 = sld [smem:[#allocation9 + $0x1d]]
        %v961 = vstv %s960
        %v962 = vmul.f32 %v961, %v579
        %v963 = vmul.f32 %v961, %v580
        %v964 = vmul.f32 %v961, %v581
        %v968 = vrot.slane %v962, 4
        %v969 = vrot.slane %v963, 4
        %v970 = vsel %vm710, %v968, %v969
        %v971 = vrot.slane %v964, 4
        %v972 = vsel %vm710, %v969, %v971
        %973 = vrot.lane.b32.xlu0 %v970, 127
        %v974 = vpop.permute.xlu0 %973
        %975 = vrot.lane.b32.xlu0 %v972, 127
        %v976 = vpop.permute.xlu0 %975
        %v979 = vadd.f32 %v958, %v974
        %v980 = vadd.f32 %v959, %v976
        %s981 = sld [smem:[#allocation9 + $0x4e]]
        %v982 = vstv %s981
        %v983 = vmul.f32 %v982, %v582
        %v984 = vmul.f32 %v982, %v583
        %v985 = vmul.f32 %v982, %v584
        %v989 = vrot.slane %v983, 4
        %v990 = vrot.slane %v984, 4
        %v991 = vsel %vm710, %v989, %v990
        %v992 = vrot.slane %v985, 4
        %v993 = vsel %vm710, %v990, %v992
        %994 = vrot.lane.b32.xlu0 %v991, 127
        %v995 = vpop.permute.xlu0 %994
        %996 = vrot.lane.b32.xlu0 %v993, 127
        %v997 = vpop.permute.xlu0 %996
        %v1000 = vadd.f32 %v979, %v995
        %v1001 = vadd.f32 %v980, %v997
        %s1002 = sld [smem:[#allocation9 + $0x24]]
        %v1003 = vstv %s1002
        %v1004 = vmul.f32 %v1003, %v579
        %v1005 = vmul.f32 %v1003, %v580
        %v1006 = vmul.f32 %v1003, %v581
        %v1010 = vrot.slane %v1004, 5
        %v1011 = vrot.slane %v1005, 5
        %v1012 = vsel %vm745, %v1010, %v1011
        %v1013 = vrot.slane %v1006, 5
        %v1014 = vsel %vm745, %v1011, %v1013
        %1015 = vrot.lane.b32.xlu0 %v1012, 127
        %v1016 = vpop.permute.xlu0 %1015
        %1017 = vrot.lane.b32.xlu0 %v1014, 127
        %v1018 = vpop.permute.xlu0 %1017
        %v1021 = vadd.f32 %v1000, %v1016
        %v1022 = vadd.f32 %v1001, %v1018
        %s1023 = sld [smem:[#allocation9 + $0x55]]
        %v1024 = vstv %s1023
        %v1025 = vmul.f32 %v1024, %v582
        %v1026 = vmul.f32 %v1024, %v583
        %v1027 = vmul.f32 %v1024, %v584
        %v1031 = vrot.slane %v1025, 5
        %v1032 = vrot.slane %v1026, 5
        %v1033 = vsel %vm745, %v1031, %v1032
        %v1034 = vrot.slane %v1027, 5
        %v1035 = vsel %vm745, %v1032, %v1034
        %1036 = vrot.lane.b32.xlu0 %v1033, 127
        %v1037 = vpop.permute.xlu0 %1036
        %1038 = vrot.lane.b32.xlu0 %v1035, 127
        %v1039 = vpop.permute.xlu0 %1038
        %v1042 = vadd.f32 %v1021, %v1037
        %v1043 = vadd.f32 %v1022, %v1039
        %s1044 = sld [smem:[#allocation9 + $0x2b]]
        %v1045 = vstv %s1044
        %v1046 = vmul.f32 %v1045, %v579
        %v1047 = vmul.f32 %v1045, %v580
        %v1048 = vmul.f32 %v1045, %v581
        %v1052 = vrot.slane %v1046, 6
        %v1053 = vrot.slane %v1047, 6
        %v1054 = vsel %vm328, %v1052, %v1053
        %v1055 = vrot.slane %v1048, 6
        %v1056 = vsel %vm328, %v1053, %v1055
        %1057 = vrot.lane.b32.xlu0 %v1054, 127
        %v1058 = vpop.permute.xlu0 %1057
        %1059 = vrot.lane.b32.xlu0 %v1056, 127
        %v1060 = vpop.permute.xlu0 %1059
        %v1063 = vadd.f32 %v1042, %v1058
        %v1064 = vadd.f32 %v1043, %v1060
        %s1065 = sld [smem:[#allocation9 + $0x5c]]
        %v1066 = vstv %s1065
        %v1067 = vmul.f32 %v1066, %v582
        %v1068 = vmul.f32 %v1066, %v583
        %v1069 = vmul.f32 %v1066, %v584
        %v1073 = vrot.slane %v1067, 6
        %v1074 = vrot.slane %v1068, 6
        %v1075 = vsel %vm328, %v1073, %v1074
        %v1076 = vrot.slane %v1069, 6
        %v1077 = vsel %vm328, %v1074, %v1076
        %1078 = vrot.lane.b32.xlu0 %v1075, 127
        %v1079 = vpop.permute.xlu0 %1078
        %1080 = vrot.lane.b32.xlu0 %v1077, 127
        %v1081 = vpop.permute.xlu0 %1080
        %v1084 = vadd.f32 %v1063, %v1079
        %v1085 = vadd.f32 %v1064, %v1081
        %s1086 = sld [smem:[#allocation9 + $0x2]]
        %v1087 = vstv %s1086
        %v1088 = vmul.f32 %v1087, %v579
        %v1089 = vmul.f32 %v1087, %v580
        %1092 = vrot.lane.b32.xlu0 %v1088, 126
        %v1093 = vpop.permute.xlu0 %1092
        %1094 = vrot.lane.b32.xlu0 %v1089, 126
        %v1095 = vpop.permute.xlu0 %1094
        %v1098 = vadd.f32 %v1084, %v1093
        %v1099 = vadd.f32 %v1085, %v1095
        %s1100 = sld [smem:[#allocation9 + $0x33]]
        %v1101 = vstv %s1100
        %v1102 = vmul.f32 %v1101, %v582
        %v1103 = vmul.f32 %v1101, %v583
        %1106 = vrot.lane.b32.xlu0 %v1102, 126
        %v1107 = vpop.permute.xlu0 %1106
        %1108 = vrot.lane.b32.xlu0 %v1103, 126
        %v1109 = vpop.permute.xlu0 %1108
        %v1112 = vadd.f32 %v1098, %v1107
        %v1113 = vadd.f32 %v1099, %v1109
        %s1114 = sld [smem:[#allocation9 + $0x9]]
        %v1115 = vstv %s1114
        %v1116 = vmul.f32 %v1115, %v579
        %v1117 = vmul.f32 %v1115, %v580
        %v1118 = vmul.f32 %v1115, %v581
        %v1122 = vrot.slane %v1116, 1
        %v1123 = vrot.slane %v1117, 1
        %v1124 = vsel %vm605, %v1122, %v1123
        %v1125 = vrot.slane %v1118, 1
        %v1126 = vsel %vm605, %v1123, %v1125
        %1127 = vrot.lane.b32.xlu0 %v1124, 126
        %v1128 = vpop.permute.xlu0 %1127
        %1129 = vrot.lane.b32.xlu0 %v1126, 126
        %v1130 = vpop.permute.xlu0 %1129
        %v1133 = vadd.f32 %v1112, %v1128
        %v1134 = vadd.f32 %v1113, %v1130
        %s1135 = sld [smem:[#allocation9 + $0x3a]]
        %v1136 = vstv %s1135
        %v1137 = vmul.f32 %v1136, %v582
        %v1138 = vmul.f32 %v1136, %v583
        %v1139 = vmul.f32 %v1136, %v584
        %v1143 = vrot.slane %v1137, 1
        %v1144 = vrot.slane %v1138, 1
        %v1145 = vsel %vm605, %v1143, %v1144
        %v1146 = vrot.slane %v1139, 1
        %v1147 = vsel %vm605, %v1144, %v1146
        %1148 = vrot.lane.b32.xlu0 %v1145, 126
        %v1149 = vpop.permute.xlu0 %1148
        %1150 = vrot.lane.b32.xlu0 %v1147, 126
        %v1151 = vpop.permute.xlu0 %1150
        %v1154 = vadd.f32 %v1133, %v1149
        %v1155 = vadd.f32 %v1134, %v1151
        %s1156 = sld [smem:[#allocation9 + $0x10]]
        %v1157 = vstv %s1156
        %v1158 = vmul.f32 %v1157, %v579
        %v1159 = vmul.f32 %v1157, %v580
        %v1160 = vmul.f32 %v1157, %v581
        %v1164 = vrot.slane %v1158, 2
        %v1165 = vrot.slane %v1159, 2
        %v1166 = vsel %vm640, %v1164, %v1165
        %v1167 = vrot.slane %v1160, 2
        %v1168 = vsel %vm640, %v1165, %v1167
        %1169 = vrot.lane.b32.xlu0 %v1166, 126
        %v1170 = vpop.permute.xlu0 %1169
        %1171 = vrot.lane.b32.xlu0 %v1168, 126
        %v1172 = vpop.permute.xlu0 %1171
        %v1175 = vadd.f32 %v1154, %v1170
        %v1176 = vadd.f32 %v1155, %v1172
        %s1177 = sld [smem:[#allocation9 + $0x41]]
        %v1178 = vstv %s1177
        %v1179 = vmul.f32 %v1178, %v582
        %v1180 = vmul.f32 %v1178, %v583
        %v1181 = vmul.f32 %v1178, %v584
        %v1185 = vrot.slane %v1179, 2
        %v1186 = vrot.slane %v1180, 2
        %v1187 = vsel %vm640, %v1185, %v1186
        %v1188 = vrot.slane %v1181, 2
        %v1189 = vsel %vm640, %v1186, %v1188
        %1190 = vrot.lane.b32.xlu0 %v1187, 126
        %v1191 = vpop.permute.xlu0 %1190
        %1192 = vrot.lane.b32.xlu0 %v1189, 126
        %v1193 = vpop.permute.xlu0 %1192
        %v1196 = vadd.f32 %v1175, %v1191
        %v1197 = vadd.f32 %v1176, %v1193
        %s1198 = sld [smem:[#allocation9 + $0x17]]
        %v1199 = vstv %s1198
        %v1200 = vmul.f32 %v1199, %v579
        %v1201 = vmul.f32 %v1199, %v580
        %v1202 = vmul.f32 %v1199, %v581
        %v1206 = vrot.slane %v1200, 3
        %v1207 = vrot.slane %v1201, 3
        %v1208 = vsel %vm675, %v1206, %v1207
        %v1209 = vrot.slane %v1202, 3
        %v1210 = vsel %vm675, %v1207, %v1209
        %1211 = vrot.lane.b32.xlu0 %v1208, 126
        %v1212 = vpop.permute.xlu0 %1211
        %1213 = vrot.lane.b32.xlu0 %v1210, 126
        %v1214 = vpop.permute.xlu0 %1213
        %v1217 = vadd.f32 %v1196, %v1212
        %v1218 = vadd.f32 %v1197, %v1214
        %s1219 = sld [smem:[#allocation9 + $0x48]]
        %v1220 = vstv %s1219
        %v1221 = vmul.f32 %v1220, %v582
        %v1222 = vmul.f32 %v1220, %v583
        %v1223 = vmul.f32 %v1220, %v584
        %v1227 = vrot.slane %v1221, 3
        %v1228 = vrot.slane %v1222, 3
        %v1229 = vsel %vm675, %v1227, %v1228
        %v1230 = vrot.slane %v1223, 3
        %v1231 = vsel %vm675, %v1228, %v1230
        %1232 = vrot.lane.b32.xlu0 %v1229, 126
        %v1233 = vpop.permute.xlu0 %1232
        %1234 = vrot.lane.b32.xlu0 %v1231, 126
        %v1235 = vpop.permute.xlu0 %1234
        %v1238 = vadd.f32 %v1217, %v1233
        %v1239 = vadd.f32 %v1218, %v1235
        %s1240 = sld [smem:[#allocation9 + $0x1e]]
        %v1241 = vstv %s1240
        %v1242 = vmul.f32 %v1241, %v579
        %v1243 = vmul.f32 %v1241, %v580
        %v1244 = vmul.f32 %v1241, %v581
        %v1248 = vrot.slane %v1242, 4
        %v1249 = vrot.slane %v1243, 4
        %v1250 = vsel %vm710, %v1248, %v1249
        %v1251 = vrot.slane %v1244, 4
        %v1252 = vsel %vm710, %v1249, %v1251
        %1253 = vrot.lane.b32.xlu0 %v1250, 126
        %v1254 = vpop.permute.xlu0 %1253
        %1255 = vrot.lane.b32.xlu0 %v1252, 126
        %v1256 = vpop.permute.xlu0 %1255
        %v1259 = vadd.f32 %v1238, %v1254
        %v1260 = vadd.f32 %v1239, %v1256
        %s1261 = sld [smem:[#allocation9 + $0x4f]]
        %v1262 = vstv %s1261
        %v1263 = vmul.f32 %v1262, %v582
        %v1264 = vmul.f32 %v1262, %v583
        %v1265 = vmul.f32 %v1262, %v584
        %v1269 = vrot.slane %v1263, 4
        %v1270 = vrot.slane %v1264, 4
        %v1271 = vsel %vm710, %v1269, %v1270
        %v1272 = vrot.slane %v1265, 4
        %v1273 = vsel %vm710, %v1270, %v1272
        %1274 = vrot.lane.b32.xlu0 %v1271, 126
        %v1275 = vpop.permute.xlu0 %1274
        %1276 = vrot.lane.b32.xlu0 %v1273, 126
        %v1277 = vpop.permute.xlu0 %1276
        %v1280 = vadd.f32 %v1259, %v1275
        %v1281 = vadd.f32 %v1260, %v1277
        %s1282 = sld [smem:[#allocation9 + $0x25]]
        %v1283 = vstv %s1282
        %v1284 = vmul.f32 %v1283, %v579
        %v1285 = vmul.f32 %v1283, %v580
        %v1286 = vmul.f32 %v1283, %v581
        %v1290 = vrot.slane %v1284, 5
        %v1291 = vrot.slane %v1285, 5
        %v1292 = vsel %vm745, %v1290, %v1291
        %v1293 = vrot.slane %v1286, 5
        %v1294 = vsel %vm745, %v1291, %v1293
        %1295 = vrot.lane.b32.xlu0 %v1292, 126
        %v1296 = vpop.permute.xlu0 %1295
        %1297 = vrot.lane.b32.xlu0 %v1294, 126
        %v1298 = vpop.permute.xlu0 %1297
        %v1301 = vadd.f32 %v1280, %v1296
        %v1302 = vadd.f32 %v1281, %v1298
        %s1303 = sld [smem:[#allocation9 + $0x56]]
        %v1304 = vstv %s1303
        %v1305 = vmul.f32 %v1304, %v582
        %v1306 = vmul.f32 %v1304, %v583
        %v1307 = vmul.f32 %v1304, %v584
        %v1311 = vrot.slane %v1305, 5
        %v1312 = vrot.slane %v1306, 5
        %v1313 = vsel %vm745, %v1311, %v1312
        %v1314 = vrot.slane %v1307, 5
        %v1315 = vsel %vm745, %v1312, %v1314
        %1316 = vrot.lane.b32.xlu0 %v1313, 126
        %v1317 = vpop.permute.xlu0 %1316
        %1318 = vrot.lane.b32.xlu0 %v1315, 126
        %v1319 = vpop.permute.xlu0 %1318
        %v1322 = vadd.f32 %v1301, %v1317
        %v1323 = vadd.f32 %v1302, %v1319
        %s1324 = sld [smem:[#allocation9 + $0x2c]]
        %v1325 = vstv %s1324
        %v1326 = vmul.f32 %v1325, %v579
        %v1327 = vmul.f32 %v1325, %v580
        %v1328 = vmul.f32 %v1325, %v581
        %v1332 = vrot.slane %v1326, 6
        %v1333 = vrot.slane %v1327, 6
        %v1334 = vsel %vm328, %v1332, %v1333
        %v1335 = vrot.slane %v1328, 6
        %v1336 = vsel %vm328, %v1333, %v1335
        %1337 = vrot.lane.b32.xlu0 %v1334, 126
        %v1338 = vpop.permute.xlu0 %1337
        %1339 = vrot.lane.b32.xlu0 %v1336, 126
        %v1340 = vpop.permute.xlu0 %1339
        %v1343 = vadd.f32 %v1322, %v1338
        %v1344 = vadd.f32 %v1323, %v1340
        %s1345 = sld [smem:[#allocation9 + $0x5d]]
        %v1346 = vstv %s1345
        %v1347 = vmul.f32 %v1346, %v582
        %v1348 = vmul.f32 %v1346, %v583
        %v1349 = vmul.f32 %v1346, %v584
        %v1353 = vrot.slane %v1347, 6
        %v1354 = vrot.slane %v1348, 6
        %v1355 = vsel %vm328, %v1353, %v1354
        %v1356 = vrot.slane %v1349, 6
        %v1357 = vsel %vm328, %v1354, %v1356
        %1358 = vrot.lane.b32.xlu0 %v1355, 126
        %v1359 = vpop.permute.xlu0 %1358
        %1360 = vrot.lane.b32.xlu0 %v1357, 126
        %v1361 = vpop.permute.xlu0 %1360
        %v1364 = vadd.f32 %v1343, %v1359
        %v1365 = vadd.f32 %v1344, %v1361
        %s1366 = sld [smem:[#allocation9 + $0x3]]
        %v1367 = vstv %s1366
        %v1368 = vmul.f32 %v1367, %v579
        %v1369 = vmul.f32 %v1367, %v580
        %1372 = vrot.lane.b32.xlu0 %v1368, 125
        %v1373 = vpop.permute.xlu0 %1372
        %1374 = vrot.lane.b32.xlu0 %v1369, 125
        %v1375 = vpop.permute.xlu0 %1374
        %v1378 = vadd.f32 %v1364, %v1373
        %v1379 = vadd.f32 %v1365, %v1375
        %s1380 = sld [smem:[#allocation9 + $0x34]]
        %v1381 = vstv %s1380
        %v1382 = vmul.f32 %v1381, %v582
        %v1383 = vmul.f32 %v1381, %v583
        %1386 = vrot.lane.b32.xlu0 %v1382, 125
        %v1387 = vpop.permute.xlu0 %1386
        %1388 = vrot.lane.b32.xlu0 %v1383, 125
        %v1389 = vpop.permute.xlu0 %1388
        %v1392 = vadd.f32 %v1378, %v1387
        %v1393 = vadd.f32 %v1379, %v1389
        %s1394 = sld [smem:[#allocation9 + $0xa]]
        %v1395 = vstv %s1394
        %v1396 = vmul.f32 %v1395, %v579
        %v1397 = vmul.f32 %v1395, %v580
        %v1398 = vmul.f32 %v1395, %v581
        %v1402 = vrot.slane %v1396, 1
        %v1403 = vrot.slane %v1397, 1
        %v1404 = vsel %vm605, %v1402, %v1403
        %v1405 = vrot.slane %v1398, 1
        %v1406 = vsel %vm605, %v1403, %v1405
        %1407 = vrot.lane.b32.xlu0 %v1404, 125
        %v1408 = vpop.permute.xlu0 %1407
        %1409 = vrot.lane.b32.xlu0 %v1406, 125
        %v1410 = vpop.permute.xlu0 %1409
        %v1413 = vadd.f32 %v1392, %v1408
        %v1414 = vadd.f32 %v1393, %v1410
        %s1415 = sld [smem:[#allocation9 + $0x3b]]
        %v1416 = vstv %s1415
        %v1417 = vmul.f32 %v1416, %v582
        %v1418 = vmul.f32 %v1416, %v583
        %v1419 = vmul.f32 %v1416, %v584
        %v1423 = vrot.slane %v1417, 1
        %v1424 = vrot.slane %v1418, 1
        %v1425 = vsel %vm605, %v1423, %v1424
        %v1426 = vrot.slane %v1419, 1
        %v1427 = vsel %vm605, %v1424, %v1426
        %1428 = vrot.lane.b32.xlu0 %v1425, 125
        %v1429 = vpop.permute.xlu0 %1428
        %1430 = vrot.lane.b32.xlu0 %v1427, 125
        %v1431 = vpop.permute.xlu0 %1430
        %v1434 = vadd.f32 %v1413, %v1429
        %v1435 = vadd.f32 %v1414, %v1431
        %s1436 = sld [smem:[#allocation9 + $0x11]]
        %v1437 = vstv %s1436
        %v1438 = vmul.f32 %v1437, %v579
        %v1439 = vmul.f32 %v1437, %v580
        %v1440 = vmul.f32 %v1437, %v581
        %v1444 = vrot.slane %v1438, 2
        %v1445 = vrot.slane %v1439, 2
        %v1446 = vsel %vm640, %v1444, %v1445
        %v1447 = vrot.slane %v1440, 2
        %v1448 = vsel %vm640, %v1445, %v1447
        %1449 = vrot.lane.b32.xlu0 %v1446, 125
        %v1450 = vpop.permute.xlu0 %1449
        %1451 = vrot.lane.b32.xlu0 %v1448, 125
        %v1452 = vpop.permute.xlu0 %1451
        %v1455 = vadd.f32 %v1434, %v1450
        %v1456 = vadd.f32 %v1435, %v1452
        %s1457 = sld [smem:[#allocation9 + $0x42]]
        %v1458 = vstv %s1457
        %v1459 = vmul.f32 %v1458, %v582
        %v1460 = vmul.f32 %v1458, %v583
        %v1461 = vmul.f32 %v1458, %v584
        %v1465 = vrot.slane %v1459, 2
        %v1466 = vrot.slane %v1460, 2
        %v1467 = vsel %vm640, %v1465, %v1466
        %v1468 = vrot.slane %v1461, 2
        %v1469 = vsel %vm640, %v1466, %v1468
        %1470 = vrot.lane.b32.xlu0 %v1467, 125
        %v1471 = vpop.permute.xlu0 %1470
        %1472 = vrot.lane.b32.xlu0 %v1469, 125
        %v1473 = vpop.permute.xlu0 %1472
        %v1476 = vadd.f32 %v1455, %v1471
        %v1477 = vadd.f32 %v1456, %v1473
        %s1478 = sld [smem:[#allocation9 + $0x18]]
        %v1479 = vstv %s1478
        %v1480 = vmul.f32 %v1479, %v579
        %v1481 = vmul.f32 %v1479, %v580
        %v1482 = vmul.f32 %v1479, %v581
        %v1486 = vrot.slane %v1480, 3
        %v1487 = vrot.slane %v1481, 3
        %v1488 = vsel %vm675, %v1486, %v1487
        %v1489 = vrot.slane %v1482, 3
        %v1490 = vsel %vm675, %v1487, %v1489
        %1491 = vrot.lane.b32.xlu0 %v1488, 125
        %v1492 = vpop.permute.xlu0 %1491
        %1493 = vrot.lane.b32.xlu0 %v1490, 125
        %v1494 = vpop.permute.xlu0 %1493
        %v1497 = vadd.f32 %v1476, %v1492
        %v1498 = vadd.f32 %v1477, %v1494
        %s1499 = sld [smem:[#allocation9 + $0x49]]
        %v1500 = vstv %s1499
        %v1501 = vmul.f32 %v1500, %v582
        %v1502 = vmul.f32 %v1500, %v583
        %v1503 = vmul.f32 %v1500, %v584
        %v1507 = vrot.slane %v1501, 3
        %v1508 = vrot.slane %v1502, 3
        %v1509 = vsel %vm675, %v1507, %v1508
        %v1510 = vrot.slane %v1503, 3
        %v1511 = vsel %vm675, %v1508, %v1510
        %1512 = vrot.lane.b32.xlu0 %v1509, 125
        %v1513 = vpop.permute.xlu0 %1512
        %1514 = vrot.lane.b32.xlu0 %v1511, 125
        %v1515 = vpop.permute.xlu0 %1514
        %v1518 = vadd.f32 %v1497, %v1513
        %v1519 = vadd.f32 %v1498, %v1515
        %s1520 = sld [smem:[#allocation9 + $0x1f]]
        %v1521 = vstv %s1520
        %v1522 = vmul.f32 %v1521, %v579
        %v1523 = vmul.f32 %v1521, %v580
        %v1524 = vmul.f32 %v1521, %v581
        %v1528 = vrot.slane %v1522, 4
        %v1529 = vrot.slane %v1523, 4
        %v1530 = vsel %vm710, %v1528, %v1529
        %v1531 = vrot.slane %v1524, 4
        %v1532 = vsel %vm710, %v1529, %v1531
        %1533 = vrot.lane.b32.xlu0 %v1530, 125
        %v1534 = vpop.permute.xlu0 %1533
        %1535 = vrot.lane.b32.xlu0 %v1532, 125
        %v1536 = vpop.permute.xlu0 %1535
        %v1539 = vadd.f32 %v1518, %v1534
        %v1540 = vadd.f32 %v1519, %v1536
        %s1541 = sld [smem:[#allocation9 + $0x50]]
        %v1542 = vstv %s1541
        %v1543 = vmul.f32 %v1542, %v582
        %v1544 = vmul.f32 %v1542, %v583
        %v1545 = vmul.f32 %v1542, %v584
        %v1549 = vrot.slane %v1543, 4
        %v1550 = vrot.slane %v1544, 4
        %v1551 = vsel %vm710, %v1549, %v1550
        %v1552 = vrot.slane %v1545, 4
        %v1553 = vsel %vm710, %v1550, %v1552
        %1554 = vrot.lane.b32.xlu0 %v1551, 125
        %v1555 = vpop.permute.xlu0 %1554
        %1556 = vrot.lane.b32.xlu0 %v1553, 125
        %v1557 = vpop.permute.xlu0 %1556
        %v1560 = vadd.f32 %v1539, %v1555
        %v1561 = vadd.f32 %v1540, %v1557
        %s1562 = sld [smem:[#allocation9 + $0x26]]
        %v1563 = vstv %s1562
        %v1564 = vmul.f32 %v1563, %v579
        %v1565 = vmul.f32 %v1563, %v580
        %v1566 = vmul.f32 %v1563, %v581
        %v1570 = vrot.slane %v1564, 5
        %v1571 = vrot.slane %v1565, 5
        %v1572 = vsel %vm745, %v1570, %v1571
        %v1573 = vrot.slane %v1566, 5
        %v1574 = vsel %vm745, %v1571, %v1573
        %1575 = vrot.lane.b32.xlu0 %v1572, 125
        %v1576 = vpop.permute.xlu0 %1575
        %1577 = vrot.lane.b32.xlu0 %v1574, 125
        %v1578 = vpop.permute.xlu0 %1577
        %v1581 = vadd.f32 %v1560, %v1576
        %v1582 = vadd.f32 %v1561, %v1578
        %s1583 = sld [smem:[#allocation9 + $0x57]]
        %v1584 = vstv %s1583
        %v1585 = vmul.f32 %v1584, %v582
        %v1586 = vmul.f32 %v1584, %v583
        %v1587 = vmul.f32 %v1584, %v584
        %v1591 = vrot.slane %v1585, 5
        %v1592 = vrot.slane %v1586, 5
        %v1593 = vsel %vm745, %v1591, %v1592
        %v1594 = vrot.slane %v1587, 5
        %v1595 = vsel %vm745, %v1592, %v1594
        %1596 = vrot.lane.b32.xlu0 %v1593, 125
        %v1597 = vpop.permute.xlu0 %1596
        %1598 = vrot.lane.b32.xlu0 %v1595, 125
        %v1599 = vpop.permute.xlu0 %1598
        %v1602 = vadd.f32 %v1581, %v1597
        %v1603 = vadd.f32 %v1582, %v1599
        %s1604 = sld [smem:[#allocation9 + $0x2d]]
        %v1605 = vstv %s1604
        %v1606 = vmul.f32 %v1605, %v579
        %v1607 = vmul.f32 %v1605, %v580
        %v1608 = vmul.f32 %v1605, %v581
        %v1612 = vrot.slane %v1606, 6
        %v1613 = vrot.slane %v1607, 6
        %v1614 = vsel %vm328, %v1612, %v1613
        %v1615 = vrot.slane %v1608, 6
        %v1616 = vsel %vm328, %v1613, %v1615
        %1617 = vrot.lane.b32.xlu0 %v1614, 125
        %v1618 = vpop.permute.xlu0 %1617
        %1619 = vrot.lane.b32.xlu0 %v1616, 125
        %v1620 = vpop.permute.xlu0 %1619
        %v1623 = vadd.f32 %v1602, %v1618
        %v1624 = vadd.f32 %v1603, %v1620
        %s1625 = sld [smem:[#allocation9 + $0x5e]]
        %v1626 = vstv %s1625
        %v1627 = vmul.f32 %v1626, %v582
        %v1628 = vmul.f32 %v1626, %v583
        %v1629 = vmul.f32 %v1626, %v584
        %v1633 = vrot.slane %v1627, 6
        %v1634 = vrot.slane %v1628, 6
        %v1635 = vsel %vm328, %v1633, %v1634
        %v1636 = vrot.slane %v1629, 6
        %v1637 = vsel %vm328, %v1634, %v1636
        %1638 = vrot.lane.b32.xlu0 %v1635, 125
        %v1639 = vpop.permute.xlu0 %1638
        %1640 = vrot.lane.b32.xlu0 %v1637, 125
        %v1641 = vpop.permute.xlu0 %1640
        %v1644 = vadd.f32 %v1623, %v1639
        %v1645 = vadd.f32 %v1624, %v1641
        %s1646 = sld [smem:[#allocation9 + $0x4]]
        %v1647 = vstv %s1646
        %v1648 = vmul.f32 %v1647, %v579
        %v1649 = vmul.f32 %v1647, %v580
        %1652 = vrot.lane.b32.xlu0 %v1648, 124
        %v1653 = vpop.permute.xlu0 %1652
        %1654 = vrot.lane.b32.xlu0 %v1649, 124
        %v1655 = vpop.permute.xlu0 %1654
        %v1658 = vadd.f32 %v1644, %v1653
        %v1659 = vadd.f32 %v1645, %v1655
        %s1660 = sld [smem:[#allocation9 + $0x35]]
        %v1661 = vstv %s1660
        %v1662 = vmul.f32 %v1661, %v582
        %v1663 = vmul.f32 %v1661, %v583
        %1666 = vrot.lane.b32.xlu0 %v1662, 124
        %v1667 = vpop.permute.xlu0 %1666
        %1668 = vrot.lane.b32.xlu0 %v1663, 124
        %v1669 = vpop.permute.xlu0 %1668
        %v1672 = vadd.f32 %v1658, %v1667
        %v1673 = vadd.f32 %v1659, %v1669
        %s1674 = sld [smem:[#allocation9 + $0xb]]
        %v1675 = vstv %s1674
        %v1676 = vmul.f32 %v1675, %v579
        %v1677 = vmul.f32 %v1675, %v580
        %v1678 = vmul.f32 %v1675, %v581
        %v1682 = vrot.slane %v1676, 1
        %v1683 = vrot.slane %v1677, 1
        %v1684 = vsel %vm605, %v1682, %v1683
        %v1685 = vrot.slane %v1678, 1
        %v1686 = vsel %vm605, %v1683, %v1685
        %1687 = vrot.lane.b32.xlu0 %v1684, 124
        %v1688 = vpop.permute.xlu0 %1687
        %1689 = vrot.lane.b32.xlu0 %v1686, 124
        %v1690 = vpop.permute.xlu0 %1689
        %v1693 = vadd.f32 %v1672, %v1688
        %v1694 = vadd.f32 %v1673, %v1690
        %s1695 = sld [smem:[#allocation9 + $0x3c]]
        %v1696 = vstv %s1695
        %v1697 = vmul.f32 %v1696, %v582
        %v1698 = vmul.f32 %v1696, %v583
        %v1699 = vmul.f32 %v1696, %v584
        %v1703 = vrot.slane %v1697, 1
        %v1704 = vrot.slane %v1698, 1
        %v1705 = vsel %vm605, %v1703, %v1704
        %v1706 = vrot.slane %v1699, 1
        %v1707 = vsel %vm605, %v1704, %v1706
        %1708 = vrot.lane.b32.xlu0 %v1705, 124
        %v1709 = vpop.permute.xlu0 %1708
        %1710 = vrot.lane.b32.xlu0 %v1707, 124
        %v1711 = vpop.permute.xlu0 %1710
        %v1714 = vadd.f32 %v1693, %v1709
        %v1715 = vadd.f32 %v1694, %v1711
        %s1716 = sld [smem:[#allocation9 + $0x12]]
        %v1717 = vstv %s1716
        %v1718 = vmul.f32 %v1717, %v579
        %v1719 = vmul.f32 %v1717, %v580
        %v1720 = vmul.f32 %v1717, %v581
        %v1724 = vrot.slane %v1718, 2
        %v1725 = vrot.slane %v1719, 2
        %v1726 = vsel %vm640, %v1724, %v1725
        %v1727 = vrot.slane %v1720, 2
        %v1728 = vsel %vm640, %v1725, %v1727
        %1729 = vrot.lane.b32.xlu0 %v1726, 124
        %v1730 = vpop.permute.xlu0 %1729
        %1731 = vrot.lane.b32.xlu0 %v1728, 124
        %v1732 = vpop.permute.xlu0 %1731
        %v1735 = vadd.f32 %v1714, %v1730
        %v1736 = vadd.f32 %v1715, %v1732
        %s1737 = sld [smem:[#allocation9 + $0x43]]
        %v1738 = vstv %s1737
        %v1739 = vmul.f32 %v1738, %v582
        %v1740 = vmul.f32 %v1738, %v583
        %v1741 = vmul.f32 %v1738, %v584
        %v1745 = vrot.slane %v1739, 2
        %v1746 = vrot.slane %v1740, 2
        %v1747 = vsel %vm640, %v1745, %v1746
        %v1748 = vrot.slane %v1741, 2
        %v1749 = vsel %vm640, %v1746, %v1748
        %1750 = vrot.lane.b32.xlu0 %v1747, 124
        %v1751 = vpop.permute.xlu0 %1750
        %1752 = vrot.lane.b32.xlu0 %v1749, 124
        %v1753 = vpop.permute.xlu0 %1752
        %v1756 = vadd.f32 %v1735, %v1751
        %v1757 = vadd.f32 %v1736, %v1753
        %s1758 = sld [smem:[#allocation9 + $0x19]]
        %v1759 = vstv %s1758
        %v1760 = vmul.f32 %v1759, %v579
        %v1761 = vmul.f32 %v1759, %v580
        %v1762 = vmul.f32 %v1759, %v581
        %v1766 = vrot.slane %v1760, 3
        %v1767 = vrot.slane %v1761, 3
        %v1768 = vsel %vm675, %v1766, %v1767
        %v1769 = vrot.slane %v1762, 3
        %v1770 = vsel %vm675, %v1767, %v1769
        %1771 = vrot.lane.b32.xlu0 %v1768, 124
        %v1772 = vpop.permute.xlu0 %1771
        %1773 = vrot.lane.b32.xlu0 %v1770, 124
        %v1774 = vpop.permute.xlu0 %1773
        %v1777 = vadd.f32 %v1756, %v1772
        %v1778 = vadd.f32 %v1757, %v1774
        %s1779 = sld [smem:[#allocation9 + $0x4a]]
        %v1780 = vstv %s1779
        %v1781 = vmul.f32 %v1780, %v582
        %v1782 = vmul.f32 %v1780, %v583
        %v1783 = vmul.f32 %v1780, %v584
        %v1787 = vrot.slane %v1781, 3
        %v1788 = vrot.slane %v1782, 3
        %v1789 = vsel %vm675, %v1787, %v1788
        %v1790 = vrot.slane %v1783, 3
        %v1791 = vsel %vm675, %v1788, %v1790
        %1792 = vrot.lane.b32.xlu0 %v1789, 124
        %v1793 = vpop.permute.xlu0 %1792
        %1794 = vrot.lane.b32.xlu0 %v1791, 124
        %v1795 = vpop.permute.xlu0 %1794
        %v1798 = vadd.f32 %v1777, %v1793
        %v1799 = vadd.f32 %v1778, %v1795
        %s1800 = sld [smem:[#allocation9 + $0x20]]
        %v1801 = vstv %s1800
        %v1802 = vmul.f32 %v1801, %v579
        %v1803 = vmul.f32 %v1801, %v580
        %v1804 = vmul.f32 %v1801, %v581
        %v1808 = vrot.slane %v1802, 4
        %v1809 = vrot.slane %v1803, 4
        %v1810 = vsel %vm710, %v1808, %v1809
        %v1811 = vrot.slane %v1804, 4
        %v1812 = vsel %vm710, %v1809, %v1811
        %1813 = vrot.lane.b32.xlu0 %v1810, 124
        %v1814 = vpop.permute.xlu0 %1813
        %1815 = vrot.lane.b32.xlu0 %v1812, 124
        %v1816 = vpop.permute.xlu0 %1815
        %v1819 = vadd.f32 %v1798, %v1814
        %v1820 = vadd.f32 %v1799, %v1816
        %s1821 = sld [smem:[#allocation9 + $0x51]]
        %v1822 = vstv %s1821
        %v1823 = vmul.f32 %v1822, %v582
        %v1824 = vmul.f32 %v1822, %v583
        %v1825 = vmul.f32 %v1822, %v584
        %v1829 = vrot.slane %v1823, 4
        %v1830 = vrot.slane %v1824, 4
        %v1831 = vsel %vm710, %v1829, %v1830
        %v1832 = vrot.slane %v1825, 4
        %v1833 = vsel %vm710, %v1830, %v1832
        %1834 = vrot.lane.b32.xlu0 %v1831, 124
        %v1835 = vpop.permute.xlu0 %1834
        %1836 = vrot.lane.b32.xlu0 %v1833, 124
        %v1837 = vpop.permute.xlu0 %1836
        %v1840 = vadd.f32 %v1819, %v1835
        %v1841 = vadd.f32 %v1820, %v1837
        %s1842 = sld [smem:[#allocation9 + $0x27]]
        %v1843 = vstv %s1842
        %v1844 = vmul.f32 %v1843, %v579
        %v1845 = vmul.f32 %v1843, %v580
        %v1846 = vmul.f32 %v1843, %v581
        %v1850 = vrot.slane %v1844, 5
        %v1851 = vrot.slane %v1845, 5
        %v1852 = vsel %vm745, %v1850, %v1851
        %v1853 = vrot.slane %v1846, 5
        %v1854 = vsel %vm745, %v1851, %v1853
        %1855 = vrot.lane.b32.xlu0 %v1852, 124
        %v1856 = vpop.permute.xlu0 %1855
        %1857 = vrot.lane.b32.xlu0 %v1854, 124
        %v1858 = vpop.permute.xlu0 %1857
        %v1861 = vadd.f32 %v1840, %v1856
        %v1862 = vadd.f32 %v1841, %v1858
        %s1863 = sld [smem:[#allocation9 + $0x58]]
        %v1864 = vstv %s1863
        %v1865 = vmul.f32 %v1864, %v582
        %v1866 = vmul.f32 %v1864, %v583
        %v1867 = vmul.f32 %v1864, %v584
        %v1871 = vrot.slane %v1865, 5
        %v1872 = vrot.slane %v1866, 5
        %v1873 = vsel %vm745, %v1871, %v1872
        %v1874 = vrot.slane %v1867, 5
        %v1875 = vsel %vm745, %v1872, %v1874
        %1876 = vrot.lane.b32.xlu0 %v1873, 124
        %v1877 = vpop.permute.xlu0 %1876
        %1878 = vrot.lane.b32.xlu0 %v1875, 124
        %v1879 = vpop.permute.xlu0 %1878
        %v1882 = vadd.f32 %v1861, %v1877
        %v1883 = vadd.f32 %v1862, %v1879
        %s1884 = sld [smem:[#allocation9 + $0x2e]]
        %v1885 = vstv %s1884
        %v1886 = vmul.f32 %v1885, %v579
        %v1887 = vmul.f32 %v1885, %v580
        %v1888 = vmul.f32 %v1885, %v581
        %v1892 = vrot.slane %v1886, 6
        %v1893 = vrot.slane %v1887, 6
        %v1894 = vsel %vm328, %v1892, %v1893
        %v1895 = vrot.slane %v1888, 6
        %v1896 = vsel %vm328, %v1893, %v1895
        %1897 = vrot.lane.b32.xlu0 %v1894, 124
        %v1898 = vpop.permute.xlu0 %1897
        %1899 = vrot.lane.b32.xlu0 %v1896, 124
        %v1900 = vpop.permute.xlu0 %1899
        %v1903 = vadd.f32 %v1882, %v1898
        %v1904 = vadd.f32 %v1883, %v1900
        %s1905 = sld [smem:[#allocation9 + $0x5f]]
        %v1906 = vstv %s1905
        %v1907 = vmul.f32 %v1906, %v582
        %v1908 = vmul.f32 %v1906, %v583
        %v1909 = vmul.f32 %v1906, %v584
        %v1913 = vrot.slane %v1907, 6
        %v1914 = vrot.slane %v1908, 6
        %v1915 = vsel %vm328, %v1913, %v1914
        %v1916 = vrot.slane %v1909, 6
        %v1917 = vsel %vm328, %v1914, %v1916
        %1918 = vrot.lane.b32.xlu0 %v1915, 124
        %v1919 = vpop.permute.xlu0 %1918
        %1920 = vrot.lane.b32.xlu0 %v1917, 124
        %v1921 = vpop.permute.xlu0 %1920
        %v1924 = vadd.f32 %v1903, %v1919
        %v1925 = vadd.f32 %v1904, %v1921
        %s1926 = sld [smem:[#allocation9 + $0x5]]
        %v1927 = vstv %s1926
        %v1928 = vmul.f32 %v1927, %v579
        %v1929 = vmul.f32 %v1927, %v580
        %1932 = vrot.lane.b32.xlu0 %v1928, 123
        %v1933 = vpop.permute.xlu0 %1932
        %1934 = vrot.lane.b32.xlu0 %v1929, 123
        %v1935 = vpop.permute.xlu0 %1934
        %v1938 = vadd.f32 %v1924, %v1933
        %v1939 = vadd.f32 %v1925, %v1935
        %s1940 = sld [smem:[#allocation9 + $0x36]]
        %v1941 = vstv %s1940
        %v1942 = vmul.f32 %v1941, %v582
        %v1943 = vmul.f32 %v1941, %v583
        %1946 = vrot.lane.b32.xlu0 %v1942, 123
        %v1947 = vpop.permute.xlu0 %1946
        %1948 = vrot.lane.b32.xlu0 %v1943, 123
        %v1949 = vpop.permute.xlu0 %1948
        %v1952 = vadd.f32 %v1938, %v1947
        %v1953 = vadd.f32 %v1939, %v1949
        %s1954 = sld [smem:[#allocation9 + $0xc]]
        %v1955 = vstv %s1954
        %v1956 = vmul.f32 %v1955, %v579
        %v1957 = vmul.f32 %v1955, %v580
        %v1958 = vmul.f32 %v1955, %v581
        %v1962 = vrot.slane %v1956, 1
        %v1963 = vrot.slane %v1957, 1
        %v1964 = vsel %vm605, %v1962, %v1963
        %v1965 = vrot.slane %v1958, 1
        %v1966 = vsel %vm605, %v1963, %v1965
        %1967 = vrot.lane.b32.xlu0 %v1964, 123
        %v1968 = vpop.permute.xlu0 %1967
        %1969 = vrot.lane.b32.xlu0 %v1966, 123
        %v1970 = vpop.permute.xlu0 %1969
        %v1973 = vadd.f32 %v1952, %v1968
        %v1974 = vadd.f32 %v1953, %v1970
        %s1975 = sld [smem:[#allocation9 + $0x3d]]
        %v1976 = vstv %s1975
        %v1977 = vmul.f32 %v1976, %v582
        %v1978 = vmul.f32 %v1976, %v583
        %v1979 = vmul.f32 %v1976, %v584
        %v1983 = vrot.slane %v1977, 1
        %v1984 = vrot.slane %v1978, 1
        %v1985 = vsel %vm605, %v1983, %v1984
        %v1986 = vrot.slane %v1979, 1
        %v1987 = vsel %vm605, %v1984, %v1986
        %1988 = vrot.lane.b32.xlu0 %v1985, 123
        %v1989 = vpop.permute.xlu0 %1988
        %1990 = vrot.lane.b32.xlu0 %v1987, 123
        %v1991 = vpop.permute.xlu0 %1990
        %v1994 = vadd.f32 %v1973, %v1989
        %v1995 = vadd.f32 %v1974, %v1991
        %s1996 = sld [smem:[#allocation9 + $0x13]]
        %v1997 = vstv %s1996
        %v1998 = vmul.f32 %v1997, %v579
        %v1999 = vmul.f32 %v1997, %v580
        %v2000 = vmul.f32 %v1997, %v581
        %v2004 = vrot.slane %v1998, 2
        %v2005 = vrot.slane %v1999, 2
        %v2006 = vsel %vm640, %v2004, %v2005
        %v2007 = vrot.slane %v2000, 2
        %v2008 = vsel %vm640, %v2005, %v2007
        %2009 = vrot.lane.b32.xlu0 %v2006, 123
        %v2010 = vpop.permute.xlu0 %2009
        %2011 = vrot.lane.b32.xlu0 %v2008, 123
        %v2012 = vpop.permute.xlu0 %2011
        %v2015 = vadd.f32 %v1994, %v2010
        %v2016 = vadd.f32 %v1995, %v2012
        %s2017 = sld [smem:[#allocation9 + $0x44]]
        %v2018 = vstv %s2017
        %v2019 = vmul.f32 %v2018, %v582
        %v2020 = vmul.f32 %v2018, %v583
        %v2021 = vmul.f32 %v2018, %v584
        %v2025 = vrot.slane %v2019, 2
        %v2026 = vrot.slane %v2020, 2
        %v2027 = vsel %vm640, %v2025, %v2026
        %v2028 = vrot.slane %v2021, 2
        %v2029 = vsel %vm640, %v2026, %v2028
        %2030 = vrot.lane.b32.xlu0 %v2027, 123
        %v2031 = vpop.permute.xlu0 %2030
        %2032 = vrot.lane.b32.xlu0 %v2029, 123
        %v2033 = vpop.permute.xlu0 %2032
        %v2036 = vadd.f32 %v2015, %v2031
        %v2037 = vadd.f32 %v2016, %v2033
        %s2038 = sld [smem:[#allocation9 + $0x1a]]
        %v2039 = vstv %s2038
        %v2040 = vmul.f32 %v2039, %v579
        %v2041 = vmul.f32 %v2039, %v580
        %v2042 = vmul.f32 %v2039, %v581
        %v2046 = vrot.slane %v2040, 3
        %v2047 = vrot.slane %v2041, 3
        %v2048 = vsel %vm675, %v2046, %v2047
        %v2049 = vrot.slane %v2042, 3
        %v2050 = vsel %vm675, %v2047, %v2049
        %2051 = vrot.lane.b32.xlu0 %v2048, 123
        %v2052 = vpop.permute.xlu0 %2051
        %2053 = vrot.lane.b32.xlu0 %v2050, 123
        %v2054 = vpop.permute.xlu0 %2053
        %v2057 = vadd.f32 %v2036, %v2052
        %v2058 = vadd.f32 %v2037, %v2054
        %s2059 = sld [smem:[#allocation9 + $0x4b]]
        %v2060 = vstv %s2059
        %v2061 = vmul.f32 %v2060, %v582
        %v2062 = vmul.f32 %v2060, %v583
        %v2063 = vmul.f32 %v2060, %v584
        %v2067 = vrot.slane %v2061, 3
        %v2068 = vrot.slane %v2062, 3
        %v2069 = vsel %vm675, %v2067, %v2068
        %v2070 = vrot.slane %v2063, 3
        %v2071 = vsel %vm675, %v2068, %v2070
        %2072 = vrot.lane.b32.xlu0 %v2069, 123
        %v2073 = vpop.permute.xlu0 %2072
        %2074 = vrot.lane.b32.xlu0 %v2071, 123
        %v2075 = vpop.permute.xlu0 %2074
        %v2078 = vadd.f32 %v2057, %v2073
        %v2079 = vadd.f32 %v2058, %v2075
        %s2080 = sld [smem:[#allocation9 + $0x21]]
        %v2081 = vstv %s2080
        %v2082 = vmul.f32 %v2081, %v579
        %v2083 = vmul.f32 %v2081, %v580
        %v2084 = vmul.f32 %v2081, %v581
        %v2088 = vrot.slane %v2082, 4
        %v2089 = vrot.slane %v2083, 4
        %v2090 = vsel %vm710, %v2088, %v2089
        %v2091 = vrot.slane %v2084, 4
        %v2092 = vsel %vm710, %v2089, %v2091
        %2093 = vrot.lane.b32.xlu0 %v2090, 123
        %v2094 = vpop.permute.xlu0 %2093
        %2095 = vrot.lane.b32.xlu0 %v2092, 123
        %v2096 = vpop.permute.xlu0 %2095
        %v2099 = vadd.f32 %v2078, %v2094
        %v2100 = vadd.f32 %v2079, %v2096
        %s2101 = sld [smem:[#allocation9 + $0x52]]
        %v2102 = vstv %s2101
        %v2103 = vmul.f32 %v2102, %v582
        %v2104 = vmul.f32 %v2102, %v583
        %v2105 = vmul.f32 %v2102, %v584
        %v2109 = vrot.slane %v2103, 4
        %v2110 = vrot.slane %v2104, 4
        %v2111 = vsel %vm710, %v2109, %v2110
        %v2112 = vrot.slane %v2105, 4
        %v2113 = vsel %vm710, %v2110, %v2112
        %2114 = vrot.lane.b32.xlu0 %v2111, 123
        %v2115 = vpop.permute.xlu0 %2114
        %2116 = vrot.lane.b32.xlu0 %v2113, 123
        %v2117 = vpop.permute.xlu0 %2116
        %v2120 = vadd.f32 %v2099, %v2115
        %v2121 = vadd.f32 %v2100, %v2117
        %s2122 = sld [smem:[#allocation9 + $0x28]]
        %v2123 = vstv %s2122
        %v2124 = vmul.f32 %v2123, %v579
        %v2125 = vmul.f32 %v2123, %v580
        %v2126 = vmul.f32 %v2123, %v581
        %v2130 = vrot.slane %v2124, 5
        %v2131 = vrot.slane %v2125, 5
        %v2132 = vsel %vm745, %v2130, %v2131
        %v2133 = vrot.slane %v2126, 5
        %v2134 = vsel %vm745, %v2131, %v2133
        %2135 = vrot.lane.b32.xlu0 %v2132, 123
        %v2136 = vpop.permute.xlu0 %2135
        %2137 = vrot.lane.b32.xlu0 %v2134, 123
        %v2138 = vpop.permute.xlu0 %2137
        %v2141 = vadd.f32 %v2120, %v2136
        %v2142 = vadd.f32 %v2121, %v2138
        %s2143 = sld [smem:[#allocation9 + $0x59]]
        %v2144 = vstv %s2143
        %v2145 = vmul.f32 %v2144, %v582
        %v2146 = vmul.f32 %v2144, %v583
        %v2147 = vmul.f32 %v2144, %v584
        %v2151 = vrot.slane %v2145, 5
        %v2152 = vrot.slane %v2146, 5
        %v2153 = vsel %vm745, %v2151, %v2152
        %v2154 = vrot.slane %v2147, 5
        %v2155 = vsel %vm745, %v2152, %v2154
        %2156 = vrot.lane.b32.xlu0 %v2153, 123
        %v2157 = vpop.permute.xlu0 %2156
        %2158 = vrot.lane.b32.xlu0 %v2155, 123
        %v2159 = vpop.permute.xlu0 %2158
        %v2162 = vadd.f32 %v2141, %v2157
        %v2163 = vadd.f32 %v2142, %v2159
        %s2164 = sld [smem:[#allocation9 + $0x2f]]
        %v2165 = vstv %s2164
        %v2166 = vmul.f32 %v2165, %v579
        %v2167 = vmul.f32 %v2165, %v580
        %v2168 = vmul.f32 %v2165, %v581
        %v2172 = vrot.slane %v2166, 6
        %v2173 = vrot.slane %v2167, 6
        %v2174 = vsel %vm328, %v2172, %v2173
        %v2175 = vrot.slane %v2168, 6
        %v2176 = vsel %vm328, %v2173, %v2175
        %2177 = vrot.lane.b32.xlu0 %v2174, 123
        %v2178 = vpop.permute.xlu0 %2177
        %2179 = vrot.lane.b32.xlu0 %v2176, 123
        %v2180 = vpop.permute.xlu0 %2179
        %v2183 = vadd.f32 %v2162, %v2178
        %v2184 = vadd.f32 %v2163, %v2180
        %s2185 = sld [smem:[#allocation9 + $0x60]]
        %v2186 = vstv %s2185
        %v2187 = vmul.f32 %v2186, %v582
        %v2188 = vmul.f32 %v2186, %v583
        %v2189 = vmul.f32 %v2186, %v584
        %v2193 = vrot.slane %v2187, 6
        %v2194 = vrot.slane %v2188, 6
        %v2195 = vsel %vm328, %v2193, %v2194
        %v2196 = vrot.slane %v2189, 6
        %v2197 = vsel %vm328, %v2194, %v2196
        %2198 = vrot.lane.b32.xlu0 %v2195, 123
        %v2199 = vpop.permute.xlu0 %2198
        %2200 = vrot.lane.b32.xlu0 %v2197, 123
        %v2201 = vpop.permute.xlu0 %2200
        %v2204 = vadd.f32 %v2183, %v2199
        %v2205 = vadd.f32 %v2184, %v2201
        %s2206 = sld [smem:[#allocation9 + $0x6]]
        %v2207 = vstv %s2206
        %v2208 = vmul.f32 %v2207, %v579
        %v2209 = vmul.f32 %v2207, %v580
        %2212 = vrot.lane.b32.xlu0 %v2208, 122
        %v2213 = vpop.permute.xlu0 %2212
        %2214 = vrot.lane.b32.xlu0 %v2209, 122
        %v2215 = vpop.permute.xlu0 %2214
        %v2218 = vadd.f32 %v2204, %v2213
        %v2219 = vadd.f32 %v2205, %v2215
        %s2220 = sld [smem:[#allocation9 + $0x37]]
        %v2221 = vstv %s2220
        %v2222 = vmul.f32 %v2221, %v582
        %v2223 = vmul.f32 %v2221, %v583
        %2226 = vrot.lane.b32.xlu0 %v2222, 122
        %v2227 = vpop.permute.xlu0 %2226
        %2228 = vrot.lane.b32.xlu0 %v2223, 122
        %v2229 = vpop.permute.xlu0 %2228
        %v2232 = vadd.f32 %v2218, %v2227
        %v2233 = vadd.f32 %v2219, %v2229
        %s2234 = sld [smem:[#allocation9 + $0xd]]
        %v2235 = vstv %s2234
        %v2236 = vmul.f32 %v2235, %v579
        %v2237 = vmul.f32 %v2235, %v580
        %v2238 = vmul.f32 %v2235, %v581
        %v2242 = vrot.slane %v2236, 1
        %v2243 = vrot.slane %v2237, 1
        %v2244 = vsel %vm605, %v2242, %v2243
        %v2245 = vrot.slane %v2238, 1
        %v2246 = vsel %vm605, %v2243, %v2245
        %2247 = vrot.lane.b32.xlu0 %v2244, 122
        %v2248 = vpop.permute.xlu0 %2247
        %2249 = vrot.lane.b32.xlu0 %v2246, 122
        %v2250 = vpop.permute.xlu0 %2249
        %v2253 = vadd.f32 %v2232, %v2248
        %v2254 = vadd.f32 %v2233, %v2250
        %s2255 = sld [smem:[#allocation9 + $0x3e]]
        %v2256 = vstv %s2255
        %v2257 = vmul.f32 %v2256, %v582
        %v2258 = vmul.f32 %v2256, %v583
        %v2259 = vmul.f32 %v2256, %v584
        %v2263 = vrot.slane %v2257, 1
        %v2264 = vrot.slane %v2258, 1
        %v2265 = vsel %vm605, %v2263, %v2264
        %v2266 = vrot.slane %v2259, 1
        %v2267 = vsel %vm605, %v2264, %v2266
        %2268 = vrot.lane.b32.xlu0 %v2265, 122
        %v2269 = vpop.permute.xlu0 %2268
        %2270 = vrot.lane.b32.xlu0 %v2267, 122
        %v2271 = vpop.permute.xlu0 %2270
        %v2274 = vadd.f32 %v2253, %v2269
        %v2275 = vadd.f32 %v2254, %v2271
        %s2276 = sld [smem:[#allocation9 + $0x14]]
        %v2277 = vstv %s2276
        %v2278 = vmul.f32 %v2277, %v579
        %v2279 = vmul.f32 %v2277, %v580
        %v2280 = vmul.f32 %v2277, %v581
        %v2284 = vrot.slane %v2278, 2
        %v2285 = vrot.slane %v2279, 2
        %v2286 = vsel %vm640, %v2284, %v2285
        %v2287 = vrot.slane %v2280, 2
        %v2288 = vsel %vm640, %v2285, %v2287
        %2289 = vrot.lane.b32.xlu0 %v2286, 122
        %v2290 = vpop.permute.xlu0 %2289
        %2291 = vrot.lane.b32.xlu0 %v2288, 122
        %v2292 = vpop.permute.xlu0 %2291
        %v2295 = vadd.f32 %v2274, %v2290
        %v2296 = vadd.f32 %v2275, %v2292
        %s2297 = sld [smem:[#allocation9 + $0x45]]
        %v2298 = vstv %s2297
        %v2299 = vmul.f32 %v2298, %v582
        %v2300 = vmul.f32 %v2298, %v583
        %v2301 = vmul.f32 %v2298, %v584
        %v2305 = vrot.slane %v2299, 2
        %v2306 = vrot.slane %v2300, 2
        %v2307 = vsel %vm640, %v2305, %v2306
        %v2308 = vrot.slane %v2301, 2
        %v2309 = vsel %vm640, %v2306, %v2308
        %2310 = vrot.lane.b32.xlu0 %v2307, 122
        %v2311 = vpop.permute.xlu0 %2310
        %2312 = vrot.lane.b32.xlu0 %v2309, 122
        %v2313 = vpop.permute.xlu0 %2312
        %v2316 = vadd.f32 %v2295, %v2311
        %v2317 = vadd.f32 %v2296, %v2313
        %s2318 = sld [smem:[#allocation9 + $0x1b]]
        %v2319 = vstv %s2318
        %v2320 = vmul.f32 %v2319, %v579
        %v2321 = vmul.f32 %v2319, %v580
        %v2322 = vmul.f32 %v2319, %v581
        %v2326 = vrot.slane %v2320, 3
        %v2327 = vrot.slane %v2321, 3
        %v2328 = vsel %vm675, %v2326, %v2327
        %v2329 = vrot.slane %v2322, 3
        %v2330 = vsel %vm675, %v2327, %v2329
        %2331 = vrot.lane.b32.xlu0 %v2328, 122
        %v2332 = vpop.permute.xlu0 %2331
        %2333 = vrot.lane.b32.xlu0 %v2330, 122
        %v2334 = vpop.permute.xlu0 %2333
        %v2337 = vadd.f32 %v2316, %v2332
        %v2338 = vadd.f32 %v2317, %v2334
        %s2339 = sld [smem:[#allocation9 + $0x4c]]
        %v2340 = vstv %s2339
        %v2341 = vmul.f32 %v2340, %v582
        %v2342 = vmul.f32 %v2340, %v583
        %v2343 = vmul.f32 %v2340, %v584
        %v2347 = vrot.slane %v2341, 3
        %v2348 = vrot.slane %v2342, 3
        %v2349 = vsel %vm675, %v2347, %v2348
        %v2350 = vrot.slane %v2343, 3
        %v2351 = vsel %vm675, %v2348, %v2350
        %2352 = vrot.lane.b32.xlu0 %v2349, 122
        %v2353 = vpop.permute.xlu0 %2352
        %2354 = vrot.lane.b32.xlu0 %v2351, 122
        %v2355 = vpop.permute.xlu0 %2354
        %v2358 = vadd.f32 %v2337, %v2353
        %v2359 = vadd.f32 %v2338, %v2355
        %s2360 = sld [smem:[#allocation9 + $0x22]]
        %v2361 = vstv %s2360
        %v2362 = vmul.f32 %v2361, %v579
        %v2363 = vmul.f32 %v2361, %v580
        %v2364 = vmul.f32 %v2361, %v581
        %v2368 = vrot.slane %v2362, 4
        %v2369 = vrot.slane %v2363, 4
        %v2370 = vsel %vm710, %v2368, %v2369
        %v2371 = vrot.slane %v2364, 4
        %v2372 = vsel %vm710, %v2369, %v2371
        %2373 = vrot.lane.b32.xlu0 %v2370, 122
        %v2374 = vpop.permute.xlu0 %2373
        %2375 = vrot.lane.b32.xlu0 %v2372, 122
        %v2376 = vpop.permute.xlu0 %2375
        %v2379 = vadd.f32 %v2358, %v2374
        %v2380 = vadd.f32 %v2359, %v2376
        %s2381 = sld [smem:[#allocation9 + $0x53]]
        %v2382 = vstv %s2381
        %v2383 = vmul.f32 %v2382, %v582
        %v2384 = vmul.f32 %v2382, %v583
        %v2385 = vmul.f32 %v2382, %v584
        %v2389 = vrot.slane %v2383, 4
        %v2390 = vrot.slane %v2384, 4
        %v2391 = vsel %vm710, %v2389, %v2390
        %v2392 = vrot.slane %v2385, 4
        %v2393 = vsel %vm710, %v2390, %v2392
        %2394 = vrot.lane.b32.xlu0 %v2391, 122
        %v2395 = vpop.permute.xlu0 %2394
        %2396 = vrot.lane.b32.xlu0 %v2393, 122
        %v2397 = vpop.permute.xlu0 %2396
        %v2400 = vadd.f32 %v2379, %v2395
        %v2401 = vadd.f32 %v2380, %v2397
        %s2402 = sld [smem:[#allocation9 + $0x29]]
        %v2403 = vstv %s2402
        %v2404 = vmul.f32 %v2403, %v579
        %v2405 = vmul.f32 %v2403, %v580
        %v2406 = vmul.f32 %v2403, %v581
        %v2410 = vrot.slane %v2404, 5
        %v2411 = vrot.slane %v2405, 5
        %v2412 = vsel %vm745, %v2410, %v2411
        %v2413 = vrot.slane %v2406, 5
        %v2414 = vsel %vm745, %v2411, %v2413
        %2415 = vrot.lane.b32.xlu0 %v2412, 122
        %v2416 = vpop.permute.xlu0 %2415
        %2417 = vrot.lane.b32.xlu0 %v2414, 122
        %v2418 = vpop.permute.xlu0 %2417
        %v2421 = vadd.f32 %v2400, %v2416
        %v2422 = vadd.f32 %v2401, %v2418
        %s2423 = sld [smem:[#allocation9 + $0x5a]]
        %v2424 = vstv %s2423
        %v2425 = vmul.f32 %v2424, %v582
        %v2426 = vmul.f32 %v2424, %v583
        %v2427 = vmul.f32 %v2424, %v584
        %v2431 = vrot.slane %v2425, 5
        %v2432 = vrot.slane %v2426, 5
        %v2433 = vsel %vm745, %v2431, %v2432
        %v2434 = vrot.slane %v2427, 5
        %v2435 = vsel %vm745, %v2432, %v2434
        %2436 = vrot.lane.b32.xlu0 %v2433, 122
        %v2437 = vpop.permute.xlu0 %2436
        %2438 = vrot.lane.b32.xlu0 %v2435, 122
        %v2439 = vpop.permute.xlu0 %2438
        %v2442 = vadd.f32 %v2421, %v2437
        %v2443 = vadd.f32 %v2422, %v2439
        %s2444 = sld [smem:[#allocation9 + $0x30]]
        %v2445 = vstv %s2444
        %v2446 = vmul.f32 %v2445, %v579
        %v2447 = vmul.f32 %v2445, %v580
        %v2448 = vmul.f32 %v2445, %v581
        %v2452 = vrot.slane %v2446, 6
        %v2453 = vrot.slane %v2447, 6
        %v2454 = vsel %vm328, %v2452, %v2453
        %v2455 = vrot.slane %v2448, 6
        %v2456 = vsel %vm328, %v2453, %v2455
        %2457 = vrot.lane.b32.xlu0 %v2454, 122
        %v2458 = vpop.permute.xlu0 %2457
        %2459 = vrot.lane.b32.xlu0 %v2456, 122
        %v2460 = vpop.permute.xlu0 %2459
        %v2463 = vadd.f32 %v2442, %v2458
        %v2464 = vadd.f32 %v2443, %v2460
        %s2465 = sld [smem:[#allocation9 + $0x61]]
        %v2466 = vstv %s2465
        %v2467 = vmul.f32 %v2466, %v582
        %v2468 = vmul.f32 %v2466, %v583
        %v2469 = vmul.f32 %v2466, %v584
        %v2473 = vrot.slane %v2467, 6
        %v2474 = vrot.slane %v2468, 6
        %v2475 = vsel %vm328, %v2473, %v2474
        %v2476 = vrot.slane %v2469, 6
        %v2477 = vsel %vm328, %v2474, %v2476
        %2478 = vrot.lane.b32.xlu0 %v2475, 122
        %v2479 = vpop.permute.xlu0 %2478
        %2480 = vrot.lane.b32.xlu0 %v2477, 122
        %v2481 = vpop.permute.xlu0 %2480
        %v2484 = vadd.f32 %v2463, %v2479
        %v2485 = vadd.f32 %v2464, %v2481
        %v2486 = vxor.u32 %v2484, 2147483648
        %v2487 = vxor.u32 %v2485, 2147483648
        %v2488 = vmul.f32 %v2486, 1.442695
        %v2489 = vpow.pop %v2488
        %v2490 = vmul.f32 %v2487, 1.442695
        %v2491 = vpow.pop %v2490
        %v2492 = vadd.f32 %v2489, 1.0
        %v2493 = vadd.f32 %v2491, 1.0
        %v2494 = vrcp.pop %v2492
        %v2495 = vmul.f32 1.0, %v2494
        %v2496 = vrcp.pop %v2493
        %v2497 = vmul.f32 1.0, %v2496
        %v2498 = vlaneseq
        %vm2499 = vcmp.ge.s32.totalorder %v2498, 0
        %vm2500 = vcmp.lt.s32.totalorder %v2498, 16
        %vm2501 = vmand %vm2499, %vm2500
        %2502 = vst.msk [vmem:[#allocation4] sm:$0x1] %vm2501, %v2495
        %v2505 = vunpack.c.l.s4 1966171168
        %v2506 = vunpack.c.0.s8 %v2505
        %v2507 = vlaneseq
        %v2508 = vshrl.u32 %v2507, 7
        %v2509 = vsub.s32 %v2506, %v2508
        %v2510 = vrot.slane %v2495, %v2509
        %v2511 = vcombine.high %v2510, %v2510
        %v2513 = vunpack.c.l.s4 1966171168
        %v2514 = vunpack.c.0.s8 %v2513
        %v2515 = vlaneseq
        %v2516 = vshrl.u32 %v2515, 7
        %v2517 = vsub.s32 %v2514, %v2516
        %v2518 = vrot.slane %v2510, %v2517
        %v2520 = vunpack.c.l.s4 1966171168
        %v2521 = vunpack.c.0.s8 %v2520
        %v2522 = vlaneseq
        %v2523 = vshrl.u32 %v2522, 7
        %v2524 = vsub.s32 %v2521, %v2523
        %v2525 = vrot.slane %v2511, %v2524
        %2526 = vrot.lane.b32.xlu0 %v2525, 16
        %v2527 = vpop.permute.xlu0 %2526
        %vm2529 = vcmp.ge.s32.totalorder %v2498, 16
        %vm2530 = vcmp.lt.s32.totalorder %v2498, 32
        %vm2531 = vmand %vm2529, %vm2530
        %2532 = vst.msk [vmem:[#allocation4] sm:$0x1] %vm2531, %v2527
        %v2533 = vcombine.high %v2518, %v2518
        %2534 = vrot.lane.b32.xlu0 %v2533, 32
        %v2535 = vpop.permute.xlu0 %2534
        %vm2537 = vcmp.ge.s32.totalorder %v2498, 32
        %vm2538 = vcmp.lt.s32.totalorder %v2498, 48
        %vm2539 = vmand %vm2537, %vm2538
        %2540 = vst.msk [vmem:[#allocation4] sm:$0x1] %vm2539, %v2535
        %v2541 = vcombine.high %v2525, %v2525
        %2542 = vrot.lane.b32.xlu0 %v2541, 48
        %v2543 = vpop.permute.xlu0 %2542
        %vm2545 = vcmp.ge.s32.totalorder %v2498, 48
        %vm2546 = vcmp.lt.s32.totalorder %v2498, 64
        %vm2547 = vmand %vm2545, %vm2546
        %2548 = vst.msk [vmem:[#allocation4] sm:$0x1] %vm2547, %v2543
        %v2549 = vcombine.high %v2495, %v2495
        %v2551 = vunpack.c.l.s4 1966171168
        %v2552 = vunpack.c.0.s8 %v2551
        %v2553 = vlaneseq
        %v2554 = vshrl.u32 %v2553, 7
        %v2555 = vsub.s32 %v2552, %v2554
        %v2556 = vrot.slane %v2549, %v2555
        %v2558 = vunpack.c.l.s4 1966171168
        %v2559 = vunpack.c.0.s8 %v2558
        %v2560 = vlaneseq
        %v2561 = vshrl.u32 %v2560, 7
        %v2562 = vsub.s32 %v2559, %v2561
        %v2563 = vrot.slane %v2556, %v2562
        %2564 = vrot.lane.b32.xlu0 %v2563, 64
        %v2565 = vpop.permute.xlu0 %2564
        %vm2567 = vcmp.ge.s32.totalorder %v2498, 64
        %vm2568 = vcmp.lt.s32.totalorder %v2498, 80
        %vm2569 = vmand %vm2567, %vm2568
        %2570 = vst.msk [vmem:[#allocation4] sm:$0x1] %vm2569, %v2565
        %v2571 = vcombine.high %v2556, %v2556
        %v2573 = vunpack.c.l.s4 1966171168
        %v2574 = vunpack.c.0.s8 %v2573
        %v2575 = vlaneseq
        %v2576 = vshrl.u32 %v2575, 7
        %v2577 = vsub.s32 %v2574, %v2576
        %v2578 = vrot.slane %v2571, %v2577
        %2579 = vrot.lane.b32.xlu0 %v2578, 80
        %v2580 = vpop.permute.xlu0 %2579
        %vm2582 = vcmp.ge.s32.totalorder %v2498, 80
        %vm2583 = vcmp.lt.s32.totalorder %v2498, 96
        %vm2584 = vmand %vm2582, %vm2583
        %2585 = vst.msk [vmem:[#allocation4] sm:$0x1] %vm2584, %v2580
        %v2586 = vcombine.high %v2563, %v2563
        %2587 = vrot.lane.b32.xlu0 %v2586, 96
        %v2588 = vpop.permute.xlu0 %2587
        %vm2590 = vcmp.ge.s32.totalorder %v2498, 96
        %vm2591 = vcmp.lt.s32.totalorder %v2498, 112
        %vm2592 = vmand %vm2590, %vm2591
        %2593 = vst.msk [vmem:[#allocation4] sm:$0x1] %vm2592, %v2588
        %v2594 = vcombine.high %v2578, %v2578
        %2595 = vrot.lane.b32.xlu0 %v2594, 112
        %v2596 = vpop.permute.xlu0 %2595
        %vm2598 = vcmp.ge.s32.totalorder %v2498, 112
        %vm2599 = vcmp.lt.s32.totalorder %v2498, 128
        %vm2600 = vmand %vm2598, %vm2599
        %2601 = vst.msk [vmem:[#allocation4] sm:$0x1] %vm2600, %v2596
        %2602 = vst.msk [vmem:[#allocation4 + $0x1] sm:$0x1] %vm2501, %v2497
        %v2605 = vunpack.c.l.s4 1966171168
        %v2606 = vunpack.c.0.s8 %v2605
        %v2607 = vlaneseq
        %v2608 = vshrl.u32 %v2607, 7
        %v2609 = vsub.s32 %v2606, %v2608
        %v2610 = vrot.slane %v2497, %v2609
        %v2611 = vcombine.high %v2610, %v2610
        %v2613 = vunpack.c.l.s4 1966171168
        %v2614 = vunpack.c.0.s8 %v2613
        %v2615 = vlaneseq
        %v2616 = vshrl.u32 %v2615, 7
        %v2617 = vsub.s32 %v2614, %v2616
        %v2618 = vrot.slane %v2610, %v2617
        %v2620 = vunpack.c.l.s4 1966171168
        %v2621 = vunpack.c.0.s8 %v2620
        %v2622 = vlaneseq
        %v2623 = vshrl.u32 %v2622, 7
        %v2624 = vsub.s32 %v2621, %v2623
        %v2625 = vrot.slane %v2611, %v2624
        %2626 = vrot.lane.b32.xlu0 %v2625, 16
        %v2627 = vpop.permute.xlu0 %2626
        %2629 = vst.msk [vmem:[#allocation4 + $0x1] sm:$0x1] %vm2531, %v2627
        %v2630 = vcombine.high %v2618, %v2618
        %2631 = vrot.lane.b32.xlu0 %v2630, 32
        %v2632 = vpop.permute.xlu0 %2631
        %2634 = vst.msk [vmem:[#allocation4 + $0x1] sm:$0x1] %vm2539, %v2632
        %v2635 = vcombine.high %v2625, %v2625
        %2636 = vrot.lane.b32.xlu0 %v2635, 48
        %v2637 = vpop.permute.xlu0 %2636
        %2639 = vst.msk [vmem:[#allocation4 + $0x1] sm:$0x1] %vm2547, %v2637
        %v2640 = vcombine.high %v2497, %v2497
        %v2642 = vunpack.c.l.s4 1966171168
        %v2643 = vunpack.c.0.s8 %v2642
        %v2644 = vlaneseq
        %v2645 = vshrl.u32 %v2644, 7
        %v2646 = vsub.s32 %v2643, %v2645
        %v2647 = vrot.slane %v2640, %v2646
        %v2649 = vunpack.c.l.s4 1966171168
        %v2650 = vunpack.c.0.s8 %v2649
        %v2651 = vlaneseq
        %v2652 = vshrl.u32 %v2651, 7
        %v2653 = vsub.s32 %v2650, %v2652
        %v2654 = vrot.slane %v2647, %v2653
        %2655 = vrot.lane.b32.xlu0 %v2654, 64
        %v2656 = vpop.permute.xlu0 %2655
        %2658 = vst.msk [vmem:[#allocation4 + $0x1] sm:$0x1] %vm2569, %v2656
        %v2659 = vcombine.high %v2647, %v2647
        %v2661 = vunpack.c.l.s4 1966171168
        %v2662 = vunpack.c.0.s8 %v2661
        %v2663 = vlaneseq
        %v2664 = vshrl.u32 %v2663, 7
        %v2665 = vsub.s32 %v2662, %v2664
        %v2666 = vrot.slane %v2659, %v2665
        %2667 = vrot.lane.b32.xlu0 %v2666, 80
        %v2668 = vpop.permute.xlu0 %2667
        %2670 = vst.msk [vmem:[#allocation4 + $0x1] sm:$0x1] %vm2584, %v2668
        %v2671 = vcombine.high %v2654, %v2654
        %2672 = vrot.lane.b32.xlu0 %v2671, 96
        %v2673 = vpop.permute.xlu0 %2672
        %2675 = vst.msk [vmem:[#allocation4 + $0x1] sm:$0x1] %vm2592, %v2673
        %v2676 = vcombine.high %v2666, %v2666
        %2677 = vrot.lane.b32.xlu0 %v2676, 112
        %v2678 = vpop.permute.xlu0 %2677
        %2680 = vst.msk [vmem:[#allocation4 + $0x1] sm:$0x1] %vm2600, %v2678
        %v2681 = vld [vmem:[#allocation4] sm:$0x3]
        %v2683 = vlaneseq
        %v2684 = vshrl.u32 %v2683, 7
        %v2685 = vsub.s32 0, %v2684
        %v2686 = vrot.slane %v2681, %v2685
        %v2687 = vlaneseq
        %v2688 = vshrl.u32 %v2687, 7
        %v2689 = vsub.s32 1, %v2688
        %v2690 = vrot.slane %v2681, %v2689
        %v2693 = vmul.f32 %v418, %v2686
        %v2694 = vmul.f32 %v419, %v2690
        %2695 = vst [vmem:[%s227] sm:$0xff] %v2693
        %2696 = vst [vmem:[%s227 + $0x8] sm:$0xff] %v2694
        %s2697 = sand.u32 %s119, 1
        %s2698 = scalar_lea.sflag [#allocation7], %s2697
        %s2699 = sand.u32 %s119, 1
        %s2700 = smul.addr %s2699, 16
        %s2701 = scalar_lea.vmem [#allocation10], %s2700
        // Predicated region
        $region45: #{tpu_custom_call.1} parent=35 // pred_check
          %p2702 = pneg %p129
        $region46: #{tpu_custom_call.1} parent=35 // pred_check_branch
          %2704 = sbr.rel (%p2702) target = $region48
        $region47: #{tpu_custom_call.1} parent=35 // pred_region
          %s2706 = ssub.s32 256, 256
          %2707 = vsyncadd %s2698, %s2706
          %s2708 = smul.addr %s22, 2
          %s2709 = smul.addr %s2708, 128
          %s2710 = scalar_lea.hbm %s4, %s2709
          %s2712 = sshll.u32 %s2701, 4
          %s2713 = int_to_ptr.vmem [resolvable:$true] %s2712
          %2715 = dma.vmem_to_hbm [thread:$0]  %s2713, 256, %s2710, %s2698
        $region48: #{tpu_custom_call.1} parent=35 // pred_fallthru
          _
      $region36: #{tpu_custom_call.1} parent=5 // pred_fallthru
        _
      %p2716 = scmp.le.s32.totalorder 2, %s17
      // Predicated region
      $region49: #{tpu_custom_call.1} parent=5 // pred_check
        %p2717 = pneg %p2716
      $region50: #{tpu_custom_call.1} parent=5 // pred_check_branch
        %2719 = sbr.rel (%p2717) target = $region52
      $region51: #{tpu_custom_call.1} parent=5 // pred_region
        %s2720 = ssub.s32 %s17, 2
        // Predicated region
        $region53: #{tpu_custom_call.1} parent=51 // pred_check
          %p2721 = pneg %p135
        $region54: #{tpu_custom_call.1} parent=51 // pred_check_branch
          %2723 = sbr.rel (%p2721) target = $region56
        $region55: #{tpu_custom_call.1} parent=51 // pred_region
          %s2724 = sand.u32 %s120, 1
          %s2725 = scalar_lea.sflag [#allocation7], %s2724
          %s2726 = sand.u32 %s120, 1
          %s2727 = smul.addr %s2726, 16
          %s2728 = scalar_lea.vmem [#allocation10], %s2727
          %2729 = dma.done %s2725, 256
        $region56: #{tpu_custom_call.1} parent=51 // pred_fallthru
          _
      $region52: #{tpu_custom_call.1} parent=5 // pred_fallthru
        _
    $region6: #{tpu_custom_call.1} parent=1 // loop_footer
      %s21 = sadd.s32 1, %s17
    $region7: #{tpu_custom_call.1} parent=1 // loop_footer_branch
      %16 = sbr.rel target = $region3
    $region8: #{tpu_custom_call.1} parent=1 // loop_exit
      _
    %2730 = vsyncpa [#allocation6], 1
    %s2731 = scalar_lea.sflag [#allocation6], 1
    %2732 = vsyncpa %s2731, 1
    %2733 = vsyncpa [#allocation7], 1
    %s2734 = scalar_lea.sflag [#allocation7], 1
    %2735 = vsyncpa %s2734, 1
    %2736 = vsyncpa [#allocation8], 1
    %s2737 = scalar_lea.sflag [#allocation8], 1
    %2738 = vsyncpa %s2737, 1

</llo_original>
